<compile_context>
chip_gen: v6e
topology: v6e:2x2x1
jax: 0.10.0
libtpu: 0.0.40
codegen_flags: <defaults>
</compile_context>

<pallas_src>
import numpy as np

import jax
import jax.numpy as jnp
from jax.experimental import pallas as pl
from jax.experimental.pallas import tpu as pltpu


# ----------------------------------------------------------------------------
# In-kernel helpers (traced inside the Pallas kernel)
# ----------------------------------------------------------------------------
def _leaky_relu(y, neg_slope=0.2):
    return jnp.where(y >= 0, y, neg_slope * y)


def _instance_norm(y, eps=1e-5):
    # Per-(instance, channel) normalization over spatial dims; one-pass variance.
    m = jnp.mean(y, axis=1, keepdims=True)
    m2 = jnp.mean(y * y, axis=1, keepdims=True)
    var = jnp.maximum(m2 - m * m, 0.0)
    return (y - m) * jax.lax.rsqrt(var + eps)


def _conv_taps(x, w_ref, s_ref):
    """Conv as per-tap selection matmuls.

    x:     (Cin, HWin)      VMEM-resident activation (lane-dense).
    w_ref: (T, Cout, Cin)   per-tap weight slices.
    s_ref: (T, HWin, HWout) constant 0/1 spatial selection matrices.
    returns (Cout, HWout)
    """
    n_taps = w_ref.shape[0]
    acc = None
    for t in range(n_taps):                      # static unroll (<= 16 taps)
        g = jnp.dot(x, s_ref[t], preferred_element_type=jnp.float32)   # (Cin, HWout)
        c = jnp.dot(w_ref[t], g, preferred_element_type=jnp.float32)   # (Cout, HWout)
        acc = c if acc is None else acc + c
    return acc


# ----------------------------------------------------------------------------
# Fused Pallas kernel: whole network for one batch element per grid step
# ----------------------------------------------------------------------------
def fused_discriminator_kernel(p1_ref, w1_ref, w2_ref, s2_ref, w3_ref, s3_ref,
                               fcw_ref, fcb_ref, o_ref):
    # Stage 1: Conv2d(1, nf, k=4, s=2, p=1, bias=False) + LeakyReLU(0.2)
    #   patches pre-gathered as (K1=16, HW1=208) -> one MXU matmul.
    h = jnp.dot(w1_ref[...], p1_ref[0], preferred_element_type=jnp.float32)  # (nf, 208)
    h = _leaky_relu(h)

    # Stage 2: Conv2d(nf, 2nf, k=4, s=2, p=1) + InstanceNorm2d + LeakyReLU  -> (2nf, 52)
    h = _leaky_relu(_instance_norm(_conv_taps(h, w2_ref, s2_ref)))

    # Stage 3: Conv2d(2nf, 4nf, k=3, s=2, p=1) + InstanceNorm2d + LeakyReLU -> (4nf, 13)
    h = _leaky_relu(_instance_norm(_conv_taps(h, w3_ref, s3_ref)))

    # Head: Flatten (C-major, matches PyTorch NCHW flatten) + Linear + Sigmoid.
    partial = jnp.sum(h * fcw_ref[...], axis=1, keepdims=True)                # (4nf, 1)
    logit = jnp.sum(partial, axis=0, keepdims=True) + fcb_ref[...]            # (1, 1)
    o_ref[0] = jax.nn.sigmoid(logit)


# ----------------------------------------------------------------------------
# Host-side (trace-time) constant builders
# ----------------------------------------------------------------------------
def _make_tap_selectors(h_in, w_in, kh, kw, stride, pad):
    """0/1 matrices S_t (HWin, HWout), one per kernel tap, padding baked in."""
    h_out = (h_in + 2 * pad - kh) // stride + 1
    w_out = (w_in + 2 * pad - kw) // stride + 1
    sel = np.zeros((kh * kw, h_in * w_in, h_out * w_out), np.float32)
    for ki in range(kh):
        for kj in range(kw):
            t = ki * kw + kj
            for ho in range(h_out):
                hi = ho * stride + ki - pad
                if hi < 0 or hi >= h_in:
                    continue
                for wo in range(w_out):
                    wi = wo * stride + kj - pad
                    if wi < 0 or wi >= w_in:
                        continue
                    sel[t, hi * w_in + wi, ho * w_out + wo] = 1.0
    return sel, h_out, w_out


def _im2col_input(x, kh, kw, stride, pad):
    """Raw-input patches only (conv1). x: (B,C,H,W) -> (B, C*kh*kw, Ho*Wo)."""
    B, C, H, W = x.shape
    xp = jnp.pad(x, ((0, 0), (0, 0), (pad, pad), (pad, pad)))
    Ho = (H + 2 * pad - kh) // stride + 1
    Wo = (W + 2 * pad - kw) // stride + 1
    cols = [xp[:, :, i:i + stride * Ho:stride, j:j + stride * Wo:stride]
            for i in range(kh) for j in range(kw)]
    p = jnp.stack(cols, axis=2)                       # (B, C, kh*kw, Ho, Wo)
    return p.reshape(B, C * kh * kw, Ho * Wo), Ho, Wo


# ----------------------------------------------------------------------------
# Full forward
# ----------------------------------------------------------------------------
@jax.jit
def discriminator_wgan_forward(params, x):
    """x: (B, 1, 105, 8) float32 NCHW  ->  (B, 1) float32 in (0, 1)."""
    B = x.shape[0]
    w1, w2, w3 = params["conv1_w"], params["conv2_w"], params["conv3_w"]
    nf = w1.shape[0]

    # Conv1 patches from the raw input (tiny, one-shot JAX preprocessing).
    p1, ho1, wo1 = _im2col_input(x, 4, 4, 2, 1)                 # (B, 16, 208)
    k1, hw1 = p1.shape[1], p1.shape[2]

    # Constant spatial tap selectors for conv2 / conv3 (in-kernel patch gather).
    s2_np, ho2, wo2 = _make_tap_selectors(ho1, wo1, 4, 4, 2, 1)  # (16, 208, 52)
    s3_np, ho3, wo3 = _make_tap_selectors(ho2, wo2, 3, 3, 2, 1)  # (9, 52, 13)
    s2 = jnp.asarray(s2_np)
    s3 = jnp.asarray(s3_np)

    # Weight layouts expected by the kernel (all tiny host-side reshapes).
    w1m = w1.reshape(nf, -1)                                     # (nf, 16)
    w2t = w2.transpose(2, 3, 0, 1).reshape(16, 2 * nf, nf)       # (taps, Cout, Cin)
    w3t = w3.transpose(2, 3, 0, 1).reshape(9, 4 * nf, 2 * nf)
    fcw = params["fc_w"][:, 0].reshape(4 * nf, ho3 * wo3)        # (4nf, 13) C-major
    fcb = params["fc_b"].reshape(1, 1)

    out = pl.pallas_call(
        fused_discriminator_kernel,
        out_shape=jax.ShapeDtypeStruct((B, 1, 1), jnp.float32),
        grid=(B,),
        in_specs=[
            pl.BlockSpec((1, k1, hw1), lambda b: (b, 0, 0)),
            pl.BlockSpec(w1m.shape, lambda b: (0, 0)),
            pl.BlockSpec(w2t.shape, lambda b: (0, 0, 0)),
            pl.BlockSpec(s2.shape, lambda b: (0, 0, 0)),
            pl.BlockSpec(w3t.shape, lambda b: (0, 0, 0)),
            pl.BlockSpec(s3.shape, lambda b: (0, 0, 0)),
            pl.BlockSpec(fcw.shape, lambda b: (0, 0)),
            pl.BlockSpec(fcb.shape, lambda b: (0, 0)),
        ],
        out_specs=pl.BlockSpec((1, 1, 1), lambda b: (b, 0, 0)),
        compiler_params=pltpu.CompilerParams(
            dimension_semantics=("parallel",)),   # 2-way parallel for v7x dual TCs
    )(p1, w1m, w2t, s2, w3t, s3, fcw, fcb)
    return out.reshape(B, 1)


# ----------------------------------------------------------------------------
# Parameters (PyTorch-default-like uniform init) and pure-JAX reference
# ----------------------------------------------------------------------------
def init_params(key, n_filters):
    nf = n_filters
    ks = jax.random.split(key, 5)

    def conv_w(k, cout, cin, kh, kw):
        bound = 1.0 / np.sqrt(cin * kh * kw)
        return jax.random.uniform(k, (cout, cin, kh, kw), jnp.float32, -bound, bound)

    params = {
        "conv1_w": conv_w(ks[0], nf, 1, 4, 4),
        "conv2_w": conv_w(ks[1], nf * 2, nf, 4, 4),
        "conv3_w": conv_w(ks[2], nf * 4, nf * 2, 3, 3),
    }
    fc_in = nf * 4 * (105 // 8) * (8 // 8)   # = 4nf * 13
    bound = 1.0 / np.sqrt(fc_in)
    params["fc_w"] = jax.random.uniform(ks[3], (fc_in, 1), jnp.float32, -bound, bound)
    params["fc_b"] = jax.random.uniform(ks[4], (1, 1), jnp.float32, -bound, bound)
    return params


def reference_forward(params, x):
    prec = jax.lax.Precision.HIGHEST

    def conv(h, w):
        return jax.lax.conv_general_dilated(
            h, w, window_strides=(2, 2), padding=[(1, 1), (1, 1)],
            dimension_numbers=("NCHW", "OIHW", "NCHW"), precision=prec)

    def inorm(h, eps=1e-5):
        m = h.mean(axis=(2, 3), keepdims=True)
        v = ((h - m) ** 2).mean(axis=(2, 3), keepdims=True)
        return (h - m) * jax.lax.rsqrt(v + eps)

    def lrelu(h):
        return jnp.where(h >= 0, h, 0.2 * h)

    h = lrelu(conv(x, params["conv1_w"]))
    h = lrelu(inorm(conv(h, params["conv2_w"])))
    h = lrelu(inorm(conv(h, params["conv3_w"])))
    flat = h.reshape(h.shape[0], -1)
    logits = jnp.dot(flat, params["fc_w"], precision=prec) + params["fc_b"]
    return jax.nn.sigmoid(logits)


if __name__ == "__main__":
    key = jax.random.PRNGKey(0)
    k_param, k_x = jax.random.split(key)

    n_filters = 4
    params = init_params(k_param, n_filters)

    # Input shape implied by the Linear layer: (B, 1, 105, 8) NCHW.
    x = jax.random.normal(k_x, (2, 1, 105, 8), dtype=jnp.float32)

    out = jax.block_until_ready(discriminator_wgan_forward(params, x))
    ref = jax.block_until_ready(reference_forward(params, x))

    assert out.shape == (2, 1)
    assert bool(jnp.all(jnp.isfinite(out)))
    assert bool(jnp.all((out > 0.0) & (out < 1.0)))
    assert bool(jnp.allclose(out, ref, atol=2e-3, rtol=2e-3)), (out, ref)
    print("KERNEL_OK")
</pallas_src>

<mosaic_0001>
module attributes {stable_mosaic.version = 11 : i64} {
  func.func @fused_discriminator_kernel(%arg0: i32, %arg1: memref<1x16x208xf32, #tpu.memory_space<vmem>>, %arg2: memref<4x16xf32, #tpu.memory_space<vmem>>, %arg3: memref<16x8x4xf32, #tpu.memory_space<vmem>>, %arg4: memref<16x208x52xf32, #tpu.memory_space<vmem>>, %arg5: memref<9x16x8xf32, #tpu.memory_space<vmem>>, %arg6: memref<9x52x13xf32, #tpu.memory_space<vmem>>, %arg7: memref<16x13xf32, #tpu.memory_space<vmem>>, %arg8: memref<1x1xf32, #tpu.memory_space<vmem>>, %arg9: memref<1x1x1xf32, #tpu.memory_space<vmem>>) attributes {dimension_semantics = [#tpu.dimension_semantics<parallel>], iteration_bounds = array<i64: 2>, scalar_prefetch = 0 : i64, scratch_operands = 0 : i64, tpu.core_type = #tpu.core_type<tc>, window_params = [{transform_indices = @transform_0, window_bounds = array<i64: 1, 16, 208>}, {pipeline_mode = #tpu.pipeline_mode<synchronous>, transform_indices = @transform_1, window_bounds = array<i64: 4, 16>}, {pipeline_mode = #tpu.pipeline_mode<synchronous>, transform_indices = @transform_2, window_bounds = array<i64: 16, 8, 4>}, {pipeline_mode = #tpu.pipeline_mode<synchronous>, transform_indices = @transform_3, window_bounds = array<i64: 16, 208, 52>}, {pipeline_mode = #tpu.pipeline_mode<synchronous>, transform_indices = @transform_4, window_bounds = array<i64: 9, 16, 8>}, {pipeline_mode = #tpu.pipeline_mode<synchronous>, transform_indices = @transform_5, window_bounds = array<i64: 9, 52, 13>}, {pipeline_mode = #tpu.pipeline_mode<synchronous>, transform_indices = @transform_6, window_bounds = array<i64: 16, 13>}, {pipeline_mode = #tpu.pipeline_mode<synchronous>, transform_indices = @transform_7, window_bounds = array<i64: 1, 1>}, {transform_indices = @transform_8, window_bounds = array<i64: 1, 1, 1>}]} {
    %c0 = arith.constant 0 : index
    %c0_0 = arith.constant 0 : index
    %0 = vector.load %arg2[%c0, %c0_0] : memref<4x16xf32, #tpu.memory_space<vmem>>, vector<4x16xf32>
    %c0_1 = arith.constant 0 : index
    %c0_2 = arith.constant 0 : index
    %c0_3 = arith.constant 0 : index
    %1 = vector.load %arg1[%c0_1, %c0_2, %c0_3] : memref<1x16x208xf32, #tpu.memory_space<vmem>>, vector<1x16x208xf32>
    %2 = vector.shape_cast %1 : vector<1x16x208xf32> to vector<16x208xf32>
    %cst = arith.constant dense<0.000000e+00> : vector<4x208xf32>
    %3 = tpu.matmul %0, %2, %cst {dimension_numbers = #tpu.dot_dimension_numbers<[1], [0], [0], [1], [0, 0, 1, 1], [], []>} : vector<4x16xf32>, vector<16x208xf32>, vector<4x208xf32> -> vector<4x208xf32>
    %cst_4 = arith.constant 0.000000e+00 : f32
    %4 = vector.broadcast %cst_4 : f32 to vector<4x208xf32>
    %5 = arith.cmpf oge, %3, %4 : vector<4x208xf32>
    %cst_5 = arith.constant 2.000000e-01 : f32
    %6 = vector.broadcast %cst_5 : f32 to vector<4x208xf32>
    %7 = arith.mulf %6, %3 : vector<4x208xf32>
    %8 = arith.select %5, %3, %7 : vector<4x208xi1>, vector<4x208xf32>
    %c0_6 = arith.constant 0 : index
    %c0_7 = arith.constant 0 : index
    %c0_8 = arith.constant 0 : index
    %9 = vector.load %arg4[%c0_6, %c0_7, %c0_8] : memref<16x208x52xf32, #tpu.memory_space<vmem>>, vector<1x208x52xf32>
    %10 = vector.shape_cast %9 : vector<1x208x52xf32> to vector<208x52xf32>
    %cst_9 = arith.constant dense<0.000000e+00> : vector<4x52xf32>
    %11 = tpu.matmul %8, %10, %cst_9 {dimension_numbers = #tpu.dot_dimension_numbers<[1], [0], [0], [1], [0, 0, 1, 1], [], []>} : vector<4x208xf32>, vector<208x52xf32>, vector<4x52xf32> -> vector<4x52xf32>
    %c0_10 = arith.constant 0 : index
    %c0_11 = arith.constant 0 : index
    %c0_12 = arith.constant 0 : index
    %12 = vector.load %arg3[%c0_10, %c0_11, %c0_12] : memref<16x8x4xf32, #tpu.memory_space<vmem>>, vector<1x8x4xf32>
    %13 = vector.shape_cast %12 : vector<1x8x4xf32> to vector<8x4xf32>
    %cst_13 = arith.constant dense<0.000000e+00> : vector<8x52xf32>
    %14 = tpu.matmul %13, %11, %cst_13 {dimension_numbers = #tpu.dot_dimension_numbers<[1], [0], [0], [1], [0, 0, 1, 1], [], []>} : vector<8x4xf32>, vector<4x52xf32>, vector<8x52xf32> -> vector<8x52xf32>
    %c1 = arith.constant 1 : index
    %c0_14 = arith.constant 0 : index
    %c0_15 = arith.constant 0 : index
    %15 = vector.load %arg4[%c1, %c0_14, %c0_15] : memref<16x208x52xf32, #tpu.memory_space<vmem>>, vector<1x208x52xf32>
    %16 = vector.shape_cast %15 : vector<1x208x52xf32> to vector<208x52xf32>
    %cst_16 = arith.constant dense<0.000000e+00> : vector<4x52xf32>
    %17 = tpu.matmul %8, %16, %cst_16 {dimension_numbers = #tpu.dot_dimension_numbers<[1], [0], [0], [1], [0, 0, 1, 1], [], []>} : vector<4x208xf32>, vector<208x52xf32>, vector<4x52xf32> -> vector<4x52xf32>
    %c1_17 = arith.constant 1 : index
    %c0_18 = arith.constant 0 : index
    %c0_19 = arith.constant 0 : index
    %18 = vector.load %arg3[%c1_17, %c0_18, %c0_19] : memref<16x8x4xf32, #tpu.memory_space<vmem>>, vector<1x8x4xf32>
    %19 = vector.shape_cast %18 : vector<1x8x4xf32> to vector<8x4xf32>
    %cst_20 = arith.constant dense<0.000000e+00> : vector<8x52xf32>
    %20 = tpu.matmul %19, %17, %cst_20 {dimension_numbers = #tpu.dot_dimension_numbers<[1], [0], [0], [1], [0, 0, 1, 1], [], []>} : vector<8x4xf32>, vector<4x52xf32>, vector<8x52xf32> -> vector<8x52xf32>
    %21 = arith.addf %14, %20 : vector<8x52xf32>
    %c2 = arith.constant 2 : index
    %c0_21 = arith.constant 0 : index
    %c0_22 = arith.constant 0 : index
    %22 = vector.load %arg4[%c2, %c0_21, %c0_22] : memref<16x208x52xf32, #tpu.memory_space<vmem>>, vector<1x208x52xf32>
    %23 = vector.shape_cast %22 : vector<1x208x52xf32> to vector<208x52xf32>
    %cst_23 = arith.constant dense<0.000000e+00> : vector<4x52xf32>
    %24 = tpu.matmul %8, %23, %cst_23 {dimension_numbers = #tpu.dot_dimension_numbers<[1], [0], [0], [1], [0, 0, 1, 1], [], []>} : vector<4x208xf32>, vector<208x52xf32>, vector<4x52xf32> -> vector<4x52xf32>
    %c2_24 = arith.constant 2 : index
    %c0_25 = arith.constant 0 : index
    %c0_26 = arith.constant 0 : index
    %25 = vector.load %arg3[%c2_24, %c0_25, %c0_26] : memref<16x8x4xf32, #tpu.memory_space<vmem>>, vector<1x8x4xf32>
    %26 = vector.shape_cast %25 : vector<1x8x4xf32> to vector<8x4xf32>
    %cst_27 = arith.constant dense<0.000000e+00> : vector<8x52xf32>
    %27 = tpu.matmul %26, %24, %cst_27 {dimension_numbers = #tpu.dot_dimension_numbers<[1], [0], [0], [1], [0, 0, 1, 1], [], []>} : vector<8x4xf32>, vector<4x52xf32>, vector<8x52xf32> -> vector<8x52xf32>
    %28 = arith.addf %21, %27 : vector<8x52xf32>
    %c3 = arith.constant 3 : index
    %c0_28 = arith.constant 0 : index
    %c0_29 = arith.constant 0 : index
    %29 = vector.load %arg4[%c3, %c0_28, %c0_29] : memref<16x208x52xf32, #tpu.memory_space<vmem>>, vector<1x208x52xf32>
    %30 = vector.shape_cast %29 : vector<1x208x52xf32> to vector<208x52xf32>
    %cst_30 = arith.constant dense<0.000000e+00> : vector<4x52xf32>
    %31 = tpu.matmul %8, %30, %cst_30 {dimension_numbers = #tpu.dot_dimension_numbers<[1], [0], [0], [1], [0, 0, 1, 1], [], []>} : vector<4x208xf32>, vector<208x52xf32>, vector<4x52xf32> -> vector<4x52xf32>
    %c3_31 = arith.constant 3 : index
    %c0_32 = arith.constant 0 : index
    %c0_33 = arith.constant 0 : index
    %32 = vector.load %arg3[%c3_31, %c0_32, %c0_33] : memref<16x8x4xf32, #tpu.memory_space<vmem>>, vector<1x8x4xf32>
    %33 = vector.shape_cast %32 : vector<1x8x4xf32> to vector<8x4xf32>
    %cst_34 = arith.constant dense<0.000000e+00> : vector<8x52xf32>
    %34 = tpu.matmul %33, %31, %cst_34 {dimension_numbers = #tpu.dot_dimension_numbers<[1], [0], [0], [1], [0, 0, 1, 1], [], []>} : vector<8x4xf32>, vector<4x52xf32>, vector<8x52xf32> -> vector<8x52xf32>
    %35 = arith.addf %28, %34 : vector<8x52xf32>
    %c4 = arith.constant 4 : index
    %c0_35 = arith.constant 0 : index
    %c0_36 = arith.constant 0 : index
    %36 = vector.load %arg4[%c4, %c0_35, %c0_36] : memref<16x208x52xf32, #tpu.memory_space<vmem>>, vector<1x208x52xf32>
    %37 = vector.shape_cast %36 : vector<1x208x52xf32> to vector<208x52xf32>
    %cst_37 = arith.constant dense<0.000000e+00> : vector<4x52xf32>
    %38 = tpu.matmul %8, %37, %cst_37 {dimension_numbers = #tpu.dot_dimension_numbers<[1], [0], [0], [1], [0, 0, 1, 1], [], []>} : vector<4x208xf32>, vector<208x52xf32>, vector<4x52xf32> -> vector<4x52xf32>
    %c4_38 = arith.constant 4 : index
    %c0_39 = arith.constant 0 : index
    %c0_40 = arith.constant 0 : index
    %39 = vector.load %arg3[%c4_38, %c0_39, %c0_40] : memref<16x8x4xf32, #tpu.memory_space<vmem>>, vector<1x8x4xf32>
    %40 = vector.shape_cast %39 : vector<1x8x4xf32> to vector<8x4xf32>
    %cst_41 = arith.constant dense<0.000000e+00> : vector<8x52xf32>
    %41 = tpu.matmul %40, %38, %cst_41 {dimension_numbers = #tpu.dot_dimension_numbers<[1], [0], [0], [1], [0, 0, 1, 1], [], []>} : vector<8x4xf32>, vector<4x52xf32>, vector<8x52xf32> -> vector<8x52xf32>
    %42 = arith.addf %35, %41 : vector<8x52xf32>
    %c5 = arith.constant 5 : index
    %c0_42 = arith.constant 0 : index
    %c0_43 = arith.constant 0 : index
    %43 = vector.load %arg4[%c5, %c0_42, %c0_43] : memref<16x208x52xf32, #tpu.memory_space<vmem>>, vector<1x208x52xf32>
    %44 = vector.shape_cast %43 : vector<1x208x52xf32> to vector<208x52xf32>
    %cst_44 = arith.constant dense<0.000000e+00> : vector<4x52xf32>
    %45 = tpu.matmul %8, %44, %cst_44 {dimension_numbers = #tpu.dot_dimension_numbers<[1], [0], [0], [1], [0, 0, 1, 1], [], []>} : vector<4x208xf32>, vector<208x52xf32>, vector<4x52xf32> -> vector<4x52xf32>
    %c5_45 = arith.constant 5 : index
    %c0_46 = arith.constant 0 : index
    %c0_47 = arith.constant 0 : index
    %46 = vector.load %arg3[%c5_45, %c0_46, %c0_47] : memref<16x8x4xf32, #tpu.memory_space<vmem>>, vector<1x8x4xf32>
    %47 = vector.shape_cast %46 : vector<1x8x4xf32> to vector<8x4xf32>
    %cst_48 = arith.constant dense<0.000000e+00> : vector<8x52xf32>
    %48 = tpu.matmul %47, %45, %cst_48 {dimension_numbers = #tpu.dot_dimension_numbers<[1], [0], [0], [1], [0, 0, 1, 1], [], []>} : vector<8x4xf32>, vector<4x52xf32>, vector<8x52xf32> -> vector<8x52xf32>
    %49 = arith.addf %42, %48 : vector<8x52xf32>
    %c6 = arith.constant 6 : index
    %c0_49 = arith.constant 0 : index
    %c0_50 = arith.constant 0 : index
    %50 = vector.load %arg4[%c6, %c0_49, %c0_50] : memref<16x208x52xf32, #tpu.memory_space<vmem>>, vector<1x208x52xf32>
    %51 = vector.shape_cast %50 : vector<1x208x52xf32> to vector<208x52xf32>
    %cst_51 = arith.constant dense<0.000000e+00> : vector<4x52xf32>
    %52 = tpu.matmul %8, %51, %cst_51 {dimension_numbers = #tpu.dot_dimension_numbers<[1], [0], [0], [1], [0, 0, 1, 1], [], []>} : vector<4x208xf32>, vector<208x52xf32>, vector<4x52xf32> -> vector<4x52xf32>
    %c6_52 = arith.constant 6 : index
    %c0_53 = arith.constant 0 : index
    %c0_54 = arith.constant 0 : index
    %53 = vector.load %arg3[%c6_52, %c0_53, %c0_54] : memref<16x8x4xf32, #tpu.memory_space<vmem>>, vector<1x8x4xf32>
    %54 = vector.shape_cast %53 : vector<1x8x4xf32> to vector<8x4xf32>
    %cst_55 = arith.constant dense<0.000000e+00> : vector<8x52xf32>
    %55 = tpu.matmul %54, %52, %cst_55 {dimension_numbers = #tpu.dot_dimension_numbers<[1], [0], [0], [1], [0, 0, 1, 1], [], []>} : vector<8x4xf32>, vector<4x52xf32>, vector<8x52xf32> -> vector<8x52xf32>
    %56 = arith.addf %49, %55 : vector<8x52xf32>
    %c7 = arith.constant 7 : index
    %c0_56 = arith.constant 0 : index
    %c0_57 = arith.constant 0 : index
    %57 = vector.load %arg4[%c7, %c0_56, %c0_57] : memref<16x208x52xf32, #tpu.memory_space<vmem>>, vector<1x208x52xf32>
    %58 = vector.shape_cast %57 : vector<1x208x52xf32> to vector<208x52xf32>
    %cst_58 = arith.constant dense<0.000000e+00> : vector<4x52xf32>
    %59 = tpu.matmul %8, %58, %cst_58 {dimension_numbers = #tpu.dot_dimension_numbers<[1], [0], [0], [1], [0, 0, 1, 1], [], []>} : vector<4x208xf32>, vector<208x52xf32>, vector<4x52xf32> -> vector<4x52xf32>
    %c7_59 = arith.constant 7 : index
    %c0_60 = arith.constant 0 : index
    %c0_61 = arith.constant 0 : index
    %60 = vector.load %arg3[%c7_59, %c0_60, %c0_61] : memref<16x8x4xf32, #tpu.memory_space<vmem>>, vector<1x8x4xf32>
    %61 = vector.shape_cast %60 : vector<1x8x4xf32> to vector<8x4xf32>
    %cst_62 = arith.constant dense<0.000000e+00> : vector<8x52xf32>
    %62 = tpu.matmul %61, %59, %cst_62 {dimension_numbers = #tpu.dot_dimension_numbers<[1], [0], [0], [1], [0, 0, 1, 1], [], []>} : vector<8x4xf32>, vector<4x52xf32>, vector<8x52xf32> -> vector<8x52xf32>
    %63 = arith.addf %56, %62 : vector<8x52xf32>
    %c8 = arith.constant 8 : index
    %c0_63 = arith.constant 0 : index
    %c0_64 = arith.constant 0 : index
    %64 = vector.load %arg4[%c8, %c0_63, %c0_64] : memref<16x208x52xf32, #tpu.memory_space<vmem>>, vector<1x208x52xf32>
    %65 = vector.shape_cast %64 : vector<1x208x52xf32> to vector<208x52xf32>
    %cst_65 = arith.constant dense<0.000000e+00> : vector<4x52xf32>
    %66 = tpu.matmul %8, %65, %cst_65 {dimension_numbers = #tpu.dot_dimension_numbers<[1], [0], [0], [1], [0, 0, 1, 1], [], []>} : vector<4x208xf32>, vector<208x52xf32>, vector<4x52xf32> -> vector<4x52xf32>
    %c8_66 = arith.constant 8 : index
    %c0_67 = arith.constant 0 : index
    %c0_68 = arith.constant 0 : index
    %67 = vector.load %arg3[%c8_66, %c0_67, %c0_68] : memref<16x8x4xf32, #tpu.memory_space<vmem>>, vector<1x8x4xf32>
    %68 = vector.shape_cast %67 : vector<1x8x4xf32> to vector<8x4xf32>
    %cst_69 = arith.constant dense<0.000000e+00> : vector<8x52xf32>
    %69 = tpu.matmul %68, %66, %cst_69 {dimension_numbers = #tpu.dot_dimension_numbers<[1], [0], [0], [1], [0, 0, 1, 1], [], []>} : vector<8x4xf32>, vector<4x52xf32>, vector<8x52xf32> -> vector<8x52xf32>
    %70 = arith.addf %63, %69 : vector<8x52xf32>
    %c9 = arith.constant 9 : index
    %c0_70 = arith.constant 0 : index
    %c0_71 = arith.constant 0 : index
    %71 = vector.load %arg4[%c9, %c0_70, %c0_71] : memref<16x208x52xf32, #tpu.memory_space<vmem>>, vector<1x208x52xf32>
    %72 = vector.shape_cast %71 : vector<1x208x52xf32> to vector<208x52xf32>
    %cst_72 = arith.constant dense<0.000000e+00> : vector<4x52xf32>
    %73 = tpu.matmul %8, %72, %cst_72 {dimension_numbers = #tpu.dot_dimension_numbers<[1], [0], [0], [1], [0, 0, 1, 1], [], []>} : vector<4x208xf32>, vector<208x52xf32>, vector<4x52xf32> -> vector<4x52xf32>
    %c9_73 = arith.constant 9 : index
    %c0_74 = arith.constant 0 : index
    %c0_75 = arith.constant 0 : index
    %74 = vector.load %arg3[%c9_73, %c0_74, %c0_75] : memref<16x8x4xf32, #tpu.memory_space<vmem>>, vector<1x8x4xf32>
    %75 = vector.shape_cast %74 : vector<1x8x4xf32> to vector<8x4xf32>
    %cst_76 = arith.constant dense<0.000000e+00> : vector<8x52xf32>
    %76 = tpu.matmul %75, %73, %cst_76 {dimension_numbers = #tpu.dot_dimension_numbers<[1], [0], [0], [1], [0, 0, 1, 1], [], []>} : vector<8x4xf32>, vector<4x52xf32>, vector<8x52xf32> -> vector<8x52xf32>
    %77 = arith.addf %70, %76 : vector<8x52xf32>
    %c10 = arith.constant 10 : index
    %c0_77 = arith.constant 0 : index
    %c0_78 = arith.constant 0 : index
    %78 = vector.load %arg4[%c10, %c0_77, %c0_78] : memref<16x208x52xf32, #tpu.memory_space<vmem>>, vector<1x208x52xf32>
    %79 = vector.shape_cast %78 : vector<1x208x52xf32> to vector<208x52xf32>
    %cst_79 = arith.constant dense<0.000000e+00> : vector<4x52xf32>
    %80 = tpu.matmul %8, %79, %cst_79 {dimension_numbers = #tpu.dot_dimension_numbers<[1], [0], [0], [1], [0, 0, 1, 1], [], []>} : vector<4x208xf32>, vector<208x52xf32>, vector<4x52xf32> -> vector<4x52xf32>
    %c10_80 = arith.constant 10 : index
    %c0_81 = arith.constant 0 : index
    %c0_82 = arith.constant 0 : index
    %81 = vector.load %arg3[%c10_80, %c0_81, %c0_82] : memref<16x8x4xf32, #tpu.memory_space<vmem>>, vector<1x8x4xf32>
    %82 = vector.shape_cast %81 : vector<1x8x4xf32> to vector<8x4xf32>
    %cst_83 = arith.constant dense<0.000000e+00> : vector<8x52xf32>
    %83 = tpu.matmul %82, %80, %cst_83 {dimension_numbers = #tpu.dot_dimension_numbers<[1], [0], [0], [1], [0, 0, 1, 1], [], []>} : vector<8x4xf32>, vector<4x52xf32>, vector<8x52xf32> -> vector<8x52xf32>
    %84 = arith.addf %77, %83 : vector<8x52xf32>
    %c11 = arith.constant 11 : index
    %c0_84 = arith.constant 0 : index
    %c0_85 = arith.constant 0 : index
    %85 = vector.load %arg4[%c11, %c0_84, %c0_85] : memref<16x208x52xf32, #tpu.memory_space<vmem>>, vector<1x208x52xf32>
    %86 = vector.shape_cast %85 : vector<1x208x52xf32> to vector<208x52xf32>
    %cst_86 = arith.constant dense<0.000000e+00> : vector<4x52xf32>
    %87 = tpu.matmul %8, %86, %cst_86 {dimension_numbers = #tpu.dot_dimension_numbers<[1], [0], [0], [1], [0, 0, 1, 1], [], []>} : vector<4x208xf32>, vector<208x52xf32>, vector<4x52xf32> -> vector<4x52xf32>
    %c11_87 = arith.constant 11 : index
    %c0_88 = arith.constant 0 : index
    %c0_89 = arith.constant 0 : index
    %88 = vector.load %arg3[%c11_87, %c0_88, %c0_89] : memref<16x8x4xf32, #tpu.memory_space<vmem>>, vector<1x8x4xf32>
    %89 = vector.shape_cast %88 : vector<1x8x4xf32> to vector<8x4xf32>
    %cst_90 = arith.constant dense<0.000000e+00> : vector<8x52xf32>
    %90 = tpu.matmul %89, %87, %cst_90 {dimension_numbers = #tpu.dot_dimension_numbers<[1], [0], [0], [1], [0, 0, 1, 1], [], []>} : vector<8x4xf32>, vector<4x52xf32>, vector<8x52xf32> -> vector<8x52xf32>
    %91 = arith.addf %84, %90 : vector<8x52xf32>
    %c12 = arith.constant 12 : index
    %c0_91 = arith.constant 0 : index
    %c0_92 = arith.constant 0 : index
    %92 = vector.load %arg4[%c12, %c0_91, %c0_92] : memref<16x208x52xf32, #tpu.memory_space<vmem>>, vector<1x208x52xf32>
    %93 = vector.shape_cast %92 : vector<1x208x52xf32> to vector<208x52xf32>
    %cst_93 = arith.constant dense<0.000000e+00> : vector<4x52xf32>
    %94 = tpu.matmul %8, %93, %cst_93 {dimension_numbers = #tpu.dot_dimension_numbers<[1], [0], [0], [1], [0, 0, 1, 1], [], []>} : vector<4x208xf32>, vector<208x52xf32>, vector<4x52xf32> -> vector<4x52xf32>
    %c12_94 = arith.constant 12 : index
    %c0_95 = arith.constant 0 : index
    %c0_96 = arith.constant 0 : index
    %95 = vector.load %arg3[%c12_94, %c0_95, %c0_96] : memref<16x8x4xf32, #tpu.memory_space<vmem>>, vector<1x8x4xf32>
    %96 = vector.shape_cast %95 : vector<1x8x4xf32> to vector<8x4xf32>
    %cst_97 = arith.constant dense<0.000000e+00> : vector<8x52xf32>
    %97 = tpu.matmul %96, %94, %cst_97 {dimension_numbers = #tpu.dot_dimension_numbers<[1], [0], [0], [1], [0, 0, 1, 1], [], []>} : vector<8x4xf32>, vector<4x52xf32>, vector<8x52xf32> -> vector<8x52xf32>
    %98 = arith.addf %91, %97 : vector<8x52xf32>
    %c13 = arith.constant 13 : index
    %c0_98 = arith.constant 0 : index
    %c0_99 = arith.constant 0 : index
    %99 = vector.load %arg4[%c13, %c0_98, %c0_99] : memref<16x208x52xf32, #tpu.memory_space<vmem>>, vector<1x208x52xf32>
    %100 = vector.shape_cast %99 : vector<1x208x52xf32> to vector<208x52xf32>
    %cst_100 = arith.constant dense<0.000000e+00> : vector<4x52xf32>
    %101 = tpu.matmul %8, %100, %cst_100 {dimension_numbers = #tpu.dot_dimension_numbers<[1], [0], [0], [1], [0, 0, 1, 1], [], []>} : vector<4x208xf32>, vector<208x52xf32>, vector<4x52xf32> -> vector<4x52xf32>
    %c13_101 = arith.constant 13 : index
    %c0_102 = arith.constant 0 : index
    %c0_103 = arith.constant 0 : index
    %102 = vector.load %arg3[%c13_101, %c0_102, %c0_103] : memref<16x8x4xf32, #tpu.memory_space<vmem>>, vector<1x8x4xf32>
    %103 = vector.shape_cast %102 : vector<1x8x4xf32> to vector<8x4xf32>
    %cst_104 = arith.constant dense<0.000000e+00> : vector<8x52xf32>
    %104 = tpu.matmul %103, %101, %cst_104 {dimension_numbers = #tpu.dot_dimension_numbers<[1], [0], [0], [1], [0, 0, 1, 1], [], []>} : vector<8x4xf32>, vector<4x52xf32>, vector<8x52xf32> -> vector<8x52xf32>
    %105 = arith.addf %98, %104 : vector<8x52xf32>
    %c14 = arith.constant 14 : index
    %c0_105 = arith.constant 0 : index
    %c0_106 = arith.constant 0 : index
    %106 = vector.load %arg4[%c14, %c0_105, %c0_106] : memref<16x208x52xf32, #tpu.memory_space<vmem>>, vector<1x208x52xf32>
    %107 = vector.shape_cast %106 : vector<1x208x52xf32> to vector<208x52xf32>
    %cst_107 = arith.constant dense<0.000000e+00> : vector<4x52xf32>
    %108 = tpu.matmul %8, %107, %cst_107 {dimension_numbers = #tpu.dot_dimension_numbers<[1], [0], [0], [1], [0, 0, 1, 1], [], []>} : vector<4x208xf32>, vector<208x52xf32>, vector<4x52xf32> -> vector<4x52xf32>
    %c14_108 = arith.constant 14 : index
    %c0_109 = arith.constant 0 : index
    %c0_110 = arith.constant 0 : index
    %109 = vector.load %arg3[%c14_108, %c0_109, %c0_110] : memref<16x8x4xf32, #tpu.memory_space<vmem>>, vector<1x8x4xf32>
    %110 = vector.shape_cast %109 : vector<1x8x4xf32> to vector<8x4xf32>
    %cst_111 = arith.constant dense<0.000000e+00> : vector<8x52xf32>
    %111 = tpu.matmul %110, %108, %cst_111 {dimension_numbers = #tpu.dot_dimension_numbers<[1], [0], [0], [1], [0, 0, 1, 1], [], []>} : vector<8x4xf32>, vector<4x52xf32>, vector<8x52xf32> -> vector<8x52xf32>
    %112 = arith.addf %105, %111 : vector<8x52xf32>
    %c15 = arith.constant 15 : index
    %c0_112 = arith.constant 0 : index
    %c0_113 = arith.constant 0 : index
    %113 = vector.load %arg4[%c15, %c0_112, %c0_113] : memref<16x208x52xf32, #tpu.memory_space<vmem>>, vector<1x208x52xf32>
    %114 = vector.shape_cast %113 : vector<1x208x52xf32> to vector<208x52xf32>
    %cst_114 = arith.constant dense<0.000000e+00> : vector<4x52xf32>
    %115 = tpu.matmul %8, %114, %cst_114 {dimension_numbers = #tpu.dot_dimension_numbers<[1], [0], [0], [1], [0, 0, 1, 1], [], []>} : vector<4x208xf32>, vector<208x52xf32>, vector<4x52xf32> -> vector<4x52xf32>
    %c15_115 = arith.constant 15 : index
    %c0_116 = arith.constant 0 : index
    %c0_117 = arith.constant 0 : index
    %116 = vector.load %arg3[%c15_115, %c0_116, %c0_117] : memref<16x8x4xf32, #tpu.memory_space<vmem>>, vector<1x8x4xf32>
    %117 = vector.shape_cast %116 : vector<1x8x4xf32> to vector<8x4xf32>
    %cst_118 = arith.constant dense<0.000000e+00> : vector<8x52xf32>
    %118 = tpu.matmul %117, %115, %cst_118 {dimension_numbers = #tpu.dot_dimension_numbers<[1], [0], [0], [1], [0, 0, 1, 1], [], []>} : vector<8x4xf32>, vector<4x52xf32>, vector<8x52xf32> -> vector<8x52xf32>
    %119 = arith.addf %112, %118 : vector<8x52xf32>
    %cst_119 = arith.constant dense<0.000000e+00> : vector<8xf32>
    %120 = vector.multi_reduction <add>, %119, %cst_119 [1] : vector<8x52xf32> to vector<8xf32>
    %121 = vector.shape_cast %120 : vector<8xf32> to vector<8x1xf32>
    %cst_120 = arith.constant 5.200000e+01 : f32
    %122 = vector.broadcast %cst_120 : f32 to vector<8x1xf32>
    %123 = arith.divf %121, %122 : vector<8x1xf32>
    %124 = arith.mulf %119, %119 : vector<8x52xf32>
    %cst_121 = arith.constant dense<0.000000e+00> : vector<8xf32>
    %125 = vector.multi_reduction <add>, %124, %cst_121 [1] : vector<8x52xf32> to vector<8xf32>
    %126 = vector.shape_cast %125 : vector<8xf32> to vector<8x1xf32>
    %cst_122 = arith.constant 5.200000e+01 : f32
    %127 = vector.broadcast %cst_122 : f32 to vector<8x1xf32>
    %128 = arith.divf %126, %127 : vector<8x1xf32>
    %129 = arith.mulf %123, %123 : vector<8x1xf32>
    %130 = arith.subf %128, %129 : vector<8x1xf32>
    %cst_123 = arith.constant 0.000000e+00 : f32
    %131 = vector.broadcast %cst_123 : f32 to vector<8x1xf32>
    %132 = arith.maximumf %130, %131 : vector<8x1xf32>
    %133 = vector.broadcast %123 : vector<8x1xf32> to vector<8x52xf32>
    %134 = arith.subf %119, %133 : vector<8x52xf32>
    %cst_124 = arith.constant 9.99999974E-6 : f32
    %135 = vector.broadcast %cst_124 : f32 to vector<8x1xf32>
    %136 = arith.addf %132, %135 : vector<8x1xf32>
    %137 = math.rsqrt %136 : vector<8x1xf32>
    %138 = vector.broadcast %137 : vector<8x1xf32> to vector<8x52xf32>
    %139 = arith.mulf %134, %138 : vector<8x52xf32>
    %cst_125 = arith.constant 0.000000e+00 : f32
    %140 = vector.broadcast %cst_125 : f32 to vector<8x52xf32>
    %141 = arith.cmpf oge, %139, %140 : vector<8x52xf32>
    %cst_126 = arith.constant 2.000000e-01 : f32
    %142 = vector.broadcast %cst_126 : f32 to vector<8x52xf32>
    %143 = arith.mulf %142, %139 : vector<8x52xf32>
    %144 = arith.select %141, %139, %143 : vector<8x52xi1>, vector<8x52xf32>
    %c0_127 = arith.constant 0 : index
    %c0_128 = arith.constant 0 : index
    %c0_129 = arith.constant 0 : index
    %145 = vector.load %arg6[%c0_127, %c0_128, %c0_129] : memref<9x52x13xf32, #tpu.memory_space<vmem>>, vector<1x52x13xf32>
    %146 = vector.shape_cast %145 : vector<1x52x13xf32> to vector<52x13xf32>
    %cst_130 = arith.constant dense<0.000000e+00> : vector<8x13xf32>
    %147 = tpu.matmul %144, %146, %cst_130 {dimension_numbers = #tpu.dot_dimension_numbers<[1], [0], [0], [1], [0, 0, 1, 1], [], []>} : vector<8x52xf32>, vector<52x13xf32>, vector<8x13xf32> -> vector<8x13xf32>
    %c0_131 = arith.constant 0 : index
    %c0_132 = arith.constant 0 : index
    %c0_133 = arith.constant 0 : index
    %148 = vector.load %arg5[%c0_131, %c0_132, %c0_133] : memref<9x16x8xf32, #tpu.memory_space<vmem>>, vector<1x16x8xf32>
    %149 = vector.shape_cast %148 : vector<1x16x8xf32> to vector<16x8xf32>
    %cst_134 = arith.constant dense<0.000000e+00> : vector<16x13xf32>
    %150 = tpu.matmul %149, %147, %cst_134 {dimension_numbers = #tpu.dot_dimension_numbers<[1], [0], [0], [1], [0, 0, 1, 1], [], []>} : vector<16x8xf32>, vector<8x13xf32>, vector<16x13xf32> -> vector<16x13xf32>
    %c1_135 = arith.constant 1 : index
    %c0_136 = arith.constant 0 : index
    %c0_137 = arith.constant 0 : index
    %151 = vector.load %arg6[%c1_135, %c0_136, %c0_137] : memref<9x52x13xf32, #tpu.memory_space<vmem>>, vector<1x52x13xf32>
    %152 = vector.shape_cast %151 : vector<1x52x13xf32> to vector<52x13xf32>
    %cst_138 = arith.constant dense<0.000000e+00> : vector<8x13xf32>
    %153 = tpu.matmul %144, %152, %cst_138 {dimension_numbers = #tpu.dot_dimension_numbers<[1], [0], [0], [1], [0, 0, 1, 1], [], []>} : vector<8x52xf32>, vector<52x13xf32>, vector<8x13xf32> -> vector<8x13xf32>
    %c1_139 = arith.constant 1 : index
    %c0_140 = arith.constant 0 : index
    %c0_141 = arith.constant 0 : index
    %154 = vector.load %arg5[%c1_139, %c0_140, %c0_141] : memref<9x16x8xf32, #tpu.memory_space<vmem>>, vector<1x16x8xf32>
    %155 = vector.shape_cast %154 : vector<1x16x8xf32> to vector<16x8xf32>
    %cst_142 = arith.constant dense<0.000000e+00> : vector<16x13xf32>
    %156 = tpu.matmul %155, %153, %cst_142 {dimension_numbers = #tpu.dot_dimension_numbers<[1], [0], [0], [1], [0, 0, 1, 1], [], []>} : vector<16x8xf32>, vector<8x13xf32>, vector<16x13xf32> -> vector<16x13xf32>
    %157 = arith.addf %150, %156 : vector<16x13xf32>
    %c2_143 = arith.constant 2 : index
    %c0_144 = arith.constant 0 : index
    %c0_145 = arith.constant 0 : index
    %158 = vector.load %arg6[%c2_143, %c0_144, %c0_145] : memref<9x52x13xf32, #tpu.memory_space<vmem>>, vector<1x52x13xf32>
    %159 = vector.shape_cast %158 : vector<1x52x13xf32> to vector<52x13xf32>
    %cst_146 = arith.constant dense<0.000000e+00> : vector<8x13xf32>
    %160 = tpu.matmul %144, %159, %cst_146 {dimension_numbers = #tpu.dot_dimension_numbers<[1], [0], [0], [1], [0, 0, 1, 1], [], []>} : vector<8x52xf32>, vector<52x13xf32>, vector<8x13xf32> -> vector<8x13xf32>
    %c2_147 = arith.constant 2 : index
    %c0_148 = arith.constant 0 : index
    %c0_149 = arith.constant 0 : index
    %161 = vector.load %arg5[%c2_147, %c0_148, %c0_149] : memref<9x16x8xf32, #tpu.memory_space<vmem>>, vector<1x16x8xf32>
    %162 = vector.shape_cast %161 : vector<1x16x8xf32> to vector<16x8xf32>
    %cst_150 = arith.constant dense<0.000000e+00> : vector<16x13xf32>
    %163 = tpu.matmul %162, %160, %cst_150 {dimension_numbers = #tpu.dot_dimension_numbers<[1], [0], [0], [1], [0, 0, 1, 1], [], []>} : vector<16x8xf32>, vector<8x13xf32>, vector<16x13xf32> -> vector<16x13xf32>
    %164 = arith.addf %157, %163 : vector<16x13xf32>
    %c3_151 = arith.constant 3 : index
    %c0_152 = arith.constant 0 : index
    %c0_153 = arith.constant 0 : index
    %165 = vector.load %arg6[%c3_151, %c0_152, %c0_153] : memref<9x52x13xf32, #tpu.memory_space<vmem>>, vector<1x52x13xf32>
    %166 = vector.shape_cast %165 : vector<1x52x13xf32> to vector<52x13xf32>
    %cst_154 = arith.constant dense<0.000000e+00> : vector<8x13xf32>
    %167 = tpu.matmul %144, %166, %cst_154 {dimension_numbers = #tpu.dot_dimension_numbers<[1], [0], [0], [1], [0, 0, 1, 1], [], []>} : vector<8x52xf32>, vector<52x13xf32>, vector<8x13xf32> -> vector<8x13xf32>
    %c3_155 = arith.constant 3 : index
    %c0_156 = arith.constant 0 : index
    %c0_157 = arith.constant 0 : index
    %168 = vector.load %arg5[%c3_155, %c0_156, %c0_157] : memref<9x16x8xf32, #tpu.memory_space<vmem>>, vector<1x16x8xf32>
    %169 = vector.shape_cast %168 : vector<1x16x8xf32> to vector<16x8xf32>
    %cst_158 = arith.constant dense<0.000000e+00> : vector<16x13xf32>
    %170 = tpu.matmul %169, %167, %cst_158 {dimension_numbers = #tpu.dot_dimension_numbers<[1], [0], [0], [1], [0, 0, 1, 1], [], []>} : vector<16x8xf32>, vector<8x13xf32>, vector<16x13xf32> -> vector<16x13xf32>
    %171 = arith.addf %164, %170 : vector<16x13xf32>
    %c4_159 = arith.constant 4 : index
    %c0_160 = arith.constant 0 : index
    %c0_161 = arith.constant 0 : index
    %172 = vector.load %arg6[%c4_159, %c0_160, %c0_161] : memref<9x52x13xf32, #tpu.memory_space<vmem>>, vector<1x52x13xf32>
    %173 = vector.shape_cast %172 : vector<1x52x13xf32> to vector<52x13xf32>
    %cst_162 = arith.constant dense<0.000000e+00> : vector<8x13xf32>
    %174 = tpu.matmul %144, %173, %cst_162 {dimension_numbers = #tpu.dot_dimension_numbers<[1], [0], [0], [1], [0, 0, 1, 1], [], []>} : vector<8x52xf32>, vector<52x13xf32>, vector<8x13xf32> -> vector<8x13xf32>
    %c4_163 = arith.constant 4 : index
    %c0_164 = arith.constant 0 : index
    %c0_165 = arith.constant 0 : index
    %175 = vector.load %arg5[%c4_163, %c0_164, %c0_165] : memref<9x16x8xf32, #tpu.memory_space<vmem>>, vector<1x16x8xf32>
    %176 = vector.shape_cast %175 : vector<1x16x8xf32> to vector<16x8xf32>
    %cst_166 = arith.constant dense<0.000000e+00> : vector<16x13xf32>
    %177 = tpu.matmul %176, %174, %cst_166 {dimension_numbers = #tpu.dot_dimension_numbers<[1], [0], [0], [1], [0, 0, 1, 1], [], []>} : vector<16x8xf32>, vector<8x13xf32>, vector<16x13xf32> -> vector<16x13xf32>
    %178 = arith.addf %171, %177 : vector<16x13xf32>
    %c5_167 = arith.constant 5 : index
    %c0_168 = arith.constant 0 : index
    %c0_169 = arith.constant 0 : index
    %179 = vector.load %arg6[%c5_167, %c0_168, %c0_169] : memref<9x52x13xf32, #tpu.memory_space<vmem>>, vector<1x52x13xf32>
    %180 = vector.shape_cast %179 : vector<1x52x13xf32> to vector<52x13xf32>
    %cst_170 = arith.constant dense<0.000000e+00> : vector<8x13xf32>
    %181 = tpu.matmul %144, %180, %cst_170 {dimension_numbers = #tpu.dot_dimension_numbers<[1], [0], [0], [1], [0, 0, 1, 1], [], []>} : vector<8x52xf32>, vector<52x13xf32>, vector<8x13xf32> -> vector<8x13xf32>
    %c5_171 = arith.constant 5 : index
    %c0_172 = arith.constant 0 : index
    %c0_173 = arith.constant 0 : index
    %182 = vector.load %arg5[%c5_171, %c0_172, %c0_173] : memref<9x16x8xf32, #tpu.memory_space<vmem>>, vector<1x16x8xf32>
    %183 = vector.shape_cast %182 : vector<1x16x8xf32> to vector<16x8xf32>
    %cst_174 = arith.constant dense<0.000000e+00> : vector<16x13xf32>
    %184 = tpu.matmul %183, %181, %cst_174 {dimension_numbers = #tpu.dot_dimension_numbers<[1], [0], [0], [1], [0, 0, 1, 1], [], []>} : vector<16x8xf32>, vector<8x13xf32>, vector<16x13xf32> -> vector<16x13xf32>
    %185 = arith.addf %178, %184 : vector<16x13xf32>
    %c6_175 = arith.constant 6 : index
    %c0_176 = arith.constant 0 : index
    %c0_177 = arith.constant 0 : index
    %186 = vector.load %arg6[%c6_175, %c0_176, %c0_177] : memref<9x52x13xf32, #tpu.memory_space<vmem>>, vector<1x52x13xf32>
    %187 = vector.shape_cast %186 : vector<1x52x13xf32> to vector<52x13xf32>
    %cst_178 = arith.constant dense<0.000000e+00> : vector<8x13xf32>
    %188 = tpu.matmul %144, %187, %cst_178 {dimension_numbers = #tpu.dot_dimension_numbers<[1], [0], [0], [1], [0, 0, 1, 1], [], []>} : vector<8x52xf32>, vector<52x13xf32>, vector<8x13xf32> -> vector<8x13xf32>
    %c6_179 = arith.constant 6 : index
    %c0_180 = arith.constant 0 : index
    %c0_181 = arith.constant 0 : index
    %189 = vector.load %arg5[%c6_179, %c0_180, %c0_181] : memref<9x16x8xf32, #tpu.memory_space<vmem>>, vector<1x16x8xf32>
    %190 = vector.shape_cast %189 : vector<1x16x8xf32> to vector<16x8xf32>
    %cst_182 = arith.constant dense<0.000000e+00> : vector<16x13xf32>
    %191 = tpu.matmul %190, %188, %cst_182 {dimension_numbers = #tpu.dot_dimension_numbers<[1], [0], [0], [1], [0, 0, 1, 1], [], []>} : vector<16x8xf32>, vector<8x13xf32>, vector<16x13xf32> -> vector<16x13xf32>
    %192 = arith.addf %185, %191 : vector<16x13xf32>
    %c7_183 = arith.constant 7 : index
    %c0_184 = arith.constant 0 : index
    %c0_185 = arith.constant 0 : index
    %193 = vector.load %arg6[%c7_183, %c0_184, %c0_185] : memref<9x52x13xf32, #tpu.memory_space<vmem>>, vector<1x52x13xf32>
    %194 = vector.shape_cast %193 : vector<1x52x13xf32> to vector<52x13xf32>
    %cst_186 = arith.constant dense<0.000000e+00> : vector<8x13xf32>
    %195 = tpu.matmul %144, %194, %cst_186 {dimension_numbers = #tpu.dot_dimension_numbers<[1], [0], [0], [1], [0, 0, 1, 1], [], []>} : vector<8x52xf32>, vector<52x13xf32>, vector<8x13xf32> -> vector<8x13xf32>
    %c7_187 = arith.constant 7 : index
    %c0_188 = arith.constant 0 : index
    %c0_189 = arith.constant 0 : index
    %196 = vector.load %arg5[%c7_187, %c0_188, %c0_189] : memref<9x16x8xf32, #tpu.memory_space<vmem>>, vector<1x16x8xf32>
    %197 = vector.shape_cast %196 : vector<1x16x8xf32> to vector<16x8xf32>
    %cst_190 = arith.constant dense<0.000000e+00> : vector<16x13xf32>
    %198 = tpu.matmul %197, %195, %cst_190 {dimension_numbers = #tpu.dot_dimension_numbers<[1], [0], [0], [1], [0, 0, 1, 1], [], []>} : vector<16x8xf32>, vector<8x13xf32>, vector<16x13xf32> -> vector<16x13xf32>
    %199 = arith.addf %192, %198 : vector<16x13xf32>
    %c8_191 = arith.constant 8 : index
    %c0_192 = arith.constant 0 : index
    %c0_193 = arith.constant 0 : index
    %200 = vector.load %arg6[%c8_191, %c0_192, %c0_193] : memref<9x52x13xf32, #tpu.memory_space<vmem>>, vector<1x52x13xf32>
    %201 = vector.shape_cast %200 : vector<1x52x13xf32> to vector<52x13xf32>
    %cst_194 = arith.constant dense<0.000000e+00> : vector<8x13xf32>
    %202 = tpu.matmul %144, %201, %cst_194 {dimension_numbers = #tpu.dot_dimension_numbers<[1], [0], [0], [1], [0, 0, 1, 1], [], []>} : vector<8x52xf32>, vector<52x13xf32>, vector<8x13xf32> -> vector<8x13xf32>
    %c8_195 = arith.constant 8 : index
    %c0_196 = arith.constant 0 : index
    %c0_197 = arith.constant 0 : index
    %203 = vector.load %arg5[%c8_195, %c0_196, %c0_197] : memref<9x16x8xf32, #tpu.memory_space<vmem>>, vector<1x16x8xf32>
    %204 = vector.shape_cast %203 : vector<1x16x8xf32> to vector<16x8xf32>
    %cst_198 = arith.constant dense<0.000000e+00> : vector<16x13xf32>
    %205 = tpu.matmul %204, %202, %cst_198 {dimension_numbers = #tpu.dot_dimension_numbers<[1], [0], [0], [1], [0, 0, 1, 1], [], []>} : vector<16x8xf32>, vector<8x13xf32>, vector<16x13xf32> -> vector<16x13xf32>
    %206 = arith.addf %199, %205 : vector<16x13xf32>
    %cst_199 = arith.constant dense<0.000000e+00> : vector<16xf32>
    %207 = vector.multi_reduction <add>, %206, %cst_199 [1] : vector<16x13xf32> to vector<16xf32>
    %208 = vector.shape_cast %207 : vector<16xf32> to vector<16x1xf32>
    %cst_200 = arith.constant 1.300000e+01 : f32
    %209 = vector.broadcast %cst_200 : f32 to vector<16x1xf32>
    %210 = arith.divf %208, %209 : vector<16x1xf32>
    %211 = arith.mulf %206, %206 : vector<16x13xf32>
    %cst_201 = arith.constant dense<0.000000e+00> : vector<16xf32>
    %212 = vector.multi_reduction <add>, %211, %cst_201 [1] : vector<16x13xf32> to vector<16xf32>
    %213 = vector.shape_cast %212 : vector<16xf32> to vector<16x1xf32>
    %cst_202 = arith.constant 1.300000e+01 : f32
    %214 = vector.broadcast %cst_202 : f32 to vector<16x1xf32>
    %215 = arith.divf %213, %214 : vector<16x1xf32>
    %216 = arith.mulf %210, %210 : vector<16x1xf32>
    %217 = arith.subf %215, %216 : vector<16x1xf32>
    %cst_203 = arith.constant 0.000000e+00 : f32
    %218 = vector.broadcast %cst_203 : f32 to vector<16x1xf32>
    %219 = arith.maximumf %217, %218 : vector<16x1xf32>
    %220 = vector.broadcast %210 : vector<16x1xf32> to vector<16x13xf32>
    %221 = arith.subf %206, %220 : vector<16x13xf32>
    %cst_204 = arith.constant 9.99999974E-6 : f32
    %222 = vector.broadcast %cst_204 : f32 to vector<16x1xf32>
    %223 = arith.addf %219, %222 : vector<16x1xf32>
    %224 = math.rsqrt %223 : vector<16x1xf32>
    %225 = vector.broadcast %224 : vector<16x1xf32> to vector<16x13xf32>
    %226 = arith.mulf %221, %225 : vector<16x13xf32>
    %cst_205 = arith.constant 0.000000e+00 : f32
    %227 = vector.broadcast %cst_205 : f32 to vector<16x13xf32>
    %228 = arith.cmpf oge, %226, %227 : vector<16x13xf32>
    %cst_206 = arith.constant 2.000000e-01 : f32
    %229 = vector.broadcast %cst_206 : f32 to vector<16x13xf32>
    %230 = arith.mulf %229, %226 : vector<16x13xf32>
    %231 = arith.select %228, %226, %230 : vector<16x13xi1>, vector<16x13xf32>
    %c0_207 = arith.constant 0 : index
    %c0_208 = arith.constant 0 : index
    %232 = vector.load %arg7[%c0_207, %c0_208] : memref<16x13xf32, #tpu.memory_space<vmem>>, vector<16x13xf32>
    %233 = arith.mulf %231, %232 : vector<16x13xf32>
    %cst_209 = arith.constant dense<0.000000e+00> : vector<16xf32>
    %234 = vector.multi_reduction <add>, %233, %cst_209 [1] : vector<16x13xf32> to vector<16xf32>
    %235 = vector.shape_cast %234 : vector<16xf32> to vector<16x1xf32>
    %cst_210 = arith.constant dense<0.000000e+00> : vector<1xf32>
    %236 = vector.multi_reduction <add>, %235, %cst_210 [0] : vector<16x1xf32> to vector<1xf32>
    %237 = vector.shape_cast %236 : vector<1xf32> to vector<1x1xf32>
    %c0_211 = arith.constant 0 : index
    %c0_212 = arith.constant 0 : index
    %238 = vector.load %arg8[%c0_211, %c0_212] : memref<1x1xf32, #tpu.memory_space<vmem>>, vector<1x1xf32>
    %239 = arith.addf %237, %238 : vector<1x1xf32>
    %240 = arith.negf %239 : vector<1x1xf32>
    %241 = math.exp %240 : vector<1x1xf32>
    %cst_213 = arith.constant 1.000000e+00 : f32
    %242 = vector.broadcast %cst_213 : f32 to vector<1x1xf32>
    %243 = arith.addf %242, %241 : vector<1x1xf32>
    %244 = arith.divf %242, %243 : vector<1x1xf32>
    %c0_214 = arith.constant 0 : index
    %c0_215 = arith.constant 0 : index
    %c0_216 = arith.constant 0 : index
    %245 = vector.load %arg9[%c0_214, %c0_215, %c0_216] : memref<1x1x1xf32, #tpu.memory_space<vmem>>, vector<1x1x1xf32>
    %246 = vector.shape_cast %245 : vector<1x1x1xf32> to vector<1x1xf32>
    %247 = vector.shape_cast %244 : vector<1x1xf32> to vector<1x1x1xf32>
    tpu.vector_store %arg9[%c0_214, %c0_215, %c0_216], %247 {strides = array<i32>} : memref<1x1x1xf32, #tpu.memory_space<vmem>>, vector<1x1x1xf32>,
    return
  }
  func.func @transform_0(%arg0: i32) -> (i32, i32, i32) {
    %c0_i32 = arith.constant 0 : i32
    %c0_i32_0 = arith.constant 0 : i32
    %c0_i32_1 = arith.constant 0 : i32
    return %arg0, %c0_i32, %c0_i32_0 : i32, i32, i32
  }
  func.func @transform_1(%arg0: i32) -> (i32, i32) {
    %c0_i32 = arith.constant 0 : i32
    %c0_i32_0 = arith.constant 0 : i32
    %c0_i32_1 = arith.constant 0 : i32
    return %c0_i32, %c0_i32_0 : i32, i32
  }
  func.func @transform_2(%arg0: i32) -> (i32, i32, i32) {
    %c0_i32 = arith.constant 0 : i32
    %c0_i32_0 = arith.constant 0 : i32
    %c0_i32_1 = arith.constant 0 : i32
    %c0_i32_2 = arith.constant 0 : i32
    return %c0_i32, %c0_i32_0, %c0_i32_1 : i32, i32, i32
  }
  func.func @transform_3(%arg0: i32) -> (i32, i32, i32) {
    %c0_i32 = arith.constant 0 : i32
    %c0_i32_0 = arith.constant 0 : i32
    %c0_i32_1 = arith.constant 0 : i32
    %c0_i32_2 = arith.constant 0 : i32
    return %c0_i32, %c0_i32_0, %c0_i32_1 : i32, i32, i32
  }
  func.func @transform_4(%arg0: i32) -> (i32, i32, i32) {
    %c0_i32 = arith.constant 0 : i32
    %c0_i32_0 = arith.constant 0 : i32
    %c0_i32_1 = arith.constant 0 : i32
    %c0_i32_2 = arith.constant 0 : i32
    return %c0_i32, %c0_i32_0, %c0_i32_1 : i32, i32, i32
  }
  func.func @transform_5(%arg0: i32) -> (i32, i32, i32) {
    %c0_i32 = arith.constant 0 : i32
    %c0_i32_0 = arith.constant 0 : i32
    %c0_i32_1 = arith.constant 0 : i32
    %c0_i32_2 = arith.constant 0 : i32
    return %c0_i32, %c0_i32_0, %c0_i32_1 : i32, i32, i32
  }
  func.func @transform_6(%arg0: i32) -> (i32, i32) {
    %c0_i32 = arith.constant 0 : i32
    %c0_i32_0 = arith.constant 0 : i32
    %c0_i32_1 = arith.constant 0 : i32
    return %c0_i32, %c0_i32_0 : i32, i32
  }
  func.func @transform_7(%arg0: i32) -> (i32, i32) {
    %c0_i32 = arith.constant 0 : i32
    %c0_i32_0 = arith.constant 0 : i32
    %c0_i32_1 = arith.constant 0 : i32
    return %c0_i32, %c0_i32_0 : i32, i32
  }
  func.func @transform_8(%arg0: i32) -> (i32, i32, i32) {
    %c0_i32 = arith.constant 0 : i32
    %c0_i32_0 = arith.constant 0 : i32
    %c0_i32_1 = arith.constant 0 : i32
    return %arg0, %c0_i32, %c0_i32_0 : i32, i32, i32
  }
}

</mosaic_0001>

<llo_original>
// kernel: squeeze.1
$region0: #{squeeze.1}
  %s0 = inlined_call_operand.vmem [shape: f32[208], index: 0, kind: input, shape index: {}]
  %s1 = inlined_call_operand.vmem [shape: f32[16,13], index: 1, kind: output, shape index: {}]
  $region1: #{squeeze.1} parent=0
    #allocation0 [shape = 'u8[4096]{0}', space=vmem, size = 0x1000, scoped, tag = 'scoped mem for input reshape']
    %s3 = sshll.u32 1, 2
    %s4 = ssub.s32 %s3, 1
    %v5 = vld [vmem:[%s0] sm:%s4]
    %6 = vst [vmem:[#allocation0] sm:%s4] %v5
    %v7 = vld [vmem:[#allocation0] sm:$0x1]
    %vm8 = vcmask 105472
    %9 = vst.msk [vmem:[%s1] sm:$0x1] %vm8, %v7
    %s10 = scalar_lea.vmem [#allocation0], 1
    %v11 = vld [vmem:[%s10] sm:$0x1]
    %12 = vrot.lane.b32.xlu0 %v11, 126
    %v13 = vpop.permute.xlu0 %12
    %vm14 = vcmask 105472
    %s15 = scalar_lea.vmem %s1, 10
    %16 = vst.msk [vmem:[%s15] sm:$0x1] %vm14, %v13
    %v17 = vld [vmem:[#allocation0] sm:$0x1]
    %18 = vrot.lane.b32.xlu0 %v17, 115
    %v19 = vpop.permute.xlu0 %18
    %vm20 = vcmask 105472
    %s21 = scalar_lea.vmem %s1, 1
    %22 = vst.msk [vmem:[%s21] sm:$0x1] %vm20, %v19
    %s23 = scalar_lea.vmem [#allocation0], 1
    %v24 = vld [vmem:[%s23] sm:$0x1]
    %25 = vrot.lane.b32.xlu0 %v24, 113
    %v26 = vpop.permute.xlu0 %25
    %vm27 = vcmask 105472
    %s28 = scalar_lea.vmem %s1, 11
    %29 = vst.msk [vmem:[%s28] sm:$0x1] %vm27, %v26
    %v30 = vld [vmem:[#allocation0] sm:$0x1]
    %31 = vrot.lane.b32.xlu0 %v30, 102
    %v32 = vpop.permute.xlu0 %31
    %vm33 = vcmask 105472
    %s34 = scalar_lea.vmem %s1, 2
    %35 = vst.msk [vmem:[%s34] sm:$0x1] %vm33, %v32
    %s36 = scalar_lea.vmem [#allocation0], 1
    %v37 = vld [vmem:[%s36] sm:$0x1]
    %38 = vrot.lane.b32.xlu0 %v37, 100
    %v39 = vpop.permute.xlu0 %38
    %vm40 = vcmask 105472
    %s41 = scalar_lea.vmem %s1, 12
    %42 = vst.msk [vmem:[%s41] sm:$0x1] %vm40, %v39
    %v43 = vld [vmem:[#allocation0] sm:$0x1]
    %44 = vrot.lane.b32.xlu0 %v43, 89
    %v45 = vpop.permute.xlu0 %44
    %vm46 = vcmask 105472
    %s47 = scalar_lea.vmem %s1, 3
    %48 = vst.msk [vmem:[%s47] sm:$0x1] %vm46, %v45
    %s49 = scalar_lea.vmem [#allocation0], 1
    %v50 = vld [vmem:[%s49] sm:$0x1]
    %51 = vrot.lane.b32.xlu0 %v50, 87
    %v52 = vpop.permute.xlu0 %51
    %vm53 = vcmask 105472
    %s54 = scalar_lea.vmem %s1, 13
    %55 = vst.msk [vmem:[%s54] sm:$0x1] %vm53, %v52
    %v56 = vld [vmem:[#allocation0] sm:$0x1]
    %57 = vrot.lane.b32.xlu0 %v56, 76
    %v58 = vpop.permute.xlu0 %57
    %vm59 = vcmask 105472
    %s60 = scalar_lea.vmem %s1, 4
    %61 = vst.msk [vmem:[%s60] sm:$0x1] %vm59, %v58
    %s62 = scalar_lea.vmem [#allocation0], 1
    %v63 = vld [vmem:[%s62] sm:$0x1]
    %64 = vrot.lane.b32.xlu0 %v63, 74
    %v65 = vpop.permute.xlu0 %64
    %vm66 = vcmask 105472
    %s67 = scalar_lea.vmem %s1, 14
    %68 = vst.msk [vmem:[%s67] sm:$0x1] %vm66, %v65
    %v69 = vld [vmem:[#allocation0] sm:$0x1]
    %70 = vrot.lane.b32.xlu0 %v69, 63
    %v71 = vpop.permute.xlu0 %70
    %vm72 = vcmask 105472
    %s73 = scalar_lea.vmem %s1, 5
    %74 = vst.msk [vmem:[%s73] sm:$0x1] %vm72, %v71
    %s75 = scalar_lea.vmem [#allocation0], 1
    %v76 = vld [vmem:[%s75] sm:$0x1]
    %77 = vrot.lane.b32.xlu0 %v76, 61
    %v78 = vpop.permute.xlu0 %77
    %vm79 = vcmask 105472
    %s80 = scalar_lea.vmem %s1, 15
    %81 = vst.msk [vmem:[%s80] sm:$0x1] %vm79, %v78
    %v82 = vld [vmem:[#allocation0] sm:$0x1]
    %83 = vrot.lane.b32.xlu0 %v82, 50
    %v84 = vpop.permute.xlu0 %83
    %vm85 = vcmask 105472
    %s86 = scalar_lea.vmem %s1, 6
    %87 = vst.msk [vmem:[%s86] sm:$0x1] %vm85, %v84
    %v88 = vld [vmem:[#allocation0] sm:$0x1]
    %89 = vrot.lane.b32.xlu0 %v88, 37
    %v90 = vpop.permute.xlu0 %89
    %vm91 = vcmask 105472
    %s92 = scalar_lea.vmem %s1, 7
    %93 = vst.msk [vmem:[%s92] sm:$0x1] %vm91, %v90
    %v94 = vld [vmem:[#allocation0] sm:$0x1]
    %95 = vrot.lane.b32.xlu0 %v94, 24
    %v96 = vpop.permute.xlu0 %95
    %vm97 = vcmask 105472
    %s98 = scalar_lea.vmem %s1, 8
    %99 = vst.msk [vmem:[%s98] sm:$0x1] %vm97, %v96
    %v100 = vld [vmem:[#allocation0] sm:$0x1]
    %s101 = scalar_lea.vmem [#allocation0], 1
    %v102 = vld [vmem:[%s101] sm:$0x1]
    %vm103 = vcmask 957440
    %v104 = vsel %vm103, %v102, %v100
    %105 = vrot.lane.b32.xlu0 %v104, 11
    %v106 = vpop.permute.xlu0 %105
    %vm107 = vcmask 89088
    %s108 = scalar_lea.vmem %s1, 9
    %109 = vst.msk [vmem:[%s108] sm:$0x1] %vm107, %v106
    %vm110 = vcmask 105560
    %s111 = scalar_lea.vmem %s1, 9
    %112 = vst.msk [vmem:[%s111] sm:$0x1] %vm110, %v106

// kernel: discriminator_wgan_forward.1
$region0: #{discriminator_wgan_forward.1}
  #allocation0 [shape = 'u32[]', space=smem, size = 0x4, offset = 0x4, fixed_abs, tag = 'smem constant byte address 0x4 - core index']
  #allocation1 [shape = 'u32[144,128]{1,0:T(1,128)}', space=vmem, size = 0x12000, scoped, tag = 'internal scratch']
  #allocation2 [shape = 'f32[1,1]{1,0:T(1,128)S(1)}', space=vmem, size = 0x200, scoped, tag = 'scoped memory for discriminator_wgan_forward.1']
  %s0 = inlined_call_operand.vmem [shape: f32[2,16,208], index: 0, kind: input, shape index: {}]
  %s1 = inlined_call_operand.vmem [shape: f32[4,16], index: 1, kind: input, shape index: {}]
  %s2 = inlined_call_operand.vmem [shape: f32[16,8,4], index: 2, kind: input, shape index: {}]
  %s3 = inlined_call_operand.vmem [shape: f32[16,208,52], index: 3, kind: input, shape index: {}]
  %s4 = inlined_call_operand.vmem [shape: f32[9,16,8], index: 4, kind: input, shape index: {}]
  %s5 = inlined_call_operand.vmem [shape: f32[9,52,13], index: 5, kind: input, shape index: {}]
  %s6 = inlined_call_operand.vmem [shape: f32[16,13], index: 6, kind: input, shape index: {}]
  %s7 = inlined_call_operand.<no memory space> [shape: f32[1,1], index: 7, kind: input, shape index: {}]
  %s8 = inlined_call_operand.vmem [shape: f32[2,1,1], index: 8, kind: output, shape index: {}]
  %s9 = sld [smem:[#allocation0]]
  $region65: #{discriminator_wgan_forward.1} parent=0
    _
  %s11 = ssub.s32 1, %s9
  %s12 = scalar_select 0, %s11, %s9
  %v13 = vstv %s7
  %14 = vst [vmem:[#allocation2] sm:$0x1] %v13
  loop: start=0, step=1, limit=4
  $region2: #{discriminator_wgan_forward.1} parent=0 // loop_pre_header
    _
  $region3: #{discriminator_wgan_forward.1} parent=0 // loop_header
    %s16 = sphi 0, %s20
    %p17 = scmp.ge.s32.totalorder %s16, 4
    %s26 = sphi 0, %s28
    %s29 = sphi 0, %s26
    %s30 = sphi 0, %s29
    %s46 = sphi 0, %s30
    %s50 = sphi 0, %s50
    %s52 = sphi 0, %s50
    %s53 = sphi 0, %s52
    %s67 = sphi 0, %s53
    %s71 = sphi 0, %s71
    %s73 = sphi 0, %s71
    %s74 = sphi 0, %s73
    %s88 = sphi 0, %s74
    %s92 = sphi 0, %s92
    %s94 = sphi 0, %s92
    %s95 = sphi 0, %s94
    %s109 = sphi 0, %s95
    %s113 = sphi 0, %s113
    %s115 = sphi 0, %s113
    %s116 = sphi 0, %s115
    %s130 = sphi 0, %s116
    %s134 = sphi 0, %s134
    %s136 = sphi 0, %s134
    %s137 = sphi 0, %s136
    %s151 = sphi 0, %s137
    %s155 = sphi 0, %s155
    %s157 = sphi 0, %s155
    %s158 = sphi 0, %s157
    %s172 = sphi 0, %s158
    %s176 = sphi 0, %s176
    %s178 = sphi 0, %s176
    %s179 = sphi 0, %s178
    %s193 = sphi 0, %s179
    %s199 = sphi 0, %s201
    %s202 = sphi 0, %s199
    %s203 = sphi 0, %s202
    %s219 = sphi 0, %s203
  $region4: #{discriminator_wgan_forward.1} parent=0 // loop_header_branch
    %19 = sbr.rel (%p17) target = $region8
  $region5: #{discriminator_wgan_forward.1} parent=0 // loop_body
    %s21 = ssub.s32 %s16, 1
    %s22 = ssub.s32 %s16, 2
    %s23 = sadd.s32 %s16, 1
    %s24 = ssub.s32 %s16, %s23
    %p25 = scmp.eq.s32.totalorder %s24, 0
    %s27 = sadd.s32 %s26, 1
    %s28 = scalar_select %p25, %s26, %s27
    %p31 = pneg %p25
    %p32 = scmp.eq.s32.totalorder %s16, 1
    %p33 = por %p31, %p32
    %p34 = scmp.ne.s32.totalorder %s26, %s29
    %p35 = scmp.eq.s32.totalorder %s16, 0
    %p36 = por %p34, %p35
    %p37 = scmp.ne.s32.totalorder %s26, %s29
    %p38 = scmp.eq.s32.totalorder %s21, 1
    %p39 = por %p37, %p38
    %p40 = scmp.ne.s32.totalorder %s29, %s30
    %p41 = scmp.eq.s32.totalorder %s21, 0
    %p42 = por %p40, %p41
    %p43 = scmp.ne.s32.totalorder %s29, %s30
    %p44 = scmp.eq.s32.totalorder %s22, 1
    %p45 = por %p43, %p44
    %p47 = scmp.ne.s32.totalorder %s30, %s46
    %p48 = scmp.eq.s32.totalorder %s22, 0
    %p49 = por %p47, %p48
    %s51 = sadd.s32 %s50, 1
    %p54 = scmp.eq.s32.totalorder %s16, 1
    %p55 = scmp.ne.s32.totalorder %s50, %s52
    %p56 = scmp.eq.s32.totalorder %s16, 0
    %p57 = por %p55, %p56
    %p58 = scmp.ne.s32.totalorder %s50, %s52
    %p59 = scmp.eq.s32.totalorder %s21, 1
    %p60 = por %p58, %p59
    %p61 = scmp.ne.s32.totalorder %s52, %s53
    %p62 = scmp.eq.s32.totalorder %s21, 0
    %p63 = por %p61, %p62
    %p64 = scmp.ne.s32.totalorder %s52, %s53
    %p65 = scmp.eq.s32.totalorder %s22, 1
    %p66 = por %p64, %p65
    %p68 = scmp.ne.s32.totalorder %s53, %s67
    %p69 = scmp.eq.s32.totalorder %s22, 0
    %p70 = por %p68, %p69
    %s72 = sadd.s32 %s71, 1
    %p75 = scmp.eq.s32.totalorder %s16, 1
    %p76 = scmp.ne.s32.totalorder %s71, %s73
    %p77 = scmp.eq.s32.totalorder %s16, 0
    %p78 = por %p76, %p77
    %p79 = scmp.ne.s32.totalorder %s71, %s73
    %p80 = scmp.eq.s32.totalorder %s21, 1
    %p81 = por %p79, %p80
    %p82 = scmp.ne.s32.totalorder %s73, %s74
    %p83 = scmp.eq.s32.totalorder %s21, 0
    %p84 = por %p82, %p83
    %p85 = scmp.ne.s32.totalorder %s73, %s74
    %p86 = scmp.eq.s32.totalorder %s22, 1
    %p87 = por %p85, %p86
    %p89 = scmp.ne.s32.totalorder %s74, %s88
    %p90 = scmp.eq.s32.totalorder %s22, 0
    %p91 = por %p89, %p90
    %s93 = sadd.s32 %s92, 1
    %p96 = scmp.eq.s32.totalorder %s16, 1
    %p97 = scmp.ne.s32.totalorder %s92, %s94
    %p98 = scmp.eq.s32.totalorder %s16, 0
    %p99 = por %p97, %p98
    %p100 = scmp.ne.s32.totalorder %s92, %s94
    %p101 = scmp.eq.s32.totalorder %s21, 1
    %p102 = por %p100, %p101
    %p103 = scmp.ne.s32.totalorder %s94, %s95
    %p104 = scmp.eq.s32.totalorder %s21, 0
    %p105 = por %p103, %p104
    %p106 = scmp.ne.s32.totalorder %s94, %s95
    %p107 = scmp.eq.s32.totalorder %s22, 1
    %p108 = por %p106, %p107
    %p110 = scmp.ne.s32.totalorder %s95, %s109
    %p111 = scmp.eq.s32.totalorder %s22, 0
    %p112 = por %p110, %p111
    %s114 = sadd.s32 %s113, 1
    %p117 = scmp.eq.s32.totalorder %s16, 1
    %p118 = scmp.ne.s32.totalorder %s113, %s115
    %p119 = scmp.eq.s32.totalorder %s16, 0
    %p120 = por %p118, %p119
    %p121 = scmp.ne.s32.totalorder %s113, %s115
    %p122 = scmp.eq.s32.totalorder %s21, 1
    %p123 = por %p121, %p122
    %p124 = scmp.ne.s32.totalorder %s115, %s116
    %p125 = scmp.eq.s32.totalorder %s21, 0
    %p126 = por %p124, %p125
    %p127 = scmp.ne.s32.totalorder %s115, %s116
    %p128 = scmp.eq.s32.totalorder %s22, 1
    %p129 = por %p127, %p128
    %p131 = scmp.ne.s32.totalorder %s116, %s130
    %p132 = scmp.eq.s32.totalorder %s22, 0
    %p133 = por %p131, %p132
    %s135 = sadd.s32 %s134, 1
    %p138 = scmp.eq.s32.totalorder %s16, 1
    %p139 = scmp.ne.s32.totalorder %s134, %s136
    %p140 = scmp.eq.s32.totalorder %s16, 0
    %p141 = por %p139, %p140
    %p142 = scmp.ne.s32.totalorder %s134, %s136
    %p143 = scmp.eq.s32.totalorder %s21, 1
    %p144 = por %p142, %p143
    %p145 = scmp.ne.s32.totalorder %s136, %s137
    %p146 = scmp.eq.s32.totalorder %s21, 0
    %p147 = por %p145, %p146
    %p148 = scmp.ne.s32.totalorder %s136, %s137
    %p149 = scmp.eq.s32.totalorder %s22, 1
    %p150 = por %p148, %p149
    %p152 = scmp.ne.s32.totalorder %s137, %s151
    %p153 = scmp.eq.s32.totalorder %s22, 0
    %p154 = por %p152, %p153
    %s156 = sadd.s32 %s155, 1
    %p159 = scmp.eq.s32.totalorder %s16, 1
    %p160 = scmp.ne.s32.totalorder %s155, %s157
    %p161 = scmp.eq.s32.totalorder %s16, 0
    %p162 = por %p160, %p161
    %p163 = scmp.ne.s32.totalorder %s155, %s157
    %p164 = scmp.eq.s32.totalorder %s21, 1
    %p165 = por %p163, %p164
    %p166 = scmp.ne.s32.totalorder %s157, %s158
    %p167 = scmp.eq.s32.totalorder %s21, 0
    %p168 = por %p166, %p167
    %p169 = scmp.ne.s32.totalorder %s157, %s158
    %p170 = scmp.eq.s32.totalorder %s22, 1
    %p171 = por %p169, %p170
    %p173 = scmp.ne.s32.totalorder %s158, %s172
    %p174 = scmp.eq.s32.totalorder %s22, 0
    %p175 = por %p173, %p174
    %s177 = sadd.s32 %s176, 1
    %p180 = scmp.eq.s32.totalorder %s16, 1
    %p181 = scmp.ne.s32.totalorder %s176, %s178
    %p182 = scmp.eq.s32.totalorder %s16, 0
    %p183 = por %p181, %p182
    %p184 = scmp.ne.s32.totalorder %s176, %s178
    %p185 = scmp.eq.s32.totalorder %s21, 1
    %p186 = por %p184, %p185
    %p187 = scmp.ne.s32.totalorder %s178, %s179
    %p188 = scmp.eq.s32.totalorder %s21, 0
    %p189 = por %p187, %p188
    %p190 = scmp.ne.s32.totalorder %s178, %s179
    %p191 = scmp.eq.s32.totalorder %s22, 1
    %p192 = por %p190, %p191
    %p194 = scmp.ne.s32.totalorder %s179, %s193
    %p195 = scmp.eq.s32.totalorder %s22, 0
    %p196 = por %p194, %p195
    %s197 = ssub.s32 %s16, %s23
    %p198 = scmp.eq.s32.totalorder %s197, 0
    %s200 = sadd.s32 %s199, 1
    %s201 = scalar_select %p198, %s199, %s200
    %p204 = pneg %p198
    %p205 = scmp.eq.s32.totalorder %s16, 1
    %p206 = por %p204, %p205
    %p207 = scmp.ne.s32.totalorder %s199, %s202
    %p208 = scmp.eq.s32.totalorder %s16, 0
    %p209 = por %p207, %p208
    %p210 = scmp.ne.s32.totalorder %s199, %s202
    %p211 = scmp.eq.s32.totalorder %s21, 1
    %p212 = por %p210, %p211
    %p213 = scmp.ne.s32.totalorder %s202, %s203
    %p214 = scmp.eq.s32.totalorder %s21, 0
    %p215 = por %p213, %p214
    %p216 = scmp.ne.s32.totalorder %s202, %s203
    %p217 = scmp.eq.s32.totalorder %s22, 1
    %p218 = por %p216, %p217
    %p220 = scmp.ne.s32.totalorder %s203, %s219
    %p221 = scmp.eq.s32.totalorder %s22, 0
    %p222 = por %p220, %p221
    %p223 = scmp.le.s32.totalorder 1, %s16
    %p224 = scmp.lt.s32.totalorder %s16, 3
    %p225 = pnand %p223, %p224
    %p226 = pneg %p225
    // Predicated region
    $region9: #{discriminator_wgan_forward.1} parent=5 // pred_check
      _
    $region10: #{discriminator_wgan_forward.1} parent=5 // pred_check_branch
      %228 = sbr.rel (%p225) target = $region12
    $region11: #{discriminator_wgan_forward.1} parent=5 // pred_region
      %s229 = ssub.s32 %s16, 1
      // Predicated region
      $region13: #{discriminator_wgan_forward.1} parent=11 // pred_check
        %p230 = pneg %p63
      $region14: #{discriminator_wgan_forward.1} parent=11 // pred_check_branch
        %232 = sbr.rel (%p230) target = $region16
      $region15: #{discriminator_wgan_forward.1} parent=11 // pred_region
        _
      $region16: #{discriminator_wgan_forward.1} parent=11 // pred_fallthru
        _
      // Predicated region
      $region17: #{discriminator_wgan_forward.1} parent=11 // pred_check
        %p233 = pneg %p84
      $region18: #{discriminator_wgan_forward.1} parent=11 // pred_check_branch
        %235 = sbr.rel (%p233) target = $region20
      $region19: #{discriminator_wgan_forward.1} parent=11 // pred_region
        _
      $region20: #{discriminator_wgan_forward.1} parent=11 // pred_fallthru
        _
      // Predicated region
      $region21: #{discriminator_wgan_forward.1} parent=11 // pred_check
        %p236 = pneg %p105
      $region22: #{discriminator_wgan_forward.1} parent=11 // pred_check_branch
        %238 = sbr.rel (%p236) target = $region24
      $region23: #{discriminator_wgan_forward.1} parent=11 // pred_region
        _
      $region24: #{discriminator_wgan_forward.1} parent=11 // pred_fallthru
        _
      // Predicated region
      $region25: #{discriminator_wgan_forward.1} parent=11 // pred_check
        %p239 = pneg %p126
      $region26: #{discriminator_wgan_forward.1} parent=11 // pred_check_branch
        %241 = sbr.rel (%p239) target = $region28
      $region27: #{discriminator_wgan_forward.1} parent=11 // pred_region
        _
      $region28: #{discriminator_wgan_forward.1} parent=11 // pred_fallthru
        _
      // Predicated region
      $region29: #{discriminator_wgan_forward.1} parent=11 // pred_check
        %p242 = pneg %p147
      $region30: #{discriminator_wgan_forward.1} parent=11 // pred_check_branch
        %244 = sbr.rel (%p242) target = $region32
      $region31: #{discriminator_wgan_forward.1} parent=11 // pred_region
        _
      $region32: #{discriminator_wgan_forward.1} parent=11 // pred_fallthru
        _
      // Predicated region
      $region33: #{discriminator_wgan_forward.1} parent=11 // pred_check
        %p245 = pneg %p168
      $region34: #{discriminator_wgan_forward.1} parent=11 // pred_check_branch
        %247 = sbr.rel (%p245) target = $region36
      $region35: #{discriminator_wgan_forward.1} parent=11 // pred_region
        _
      $region36: #{discriminator_wgan_forward.1} parent=11 // pred_fallthru
        _
      // Predicated region
      $region37: #{discriminator_wgan_forward.1} parent=11 // pred_check
        %p248 = pneg %p189
      $region38: #{discriminator_wgan_forward.1} parent=11 // pred_check_branch
        %250 = sbr.rel (%p248) target = $region40
      $region39: #{discriminator_wgan_forward.1} parent=11 // pred_region
        _
      $region40: #{discriminator_wgan_forward.1} parent=11 // pred_fallthru
        _
    $region12: #{discriminator_wgan_forward.1} parent=5 // pred_fallthru
      _
    %p251 = scmp.lt.s32.totalorder %s16, 2
    // Predicated region
    $region41: #{discriminator_wgan_forward.1} parent=5 // pred_check
      %p252 = pneg %p251
    $region42: #{discriminator_wgan_forward.1} parent=5 // pred_check_branch
      %254 = sbr.rel (%p252) target = $region44
    $region43: #{discriminator_wgan_forward.1} parent=5 // pred_region
      // Predicated region
      $region45: #{discriminator_wgan_forward.1} parent=43 // pred_check
        %p255 = pneg %p36
      $region46: #{discriminator_wgan_forward.1} parent=43 // pred_check_branch
        %257 = sbr.rel (%p255) target = $region48
      $region47: #{discriminator_wgan_forward.1} parent=43 // pred_region
        %p258 = scmp.lt.s32.totalorder %s16, 1
        %s259 = scalar_select %p258, %s16, 1
        %s260 = smul.addr %s259, 4
        %s261 = smul.addr %s260, 8
        %s262 = scalar_lea.vmem %s0, %s261
      $region48: #{discriminator_wgan_forward.1} parent=43 // pred_fallthru
        _
    $region44: #{discriminator_wgan_forward.1} parent=5 // pred_fallthru
      _
    %p263 = scmp.le.s32.totalorder 1, %s16
    %p264 = scmp.lt.s32.totalorder %s16, 3
    %p265 = pnand %p263, %p264
    %p266 = pneg %p265
    // Predicated region
    $region49: #{discriminator_wgan_forward.1} parent=5 // pred_check
      _
    $region50: #{discriminator_wgan_forward.1} parent=5 // pred_check_branch
      %268 = sbr.rel (%p265) target = $region52
    $region51: #{discriminator_wgan_forward.1} parent=5 // pred_region
      %s269 = ssub.s32 %s16, 1
      %p270 = scmp.lt.s32.totalorder %s21, 1
      %s271 = scalar_select %p270, %s21, 1
      %s272 = smul.addr %s271, 4
      %s273 = smul.addr %s272, 8
      %s274 = scalar_lea.vmem %s0, %s273
      %p275 = pneg %p42
      %p276 = pneg %p39
      %p277 = pneg %p63
      %p278 = pneg %p60
      %p279 = pneg %p84
      %p280 = pneg %p81
      %p281 = pneg %p105
      %p282 = pneg %p102
      %p283 = pneg %p126
      %p284 = pneg %p123
      %p285 = pneg %p147
      %p286 = pneg %p144
      %p287 = pneg %p168
      %p288 = pneg %p165
      %p289 = pneg %p189
      %p290 = pneg %p186
      %p291 = pneg %p215
      %p292 = pneg %p212
      %p293 = scmp.lt.s32.totalorder %s21, 1
      %s294 = scalar_select %p293, %s21, 1
      %s295 = scalar_lea.vmem %s8, %s294
      %p296 = scmp.lt.s32.totalorder %s21, 1
      %s297 = scalar_select %p296, %s21, 1
      %s298 = smul.addr %s297, 4
      %s299 = smul.addr %s298, 8
      %s300 = scalar_lea.vmem %s0, %s299
      %p301 = scmp.lt.s32.totalorder %s21, 1
      %s302 = scalar_select %p301, %s21, 1
      %s303 = scalar_lea.vmem %s8, %s302
      %v304 = vld [vmem:[%s1] sm:$0xf]
      %v305 = vld [vmem:[%s300] sm:$0xff]
      %v306 = vld [vmem:[%s300 + $0x8] sm:$0xff]
      %v307 = vld [vmem:[%s300 + $0x10] sm:$0xff]
      %v308 = vld [vmem:[%s300 + $0x18] sm:$0xff]
      %vm309 = vcmask 130048
      %v311 = vsel %vm309, %v304, 0
      %313 = vmatprep.subr.mxu0 0.0
      %314 = vmatpush1.msra.mxu0 0.0
      %315 = vmatprep.subr.mxu0 0.0
      %316 = vmatpush1.msra.mxu0 0.0
      %317 = vmatprep.subr.mxu0 0.0
      %318 = vmatpush1.msra.mxu0 0.0
      %319 = vmatprep.subr.mxu0 0.0
      %320 = vmatpush1.msra.mxu0 0.0
      %321 = vmatprep.subr.mxu0 0.0
      %322 = vmatpush1.msra.mxu0 0.0
      %323 = vmatprep.subr.mxu0 0.0
      %324 = vmatpush1.msra.mxu0 0.0
      %325 = vmatprep.subr.mxu0 0.0
      %326 = vmatpush1.msra.mxu0 0.0
      %327 = vmatprep.subr.mxu0 0.0
      %328 = vmatpush1.msra.mxu0 0.0
      %329 = vmatprep.subr.mxu0 0.0
      %330 = vmatpush1.msra.mxu0 0.0
      %331 = vmatprep.subr.mxu0 0.0
      %332 = vmatpush1.msra.mxu0 0.0
      %333 = vmatprep.subr.mxu0 0.0
      %334 = vmatpush1.msra.mxu0 0.0
      %335 = vmatprep.subr.mxu0 0.0
      %336 = vmatpush1.msra.mxu0 0.0
      %337 = vmatprep.subr.mxu0 0.0
      %338 = vmatpush1.msra.mxu0 0.0
      %339 = vmatprep.subr.mxu0 0.0
      %340 = vmatpush1.msra.mxu0 0.0
      %341 = vmatprep.subr.mxu0 %v308
      %342 = vmatpush1.msra.mxu0 %v307
      %343 = vmatprep.subr.mxu0 %v306
      %344 = vmatpush1.msra.mxu0 %v305
      %345 = vmatprep.subr.mxu0 0.0
      %346 = vmatpush2.msra.mxu0 0.0
      %347 = vmatprep.subr.mxu0 0.0
      %348 = vmatpush2.msra.mxu0 0.0
      %349 = vmatprep.subr.mxu0 0.0
      %350 = vmatpush2.msra.mxu0 0.0
      %351 = vmatprep.subr.mxu0 0.0
      %352 = vmatpush2.msra.mxu0 0.0
      %353 = vmatprep.subr.mxu0 0.0
      %354 = vmatpush2.msra.mxu0 0.0
      %355 = vmatprep.subr.mxu0 0.0
      %356 = vmatpush2.msra.mxu0 0.0
      %357 = vmatprep.subr.mxu0 0.0
      %358 = vmatpush2.msra.mxu0 0.0
      %359 = vmatprep.subr.mxu0 0.0
      %360 = vmatpush2.msra.mxu0 0.0
      %361 = vmatprep.subr.mxu0 0.0
      %362 = vmatpush2.msra.mxu0 0.0
      %363 = vmatprep.subr.mxu0 0.0
      %364 = vmatpush2.msra.mxu0 0.0
      %365 = vmatprep.subr.mxu0 0.0
      %366 = vmatpush2.msra.mxu0 0.0
      %367 = vmatprep.subr.mxu0 0.0
      %368 = vmatpush2.msra.mxu0 0.0
      %369 = vmatprep.subr.mxu0 0.0
      %370 = vmatpush2.msra.mxu0 0.0
      %371 = vmatprep.subr.mxu0 0.0
      %372 = vmatpush2.msra.mxu0 0.0
      %373 = vmatprep.subr.mxu0 0.0
      %374 = vmatpush2.msra.mxu0 0.0
      %375 = vmatprep.subr.mxu0 0.0
      %376 = vmatpush2.msra.mxu0 0.0
      %377 = vmatprep.mubr.f32.mxu0 0.0
      %378 = vmatmul.mubr.f32.gmra.mxu0 %v311
      %v379 = vpop.f32.mrf.mxu0
      %v380 = vadd.f32 0.0, %v379
      %v381 = vpop.f32.mrf.mxu0
      %v382 = vadd.f32 0.0, %v381
      %383 = vdwg.mxu0
      %vm384 = vcmp.ge.f32.partialorder %v380, 0.0
      %vm385 = vcmp.ge.f32.partialorder %v382, 0.0
      %v386 = vmul.f32 %v380, 0.2
      %v387 = vmul.f32 %v382, 0.2
      %v388 = vsel %vm384, %v380, %v386
      %v389 = vsel %vm385, %v382, %v387
      %v390 = vld [vmem:[%s3] sm:$0xff]
      %v391 = vld [vmem:[%s3 + $0x8] sm:$0xff]
      %v392 = vld [vmem:[%s3 + $0x10] sm:$0xff]
      %v393 = vld [vmem:[%s3 + $0x18] sm:$0xff]
      %v394 = vld [vmem:[%s3 + $0x20] sm:$0xff]
      %v395 = vld [vmem:[%s3 + $0x28] sm:$0xff]
      %v396 = vld [vmem:[%s3 + $0x30] sm:$0xff]
      %v397 = vld [vmem:[%s3 + $0x38] sm:$0xff]
      %v398 = vld [vmem:[%s3 + $0x40] sm:$0xff]
      %v399 = vld [vmem:[%s3 + $0x48] sm:$0xff]
      %v400 = vld [vmem:[%s3 + $0x50] sm:$0xff]
      %v401 = vld [vmem:[%s3 + $0x58] sm:$0xff]
      %v402 = vld [vmem:[%s3 + $0x60] sm:$0xff]
      %v403 = vld [vmem:[%s3 + $0x68] sm:$0xff]
      %v404 = vld [vmem:[%s3 + $0x70] sm:$0xff]
      %v405 = vld [vmem:[%s3 + $0x78] sm:$0xff]
      %v406 = vld [vmem:[%s3 + $0x80] sm:$0xff]
      %v407 = vld [vmem:[%s3 + $0x88] sm:$0xff]
      %v408 = vld [vmem:[%s3 + $0x90] sm:$0xff]
      %v409 = vld [vmem:[%s3 + $0x98] sm:$0xff]
      %v410 = vld [vmem:[%s3 + $0xa0] sm:$0xff]
      %v411 = vld [vmem:[%s3 + $0xa8] sm:$0xff]
      %v412 = vld [vmem:[%s3 + $0xb0] sm:$0xff]
      %v413 = vld [vmem:[%s3 + $0xb8] sm:$0xff]
      %v414 = vld [vmem:[%s3 + $0xc0] sm:$0xff]
      %v415 = vld [vmem:[%s3 + $0xc8] sm:$0xff]
      %vm416 = vcmask 654336
      %v418 = vsel %vm416, %v389, 0
      %420 = vmatprep.subr.mxu0 0.0
      %421 = vmatpush1.msra.mxu0 %v405
      %422 = vmatprep.subr.mxu0 0.0
      %423 = vmatpush1.msra.mxu0 %v404
      %424 = vmatprep.subr.mxu0 0.0
      %425 = vmatpush1.msra.mxu0 %v403
      %426 = vmatprep.subr.mxu0 0.0
      %427 = vmatpush1.msra.mxu0 %v402
      %428 = vmatprep.subr.mxu0 0.0
      %429 = vmatpush1.msra.mxu0 %v401
      %430 = vmatprep.subr.mxu0 0.0
      %431 = vmatpush1.msra.mxu0 %v400
      %432 = vmatprep.subr.mxu0 0.0
      %433 = vmatpush1.msra.mxu0 %v399
      %434 = vmatprep.subr.mxu0 0.0
      %435 = vmatpush1.msra.mxu0 %v398
      %436 = vmatprep.subr.mxu0 0.0
      %437 = vmatpush1.msra.mxu0 %v397
      %438 = vmatprep.subr.mxu0 0.0
      %439 = vmatpush1.msra.mxu0 %v396
      %440 = vmatprep.subr.mxu0 0.0
      %441 = vmatpush1.msra.mxu0 %v395
      %442 = vmatprep.subr.mxu0 0.0
      %443 = vmatpush1.msra.mxu0 %v394
      %444 = vmatprep.subr.mxu0 0.0
      %445 = vmatpush1.msra.mxu0 %v393
      %446 = vmatprep.subr.mxu0 0.0
      %447 = vmatpush1.msra.mxu0 %v392
      %448 = vmatprep.subr.mxu0 0.0
      %449 = vmatpush1.msra.mxu0 %v391
      %450 = vmatprep.subr.mxu0 0.0
      %451 = vmatpush1.msra.mxu0 %v390
      %452 = vmatprep.subr.mxu0 0.0
      %453 = vmatpush2.msra.mxu0 0.0
      %454 = vmatprep.subr.mxu0 0.0
      %455 = vmatpush2.msra.mxu0 0.0
      %456 = vmatprep.subr.mxu0 0.0
      %457 = vmatpush2.msra.mxu0 0.0
      %458 = vmatprep.subr.mxu0 0.0
      %459 = vmatpush2.msra.mxu0 0.0
      %460 = vmatprep.subr.mxu0 0.0
      %461 = vmatpush2.msra.mxu0 0.0
      %462 = vmatprep.subr.mxu0 0.0
      %463 = vmatpush2.msra.mxu0 0.0
      %464 = vmatprep.subr.mxu0 0.0
      %465 = vmatpush2.msra.mxu0 %v415
      %466 = vmatprep.subr.mxu0 0.0
      %467 = vmatpush2.msra.mxu0 %v414
      %468 = vmatprep.subr.mxu0 0.0
      %469 = vmatpush2.msra.mxu0 %v413
      %470 = vmatprep.subr.mxu0 0.0
      %471 = vmatpush2.msra.mxu0 %v412
      %472 = vmatprep.subr.mxu0 0.0
      %473 = vmatpush2.msra.mxu0 %v411
      %474 = vmatprep.subr.mxu0 0.0
      %475 = vmatpush2.msra.mxu0 %v410
      %476 = vmatprep.subr.mxu0 0.0
      %477 = vmatpush2.msra.mxu0 %v409
      %478 = vmatprep.subr.mxu0 0.0
      %479 = vmatpush2.msra.mxu0 %v408
      %480 = vmatprep.subr.mxu0 0.0
      %481 = vmatpush2.msra.mxu0 %v407
      %482 = vmatprep.subr.mxu0 0.0
      %483 = vmatpush2.msra.mxu0 %v406
      %484 = vmatprep.mubr.f32.mxu0 %v418
      %485 = vmatmul.mubr.f32.gmra.mxu0 %v388
      %v486 = vpop.f32.mrf.mxu0
      %v487 = vadd.f32 0.0, %v486
      %v488 = vpop.f32.mrf.mxu0
      %489 = vdwg.mxu0
      %v490 = vld [vmem:[%s2] sm:$0xff]
      %s491 = scalar_lea.vmem %s3, 208
      %v492 = vld [vmem:[%s491] sm:$0xff]
      %v493 = vld [vmem:[%s491 + $0x8] sm:$0xff]
      %v494 = vld [vmem:[%s491 + $0x10] sm:$0xff]
      %v495 = vld [vmem:[%s491 + $0x18] sm:$0xff]
      %v496 = vld [vmem:[%s491 + $0x20] sm:$0xff]
      %v497 = vld [vmem:[%s491 + $0x28] sm:$0xff]
      %v498 = vld [vmem:[%s491 + $0x30] sm:$0xff]
      %v499 = vld [vmem:[%s491 + $0x38] sm:$0xff]
      %v500 = vld [vmem:[%s491 + $0x40] sm:$0xff]
      %v501 = vld [vmem:[%s491 + $0x48] sm:$0xff]
      %v502 = vld [vmem:[%s491 + $0x50] sm:$0xff]
      %v503 = vld [vmem:[%s491 + $0x58] sm:$0xff]
      %v504 = vld [vmem:[%s491 + $0x60] sm:$0xff]
      %v505 = vld [vmem:[%s491 + $0x68] sm:$0xff]
      %v506 = vld [vmem:[%s491 + $0x70] sm:$0xff]
      %v507 = vld [vmem:[%s491 + $0x78] sm:$0xff]
      %v508 = vld [vmem:[%s491 + $0x80] sm:$0xff]
      %v509 = vld [vmem:[%s491 + $0x88] sm:$0xff]
      %v510 = vld [vmem:[%s491 + $0x90] sm:$0xff]
      %v511 = vld [vmem:[%s491 + $0x98] sm:$0xff]
      %v512 = vld [vmem:[%s491 + $0xa0] sm:$0xff]
      %v513 = vld [vmem:[%s491 + $0xa8] sm:$0xff]
      %v514 = vld [vmem:[%s491 + $0xb0] sm:$0xff]
      %v515 = vld [vmem:[%s491 + $0xb8] sm:$0xff]
      %v516 = vld [vmem:[%s491 + $0xc0] sm:$0xff]
      %v517 = vld [vmem:[%s491 + $0xc8] sm:$0xff]
      %518 = vmatprep.subr.mxu0 0.0
      %519 = vmatpush1.msra.mxu0 %v507
      %520 = vmatprep.subr.mxu0 0.0
      %521 = vmatpush1.msra.mxu0 %v506
      %522 = vmatprep.subr.mxu0 0.0
      %523 = vmatpush1.msra.mxu0 %v505
      %524 = vmatprep.subr.mxu0 0.0
      %525 = vmatpush1.msra.mxu0 %v504
      %526 = vmatprep.subr.mxu0 0.0
      %527 = vmatpush1.msra.mxu0 %v503
      %528 = vmatprep.subr.mxu0 0.0
      %529 = vmatpush1.msra.mxu0 %v502
      %530 = vmatprep.subr.mxu0 0.0
      %531 = vmatpush1.msra.mxu0 %v501
      %532 = vmatprep.subr.mxu0 0.0
      %533 = vmatpush1.msra.mxu0 %v500
      %534 = vmatprep.subr.mxu0 0.0
      %535 = vmatpush1.msra.mxu0 %v499
      %536 = vmatprep.subr.mxu0 0.0
      %537 = vmatpush1.msra.mxu0 %v498
      %538 = vmatprep.subr.mxu0 0.0
      %539 = vmatpush1.msra.mxu0 %v497
      %540 = vmatprep.subr.mxu0 0.0
      %541 = vmatpush1.msra.mxu0 %v496
      %542 = vmatprep.subr.mxu0 0.0
      %543 = vmatpush1.msra.mxu0 %v495
      %544 = vmatprep.subr.mxu0 0.0
      %545 = vmatpush1.msra.mxu0 %v494
      %546 = vmatprep.subr.mxu0 0.0
      %547 = vmatpush1.msra.mxu0 %v493
      %548 = vmatprep.subr.mxu0 0.0
      %549 = vmatpush1.msra.mxu0 %v492
      %550 = vmatprep.subr.mxu0 0.0
      %551 = vmatpush2.msra.mxu0 0.0
      %552 = vmatprep.subr.mxu0 0.0
      %553 = vmatpush2.msra.mxu0 0.0
      %554 = vmatprep.subr.mxu0 0.0
      %555 = vmatpush2.msra.mxu0 0.0
      %556 = vmatprep.subr.mxu0 0.0
      %557 = vmatpush2.msra.mxu0 0.0
      %558 = vmatprep.subr.mxu0 0.0
      %559 = vmatpush2.msra.mxu0 0.0
      %560 = vmatprep.subr.mxu0 0.0
      %561 = vmatpush2.msra.mxu0 0.0
      %562 = vmatprep.subr.mxu0 0.0
      %563 = vmatpush2.msra.mxu0 %v517
      %564 = vmatprep.subr.mxu0 0.0
      %565 = vmatpush2.msra.mxu0 %v516
      %566 = vmatprep.subr.mxu0 0.0
      %567 = vmatpush2.msra.mxu0 %v515
      %568 = vmatprep.subr.mxu0 0.0
      %569 = vmatpush2.msra.mxu0 %v514
      %570 = vmatprep.subr.mxu0 0.0
      %571 = vmatpush2.msra.mxu0 %v513
      %572 = vmatprep.subr.mxu0 0.0
      %573 = vmatpush2.msra.mxu0 %v512
      %574 = vmatprep.subr.mxu0 0.0
      %575 = vmatpush2.msra.mxu0 %v511
      %576 = vmatprep.subr.mxu0 0.0
      %577 = vmatpush2.msra.mxu0 %v510
      %578 = vmatprep.subr.mxu0 0.0
      %579 = vmatpush2.msra.mxu0 %v509
      %580 = vmatprep.subr.mxu0 0.0
      %581 = vmatpush2.msra.mxu0 %v508
      %582 = vmatprep.mubr.f32.mxu0 %v418
      %583 = vmatmul.mubr.f32.gmra.mxu0 %v388
      %v584 = vpop.f32.mrf.mxu0
      %v585 = vadd.f32 0.0, %v584
      %v586 = vpop.f32.mrf.mxu0
      %587 = vdwg.mxu0
      %s588 = scalar_lea.vmem %s2, 8
      %v589 = vld [vmem:[%s588] sm:$0xff]
      %vm590 = vcmask 31744
      %v592 = vsel %vm590, %v589, 0
      %vm594 = vcmask 1043456
      %v596 = vsel %vm594, %v585, 0
      %598 = vmatprep.subr.mxu0 0.0
      %599 = vmatpush1.msra.mxu0 0.0
      %600 = vmatprep.subr.mxu0 0.0
      %601 = vmatpush1.msra.mxu0 0.0
      %602 = vmatprep.subr.mxu0 0.0
      %603 = vmatpush1.msra.mxu0 0.0
      %604 = vmatprep.subr.mxu0 0.0
      %605 = vmatpush1.msra.mxu0 0.0
      %606 = vmatprep.subr.mxu0 0.0
      %607 = vmatpush1.msra.mxu0 0.0
      %608 = vmatprep.subr.mxu0 0.0
      %609 = vmatpush1.msra.mxu0 0.0
      %610 = vmatprep.subr.mxu0 0.0
      %611 = vmatpush1.msra.mxu0 0.0
      %612 = vmatprep.subr.mxu0 0.0
      %613 = vmatpush1.msra.mxu0 0.0
      %614 = vmatprep.subr.mxu0 0.0
      %615 = vmatpush1.msra.mxu0 0.0
      %616 = vmatprep.subr.mxu0 0.0
      %617 = vmatpush1.msra.mxu0 0.0
      %618 = vmatprep.subr.mxu0 0.0
      %619 = vmatpush1.msra.mxu0 0.0
      %620 = vmatprep.subr.mxu0 0.0
      %621 = vmatpush1.msra.mxu0 0.0
      %622 = vmatprep.subr.mxu0 0.0
      %623 = vmatpush1.msra.mxu0 0.0
      %624 = vmatprep.subr.mxu0 0.0
      %625 = vmatpush1.msra.mxu0 0.0
      %626 = vmatprep.subr.mxu0 0.0
      %627 = vmatpush1.msra.mxu0 0.0
      %628 = vmatprep.subr.mxu0 0.0
      %629 = vmatpush1.msra.mxu0 %v596
      %630 = vmatprep.subr.mxu0 0.0
      %631 = vmatpush2.msra.mxu0 0.0
      %632 = vmatprep.subr.mxu0 0.0
      %633 = vmatpush2.msra.mxu0 0.0
      %634 = vmatprep.subr.mxu0 0.0
      %635 = vmatpush2.msra.mxu0 0.0
      %636 = vmatprep.subr.mxu0 0.0
      %637 = vmatpush2.msra.mxu0 0.0
      %638 = vmatprep.subr.mxu0 0.0
      %639 = vmatpush2.msra.mxu0 0.0
      %640 = vmatprep.subr.mxu0 0.0
      %641 = vmatpush2.msra.mxu0 0.0
      %642 = vmatprep.subr.mxu0 0.0
      %643 = vmatpush2.msra.mxu0 0.0
      %644 = vmatprep.subr.mxu0 0.0
      %645 = vmatpush2.msra.mxu0 0.0
      %646 = vmatprep.subr.mxu0 0.0
      %647 = vmatpush2.msra.mxu0 0.0
      %648 = vmatprep.subr.mxu0 0.0
      %649 = vmatpush2.msra.mxu0 0.0
      %650 = vmatprep.subr.mxu0 0.0
      %651 = vmatpush2.msra.mxu0 0.0
      %652 = vmatprep.subr.mxu0 0.0
      %653 = vmatpush2.msra.mxu0 0.0
      %654 = vmatprep.subr.mxu0 0.0
      %655 = vmatpush2.msra.mxu0 0.0
      %656 = vmatprep.subr.mxu0 0.0
      %657 = vmatpush2.msra.mxu0 0.0
      %658 = vmatprep.subr.mxu0 0.0
      %659 = vmatpush2.msra.mxu0 0.0
      %660 = vmatprep.subr.mxu0 0.0
      %661 = vmatpush2.msra.mxu0 0.0
      %662 = vmatprep.mubr.f32.mxu0 0.0
      %663 = vmatmul.mubr.f32.gmra.mxu0 %v592
      %v664 = vpop.f32.mrf.mxu0
      %v665 = vadd.f32 0.0, %v664
      %v666 = vpop.f32.mrf.mxu0
      %667 = vdwg.mxu0
      %v669 = vsel %vm590, %v490, 0
      %v672 = vsel %vm594, %v487, 0
      %674 = vmatprep.subr.mxu0 0.0
      %675 = vmatpush1.msra.mxu0 0.0
      %676 = vmatprep.subr.mxu0 0.0
      %677 = vmatpush1.msra.mxu0 0.0
      %678 = vmatprep.subr.mxu0 0.0
      %679 = vmatpush1.msra.mxu0 0.0
      %680 = vmatprep.subr.mxu0 0.0
      %681 = vmatpush1.msra.mxu0 0.0
      %682 = vmatprep.subr.mxu0 0.0
      %683 = vmatpush1.msra.mxu0 0.0
      %684 = vmatprep.subr.mxu0 0.0
      %685 = vmatpush1.msra.mxu0 0.0
      %686 = vmatprep.subr.mxu0 0.0
      %687 = vmatpush1.msra.mxu0 0.0
      %688 = vmatprep.subr.mxu0 0.0
      %689 = vmatpush1.msra.mxu0 0.0
      %690 = vmatprep.subr.mxu0 0.0
      %691 = vmatpush1.msra.mxu0 0.0
      %692 = vmatprep.subr.mxu0 0.0
      %693 = vmatpush1.msra.mxu0 0.0
      %694 = vmatprep.subr.mxu0 0.0
      %695 = vmatpush1.msra.mxu0 0.0
      %696 = vmatprep.subr.mxu0 0.0
      %697 = vmatpush1.msra.mxu0 0.0
      %698 = vmatprep.subr.mxu0 0.0
      %699 = vmatpush1.msra.mxu0 0.0
      %700 = vmatprep.subr.mxu0 0.0
      %701 = vmatpush1.msra.mxu0 0.0
      %702 = vmatprep.subr.mxu0 0.0
      %703 = vmatpush1.msra.mxu0 0.0
      %704 = vmatprep.subr.mxu0 0.0
      %705 = vmatpush1.msra.mxu0 %v672
      %706 = vmatprep.subr.mxu0 0.0
      %707 = vmatpush2.msra.mxu0 0.0
      %708 = vmatprep.subr.mxu0 0.0
      %709 = vmatpush2.msra.mxu0 0.0
      %710 = vmatprep.subr.mxu0 0.0
      %711 = vmatpush2.msra.mxu0 0.0
      %712 = vmatprep.subr.mxu0 0.0
      %713 = vmatpush2.msra.mxu0 0.0
      %714 = vmatprep.subr.mxu0 0.0
      %715 = vmatpush2.msra.mxu0 0.0
      %716 = vmatprep.subr.mxu0 0.0
      %717 = vmatpush2.msra.mxu0 0.0
      %718 = vmatprep.subr.mxu0 0.0
      %719 = vmatpush2.msra.mxu0 0.0
      %720 = vmatprep.subr.mxu0 0.0
      %721 = vmatpush2.msra.mxu0 0.0
      %722 = vmatprep.subr.mxu0 0.0
      %723 = vmatpush2.msra.mxu0 0.0
      %724 = vmatprep.subr.mxu0 0.0
      %725 = vmatpush2.msra.mxu0 0.0
      %726 = vmatprep.subr.mxu0 0.0
      %727 = vmatpush2.msra.mxu0 0.0
      %728 = vmatprep.subr.mxu0 0.0
      %729 = vmatpush2.msra.mxu0 0.0
      %730 = vmatprep.subr.mxu0 0.0
      %731 = vmatpush2.msra.mxu0 0.0
      %732 = vmatprep.subr.mxu0 0.0
      %733 = vmatpush2.msra.mxu0 0.0
      %734 = vmatprep.subr.mxu0 0.0
      %735 = vmatpush2.msra.mxu0 0.0
      %736 = vmatprep.subr.mxu0 0.0
      %737 = vmatpush2.msra.mxu0 0.0
      %738 = vmatprep.mubr.f32.mxu0 0.0
      %739 = vmatmul.mubr.f32.gmra.mxu0 %v669
      %v740 = vpop.f32.mrf.mxu0
      %v741 = vadd.f32 %v665, %v740
      %v742 = vpop.f32.mrf.mxu0
      %743 = vdwg.mxu0
      %s744 = scalar_lea.vmem %s3, 416
      %v745 = vld [vmem:[%s744] sm:$0xff]
      %v746 = vld [vmem:[%s744 + $0x8] sm:$0xff]
      %v747 = vld [vmem:[%s744 + $0x10] sm:$0xff]
      %v748 = vld [vmem:[%s744 + $0x18] sm:$0xff]
      %v749 = vld [vmem:[%s744 + $0x20] sm:$0xff]
      %v750 = vld [vmem:[%s744 + $0x28] sm:$0xff]
      %v751 = vld [vmem:[%s744 + $0x30] sm:$0xff]
      %v752 = vld [vmem:[%s744 + $0x38] sm:$0xff]
      %v753 = vld [vmem:[%s744 + $0x40] sm:$0xff]
      %v754 = vld [vmem:[%s744 + $0x48] sm:$0xff]
      %v755 = vld [vmem:[%s744 + $0x50] sm:$0xff]
      %v756 = vld [vmem:[%s744 + $0x58] sm:$0xff]
      %v757 = vld [vmem:[%s744 + $0x60] sm:$0xff]
      %v758 = vld [vmem:[%s744 + $0x68] sm:$0xff]
      %v759 = vld [vmem:[%s744 + $0x70] sm:$0xff]
      %v760 = vld [vmem:[%s744 + $0x78] sm:$0xff]
      %v761 = vld [vmem:[%s744 + $0x80] sm:$0xff]
      %v762 = vld [vmem:[%s744 + $0x88] sm:$0xff]
      %v763 = vld [vmem:[%s744 + $0x90] sm:$0xff]
      %v764 = vld [vmem:[%s744 + $0x98] sm:$0xff]
      %v765 = vld [vmem:[%s744 + $0xa0] sm:$0xff]
      %v766 = vld [vmem:[%s744 + $0xa8] sm:$0xff]
      %v767 = vld [vmem:[%s744 + $0xb0] sm:$0xff]
      %v768 = vld [vmem:[%s744 + $0xb8] sm:$0xff]
      %v769 = vld [vmem:[%s744 + $0xc0] sm:$0xff]
      %v770 = vld [vmem:[%s744 + $0xc8] sm:$0xff]
      %771 = vmatprep.subr.mxu0 0.0
      %772 = vmatpush1.msra.mxu0 %v760
      %773 = vmatprep.subr.mxu0 0.0
      %774 = vmatpush1.msra.mxu0 %v759
      %775 = vmatprep.subr.mxu0 0.0
      %776 = vmatpush1.msra.mxu0 %v758
      %777 = vmatprep.subr.mxu0 0.0
      %778 = vmatpush1.msra.mxu0 %v757
      %779 = vmatprep.subr.mxu0 0.0
      %780 = vmatpush1.msra.mxu0 %v756
      %781 = vmatprep.subr.mxu0 0.0
      %782 = vmatpush1.msra.mxu0 %v755
      %783 = vmatprep.subr.mxu0 0.0
      %784 = vmatpush1.msra.mxu0 %v754
      %785 = vmatprep.subr.mxu0 0.0
      %786 = vmatpush1.msra.mxu0 %v753
      %787 = vmatprep.subr.mxu0 0.0
      %788 = vmatpush1.msra.mxu0 %v752
      %789 = vmatprep.subr.mxu0 0.0
      %790 = vmatpush1.msra.mxu0 %v751
      %791 = vmatprep.subr.mxu0 0.0
      %792 = vmatpush1.msra.mxu0 %v750
      %793 = vmatprep.subr.mxu0 0.0
      %794 = vmatpush1.msra.mxu0 %v749
      %795 = vmatprep.subr.mxu0 0.0
      %796 = vmatpush1.msra.mxu0 %v748
      %797 = vmatprep.subr.mxu0 0.0
      %798 = vmatpush1.msra.mxu0 %v747
      %799 = vmatprep.subr.mxu0 0.0
      %800 = vmatpush1.msra.mxu0 %v746
      %801 = vmatprep.subr.mxu0 0.0
      %802 = vmatpush1.msra.mxu0 %v745
      %803 = vmatprep.subr.mxu0 0.0
      %804 = vmatpush2.msra.mxu0 0.0
      %805 = vmatprep.subr.mxu0 0.0
      %806 = vmatpush2.msra.mxu0 0.0
      %807 = vmatprep.subr.mxu0 0.0
      %808 = vmatpush2.msra.mxu0 0.0
      %809 = vmatprep.subr.mxu0 0.0
      %810 = vmatpush2.msra.mxu0 0.0
      %811 = vmatprep.subr.mxu0 0.0
      %812 = vmatpush2.msra.mxu0 0.0
      %813 = vmatprep.subr.mxu0 0.0
      %814 = vmatpush2.msra.mxu0 0.0
      %815 = vmatprep.subr.mxu0 0.0
      %816 = vmatpush2.msra.mxu0 %v770
      %817 = vmatprep.subr.mxu0 0.0
      %818 = vmatpush2.msra.mxu0 %v769
      %819 = vmatprep.subr.mxu0 0.0
      %820 = vmatpush2.msra.mxu0 %v768
      %821 = vmatprep.subr.mxu0 0.0
      %822 = vmatpush2.msra.mxu0 %v767
      %823 = vmatprep.subr.mxu0 0.0
      %824 = vmatpush2.msra.mxu0 %v766
      %825 = vmatprep.subr.mxu0 0.0
      %826 = vmatpush2.msra.mxu0 %v765
      %827 = vmatprep.subr.mxu0 0.0
      %828 = vmatpush2.msra.mxu0 %v764
      %829 = vmatprep.subr.mxu0 0.0
      %830 = vmatpush2.msra.mxu0 %v763
      %831 = vmatprep.subr.mxu0 0.0
      %832 = vmatpush2.msra.mxu0 %v762
      %833 = vmatprep.subr.mxu0 0.0
      %834 = vmatpush2.msra.mxu0 %v761
      %835 = vmatprep.mubr.f32.mxu0 %v418
      %836 = vmatmul.mubr.f32.gmra.mxu0 %v388
      %v837 = vpop.f32.mrf.mxu0
      %v838 = vadd.f32 0.0, %v837
      %v839 = vpop.f32.mrf.mxu0
      %840 = vdwg.mxu0
      %s841 = scalar_lea.vmem %s2, 16
      %v842 = vld [vmem:[%s841] sm:$0xff]
      %v844 = vsel %vm590, %v842, 0
      %v847 = vsel %vm594, %v838, 0
      %849 = vmatprep.subr.mxu0 0.0
      %850 = vmatpush1.msra.mxu0 0.0
      %851 = vmatprep.subr.mxu0 0.0
      %852 = vmatpush1.msra.mxu0 0.0
      %853 = vmatprep.subr.mxu0 0.0
      %854 = vmatpush1.msra.mxu0 0.0
      %855 = vmatprep.subr.mxu0 0.0
      %856 = vmatpush1.msra.mxu0 0.0
      %857 = vmatprep.subr.mxu0 0.0
      %858 = vmatpush1.msra.mxu0 0.0
      %859 = vmatprep.subr.mxu0 0.0
      %860 = vmatpush1.msra.mxu0 0.0
      %861 = vmatprep.subr.mxu0 0.0
      %862 = vmatpush1.msra.mxu0 0.0
      %863 = vmatprep.subr.mxu0 0.0
      %864 = vmatpush1.msra.mxu0 0.0
      %865 = vmatprep.subr.mxu0 0.0
      %866 = vmatpush1.msra.mxu0 0.0
      %867 = vmatprep.subr.mxu0 0.0
      %868 = vmatpush1.msra.mxu0 0.0
      %869 = vmatprep.subr.mxu0 0.0
      %870 = vmatpush1.msra.mxu0 0.0
      %871 = vmatprep.subr.mxu0 0.0
      %872 = vmatpush1.msra.mxu0 0.0
      %873 = vmatprep.subr.mxu0 0.0
      %874 = vmatpush1.msra.mxu0 0.0
      %875 = vmatprep.subr.mxu0 0.0
      %876 = vmatpush1.msra.mxu0 0.0
      %877 = vmatprep.subr.mxu0 0.0
      %878 = vmatpush1.msra.mxu0 0.0
      %879 = vmatprep.subr.mxu0 0.0
      %880 = vmatpush1.msra.mxu0 %v847
      %881 = vmatprep.subr.mxu0 0.0
      %882 = vmatpush2.msra.mxu0 0.0
      %883 = vmatprep.subr.mxu0 0.0
      %884 = vmatpush2.msra.mxu0 0.0
      %885 = vmatprep.subr.mxu0 0.0
      %886 = vmatpush2.msra.mxu0 0.0
      %887 = vmatprep.subr.mxu0 0.0
      %888 = vmatpush2.msra.mxu0 0.0
      %889 = vmatprep.subr.mxu0 0.0
      %890 = vmatpush2.msra.mxu0 0.0
      %891 = vmatprep.subr.mxu0 0.0
      %892 = vmatpush2.msra.mxu0 0.0
      %893 = vmatprep.subr.mxu0 0.0
      %894 = vmatpush2.msra.mxu0 0.0
      %895 = vmatprep.subr.mxu0 0.0
      %896 = vmatpush2.msra.mxu0 0.0
      %897 = vmatprep.subr.mxu0 0.0
      %898 = vmatpush2.msra.mxu0 0.0
      %899 = vmatprep.subr.mxu0 0.0
      %900 = vmatpush2.msra.mxu0 0.0
      %901 = vmatprep.subr.mxu0 0.0
      %902 = vmatpush2.msra.mxu0 0.0
      %903 = vmatprep.subr.mxu0 0.0
      %904 = vmatpush2.msra.mxu0 0.0
      %905 = vmatprep.subr.mxu0 0.0
      %906 = vmatpush2.msra.mxu0 0.0
      %907 = vmatprep.subr.mxu0 0.0
      %908 = vmatpush2.msra.mxu0 0.0
      %909 = vmatprep.subr.mxu0 0.0
      %910 = vmatpush2.msra.mxu0 0.0
      %911 = vmatprep.subr.mxu0 0.0
      %912 = vmatpush2.msra.mxu0 0.0
      %913 = vmatprep.mubr.f32.mxu0 0.0
      %914 = vmatmul.mubr.f32.gmra.mxu0 %v844
      %v915 = vpop.f32.mrf.mxu0
      %v916 = vadd.f32 0.0, %v915
      %v917 = vpop.f32.mrf.mxu0
      %918 = vdwg.mxu0
      %v919 = vadd.f32 %v741, %v916
      %s920 = scalar_lea.vmem %s3, 624
      %v921 = vld [vmem:[%s920] sm:$0xff]
      %v922 = vld [vmem:[%s920 + $0x8] sm:$0xff]
      %v923 = vld [vmem:[%s920 + $0x10] sm:$0xff]
      %v924 = vld [vmem:[%s920 + $0x18] sm:$0xff]
      %v925 = vld [vmem:[%s920 + $0x20] sm:$0xff]
      %v926 = vld [vmem:[%s920 + $0x28] sm:$0xff]
      %v927 = vld [vmem:[%s920 + $0x30] sm:$0xff]
      %v928 = vld [vmem:[%s920 + $0x38] sm:$0xff]
      %v929 = vld [vmem:[%s920 + $0x40] sm:$0xff]
      %v930 = vld [vmem:[%s920 + $0x48] sm:$0xff]
      %v931 = vld [vmem:[%s920 + $0x50] sm:$0xff]
      %v932 = vld [vmem:[%s920 + $0x58] sm:$0xff]
      %v933 = vld [vmem:[%s920 + $0x60] sm:$0xff]
      %v934 = vld [vmem:[%s920 + $0x68] sm:$0xff]
      %v935 = vld [vmem:[%s920 + $0x70] sm:$0xff]
      %v936 = vld [vmem:[%s920 + $0x78] sm:$0xff]
      %v937 = vld [vmem:[%s920 + $0x80] sm:$0xff]
      %v938 = vld [vmem:[%s920 + $0x88] sm:$0xff]
      %v939 = vld [vmem:[%s920 + $0x90] sm:$0xff]
      %v940 = vld [vmem:[%s920 + $0x98] sm:$0xff]
      %v941 = vld [vmem:[%s920 + $0xa0] sm:$0xff]
      %v942 = vld [vmem:[%s920 + $0xa8] sm:$0xff]
      %v943 = vld [vmem:[%s920 + $0xb0] sm:$0xff]
      %v944 = vld [vmem:[%s920 + $0xb8] sm:$0xff]
      %v945 = vld [vmem:[%s920 + $0xc0] sm:$0xff]
      %v946 = vld [vmem:[%s920 + $0xc8] sm:$0xff]
      %947 = vmatprep.subr.mxu0 0.0
      %948 = vmatpush1.msra.mxu0 %v936
      %949 = vmatprep.subr.mxu0 0.0
      %950 = vmatpush1.msra.mxu0 %v935
      %951 = vmatprep.subr.mxu0 0.0
      %952 = vmatpush1.msra.mxu0 %v934
      %953 = vmatprep.subr.mxu0 0.0
      %954 = vmatpush1.msra.mxu0 %v933
      %955 = vmatprep.subr.mxu0 0.0
      %956 = vmatpush1.msra.mxu0 %v932
      %957 = vmatprep.subr.mxu0 0.0
      %958 = vmatpush1.msra.mxu0 %v931
      %959 = vmatprep.subr.mxu0 0.0
      %960 = vmatpush1.msra.mxu0 %v930
      %961 = vmatprep.subr.mxu0 0.0
      %962 = vmatpush1.msra.mxu0 %v929
      %963 = vmatprep.subr.mxu0 0.0
      %964 = vmatpush1.msra.mxu0 %v928
      %965 = vmatprep.subr.mxu0 0.0
      %966 = vmatpush1.msra.mxu0 %v927
      %967 = vmatprep.subr.mxu0 0.0
      %968 = vmatpush1.msra.mxu0 %v926
      %969 = vmatprep.subr.mxu0 0.0
      %970 = vmatpush1.msra.mxu0 %v925
      %971 = vmatprep.subr.mxu0 0.0
      %972 = vmatpush1.msra.mxu0 %v924
      %973 = vmatprep.subr.mxu0 0.0
      %974 = vmatpush1.msra.mxu0 %v923
      %975 = vmatprep.subr.mxu0 0.0
      %976 = vmatpush1.msra.mxu0 %v922
      %977 = vmatprep.subr.mxu0 0.0
      %978 = vmatpush1.msra.mxu0 %v921
      %979 = vmatprep.subr.mxu0 0.0
      %980 = vmatpush2.msra.mxu0 0.0
      %981 = vmatprep.subr.mxu0 0.0
      %982 = vmatpush2.msra.mxu0 0.0
      %983 = vmatprep.subr.mxu0 0.0
      %984 = vmatpush2.msra.mxu0 0.0
      %985 = vmatprep.subr.mxu0 0.0
      %986 = vmatpush2.msra.mxu0 0.0
      %987 = vmatprep.subr.mxu0 0.0
      %988 = vmatpush2.msra.mxu0 0.0
      %989 = vmatprep.subr.mxu0 0.0
      %990 = vmatpush2.msra.mxu0 0.0
      %991 = vmatprep.subr.mxu0 0.0
      %992 = vmatpush2.msra.mxu0 %v946
      %993 = vmatprep.subr.mxu0 0.0
      %994 = vmatpush2.msra.mxu0 %v945
      %995 = vmatprep.subr.mxu0 0.0
      %996 = vmatpush2.msra.mxu0 %v944
      %997 = vmatprep.subr.mxu0 0.0
      %998 = vmatpush2.msra.mxu0 %v943
      %999 = vmatprep.subr.mxu0 0.0
      %1000 = vmatpush2.msra.mxu0 %v942
      %1001 = vmatprep.subr.mxu0 0.0
      %1002 = vmatpush2.msra.mxu0 %v941
      %1003 = vmatprep.subr.mxu0 0.0
      %1004 = vmatpush2.msra.mxu0 %v940
      %1005 = vmatprep.subr.mxu0 0.0
      %1006 = vmatpush2.msra.mxu0 %v939
      %1007 = vmatprep.subr.mxu0 0.0
      %1008 = vmatpush2.msra.mxu0 %v938
      %1009 = vmatprep.subr.mxu0 0.0
      %1010 = vmatpush2.msra.mxu0 %v937
      %1011 = vmatprep.mubr.f32.mxu0 %v418
      %1012 = vmatmul.mubr.f32.gmra.mxu0 %v388
      %v1013 = vpop.f32.mrf.mxu0
      %v1014 = vadd.f32 0.0, %v1013
      %v1015 = vpop.f32.mrf.mxu0
      %1016 = vdwg.mxu0
      %s1017 = scalar_lea.vmem %s2, 24
      %v1018 = vld [vmem:[%s1017] sm:$0xff]
      %v1020 = vsel %vm590, %v1018, 0
      %v1023 = vsel %vm594, %v1014, 0
      %1025 = vmatprep.subr.mxu0 0.0
      %1026 = vmatpush1.msra.mxu0 0.0
      %1027 = vmatprep.subr.mxu0 0.0
      %1028 = vmatpush1.msra.mxu0 0.0
      %1029 = vmatprep.subr.mxu0 0.0
      %1030 = vmatpush1.msra.mxu0 0.0
      %1031 = vmatprep.subr.mxu0 0.0
      %1032 = vmatpush1.msra.mxu0 0.0
      %1033 = vmatprep.subr.mxu0 0.0
      %1034 = vmatpush1.msra.mxu0 0.0
      %1035 = vmatprep.subr.mxu0 0.0
      %1036 = vmatpush1.msra.mxu0 0.0
      %1037 = vmatprep.subr.mxu0 0.0
      %1038 = vmatpush1.msra.mxu0 0.0
      %1039 = vmatprep.subr.mxu0 0.0
      %1040 = vmatpush1.msra.mxu0 0.0
      %1041 = vmatprep.subr.mxu0 0.0
      %1042 = vmatpush1.msra.mxu0 0.0
      %1043 = vmatprep.subr.mxu0 0.0
      %1044 = vmatpush1.msra.mxu0 0.0
      %1045 = vmatprep.subr.mxu0 0.0
      %1046 = vmatpush1.msra.mxu0 0.0
      %1047 = vmatprep.subr.mxu0 0.0
      %1048 = vmatpush1.msra.mxu0 0.0
      %1049 = vmatprep.subr.mxu0 0.0
      %1050 = vmatpush1.msra.mxu0 0.0
      %1051 = vmatprep.subr.mxu0 0.0
      %1052 = vmatpush1.msra.mxu0 0.0
      %1053 = vmatprep.subr.mxu0 0.0
      %1054 = vmatpush1.msra.mxu0 0.0
      %1055 = vmatprep.subr.mxu0 0.0
      %1056 = vmatpush1.msra.mxu0 %v1023
      %1057 = vmatprep.subr.mxu0 0.0
      %1058 = vmatpush2.msra.mxu0 0.0
      %1059 = vmatprep.subr.mxu0 0.0
      %1060 = vmatpush2.msra.mxu0 0.0
      %1061 = vmatprep.subr.mxu0 0.0
      %1062 = vmatpush2.msra.mxu0 0.0
      %1063 = vmatprep.subr.mxu0 0.0
      %1064 = vmatpush2.msra.mxu0 0.0
      %1065 = vmatprep.subr.mxu0 0.0
      %1066 = vmatpush2.msra.mxu0 0.0
      %1067 = vmatprep.subr.mxu0 0.0
      %1068 = vmatpush2.msra.mxu0 0.0
      %1069 = vmatprep.subr.mxu0 0.0
      %1070 = vmatpush2.msra.mxu0 0.0
      %1071 = vmatprep.subr.mxu0 0.0
      %1072 = vmatpush2.msra.mxu0 0.0
      %1073 = vmatprep.subr.mxu0 0.0
      %1074 = vmatpush2.msra.mxu0 0.0
      %1075 = vmatprep.subr.mxu0 0.0
      %1076 = vmatpush2.msra.mxu0 0.0
      %1077 = vmatprep.subr.mxu0 0.0
      %1078 = vmatpush2.msra.mxu0 0.0
      %1079 = vmatprep.subr.mxu0 0.0
      %1080 = vmatpush2.msra.mxu0 0.0
      %1081 = vmatprep.subr.mxu0 0.0
      %1082 = vmatpush2.msra.mxu0 0.0
      %1083 = vmatprep.subr.mxu0 0.0
      %1084 = vmatpush2.msra.mxu0 0.0
      %1085 = vmatprep.subr.mxu0 0.0
      %1086 = vmatpush2.msra.mxu0 0.0
      %1087 = vmatprep.subr.mxu0 0.0
      %1088 = vmatpush2.msra.mxu0 0.0
      %1089 = vmatprep.mubr.f32.mxu0 0.0
      %1090 = vmatmul.mubr.f32.gmra.mxu0 %v1020
      %v1091 = vpop.f32.mrf.mxu0
      %v1092 = vadd.f32 0.0, %v1091
      %v1093 = vpop.f32.mrf.mxu0
      %1094 = vdwg.mxu0
      %v1095 = vadd.f32 %v919, %v1092
      %s1096 = scalar_lea.vmem %s3, 832
      %v1097 = vld [vmem:[%s1096] sm:$0xff]
      %v1098 = vld [vmem:[%s1096 + $0x8] sm:$0xff]
      %v1099 = vld [vmem:[%s1096 + $0x10] sm:$0xff]
      %v1100 = vld [vmem:[%s1096 + $0x18] sm:$0xff]
      %v1101 = vld [vmem:[%s1096 + $0x20] sm:$0xff]
      %v1102 = vld [vmem:[%s1096 + $0x28] sm:$0xff]
      %v1103 = vld [vmem:[%s1096 + $0x30] sm:$0xff]
      %v1104 = vld [vmem:[%s1096 + $0x38] sm:$0xff]
      %v1105 = vld [vmem:[%s1096 + $0x40] sm:$0xff]
      %v1106 = vld [vmem:[%s1096 + $0x48] sm:$0xff]
      %v1107 = vld [vmem:[%s1096 + $0x50] sm:$0xff]
      %v1108 = vld [vmem:[%s1096 + $0x58] sm:$0xff]
      %v1109 = vld [vmem:[%s1096 + $0x60] sm:$0xff]
      %v1110 = vld [vmem:[%s1096 + $0x68] sm:$0xff]
      %v1111 = vld [vmem:[%s1096 + $0x70] sm:$0xff]
      %v1112 = vld [vmem:[%s1096 + $0x78] sm:$0xff]
      %v1113 = vld [vmem:[%s1096 + $0x80] sm:$0xff]
      %v1114 = vld [vmem:[%s1096 + $0x88] sm:$0xff]
      %v1115 = vld [vmem:[%s1096 + $0x90] sm:$0xff]
      %v1116 = vld [vmem:[%s1096 + $0x98] sm:$0xff]
      %v1117 = vld [vmem:[%s1096 + $0xa0] sm:$0xff]
      %v1118 = vld [vmem:[%s1096 + $0xa8] sm:$0xff]
      %v1119 = vld [vmem:[%s1096 + $0xb0] sm:$0xff]
      %v1120 = vld [vmem:[%s1096 + $0xb8] sm:$0xff]
      %v1121 = vld [vmem:[%s1096 + $0xc0] sm:$0xff]
      %v1122 = vld [vmem:[%s1096 + $0xc8] sm:$0xff]
      %1123 = vmatprep.subr.mxu0 0.0
      %1124 = vmatpush1.msra.mxu0 %v1112
      %1125 = vmatprep.subr.mxu0 0.0
      %1126 = vmatpush1.msra.mxu0 %v1111
      %1127 = vmatprep.subr.mxu0 0.0
      %1128 = vmatpush1.msra.mxu0 %v1110
      %1129 = vmatprep.subr.mxu0 0.0
      %1130 = vmatpush1.msra.mxu0 %v1109
      %1131 = vmatprep.subr.mxu0 0.0
      %1132 = vmatpush1.msra.mxu0 %v1108
      %1133 = vmatprep.subr.mxu0 0.0
      %1134 = vmatpush1.msra.mxu0 %v1107
      %1135 = vmatprep.subr.mxu0 0.0
      %1136 = vmatpush1.msra.mxu0 %v1106
      %1137 = vmatprep.subr.mxu0 0.0
      %1138 = vmatpush1.msra.mxu0 %v1105
      %1139 = vmatprep.subr.mxu0 0.0
      %1140 = vmatpush1.msra.mxu0 %v1104
      %1141 = vmatprep.subr.mxu0 0.0
      %1142 = vmatpush1.msra.mxu0 %v1103
      %1143 = vmatprep.subr.mxu0 0.0
      %1144 = vmatpush1.msra.mxu0 %v1102
      %1145 = vmatprep.subr.mxu0 0.0
      %1146 = vmatpush1.msra.mxu0 %v1101
      %1147 = vmatprep.subr.mxu0 0.0
      %1148 = vmatpush1.msra.mxu0 %v1100
      %1149 = vmatprep.subr.mxu0 0.0
      %1150 = vmatpush1.msra.mxu0 %v1099
      %1151 = vmatprep.subr.mxu0 0.0
      %1152 = vmatpush1.msra.mxu0 %v1098
      %1153 = vmatprep.subr.mxu0 0.0
      %1154 = vmatpush1.msra.mxu0 %v1097
      %1155 = vmatprep.subr.mxu0 0.0
      %1156 = vmatpush2.msra.mxu0 0.0
      %1157 = vmatprep.subr.mxu0 0.0
      %1158 = vmatpush2.msra.mxu0 0.0
      %1159 = vmatprep.subr.mxu0 0.0
      %1160 = vmatpush2.msra.mxu0 0.0
      %1161 = vmatprep.subr.mxu0 0.0
      %1162 = vmatpush2.msra.mxu0 0.0
      %1163 = vmatprep.subr.mxu0 0.0
      %1164 = vmatpush2.msra.mxu0 0.0
      %1165 = vmatprep.subr.mxu0 0.0
      %1166 = vmatpush2.msra.mxu0 0.0
      %1167 = vmatprep.subr.mxu0 0.0
      %1168 = vmatpush2.msra.mxu0 %v1122
      %1169 = vmatprep.subr.mxu0 0.0
      %1170 = vmatpush2.msra.mxu0 %v1121
      %1171 = vmatprep.subr.mxu0 0.0
      %1172 = vmatpush2.msra.mxu0 %v1120
      %1173 = vmatprep.subr.mxu0 0.0
      %1174 = vmatpush2.msra.mxu0 %v1119
      %1175 = vmatprep.subr.mxu0 0.0
      %1176 = vmatpush2.msra.mxu0 %v1118
      %1177 = vmatprep.subr.mxu0 0.0
      %1178 = vmatpush2.msra.mxu0 %v1117
      %1179 = vmatprep.subr.mxu0 0.0
      %1180 = vmatpush2.msra.mxu0 %v1116
      %1181 = vmatprep.subr.mxu0 0.0
      %1182 = vmatpush2.msra.mxu0 %v1115
      %1183 = vmatprep.subr.mxu0 0.0
      %1184 = vmatpush2.msra.mxu0 %v1114
      %1185 = vmatprep.subr.mxu0 0.0
      %1186 = vmatpush2.msra.mxu0 %v1113
      %1187 = vmatprep.mubr.f32.mxu0 %v418
      %1188 = vmatmul.mubr.f32.gmra.mxu0 %v388
      %v1189 = vpop.f32.mrf.mxu0
      %v1190 = vadd.f32 0.0, %v1189
      %v1191 = vpop.f32.mrf.mxu0
      %1192 = vdwg.mxu0
      %s1193 = scalar_lea.vmem %s2, 32
      %v1194 = vld [vmem:[%s1193] sm:$0xff]
      %v1196 = vsel %vm590, %v1194, 0
      %v1199 = vsel %vm594, %v1190, 0
      %1201 = vmatprep.subr.mxu0 0.0
      %1202 = vmatpush1.msra.mxu0 0.0
      %1203 = vmatprep.subr.mxu0 0.0
      %1204 = vmatpush1.msra.mxu0 0.0
      %1205 = vmatprep.subr.mxu0 0.0
      %1206 = vmatpush1.msra.mxu0 0.0
      %1207 = vmatprep.subr.mxu0 0.0
      %1208 = vmatpush1.msra.mxu0 0.0
      %1209 = vmatprep.subr.mxu0 0.0
      %1210 = vmatpush1.msra.mxu0 0.0
      %1211 = vmatprep.subr.mxu0 0.0
      %1212 = vmatpush1.msra.mxu0 0.0
      %1213 = vmatprep.subr.mxu0 0.0
      %1214 = vmatpush1.msra.mxu0 0.0
      %1215 = vmatprep.subr.mxu0 0.0
      %1216 = vmatpush1.msra.mxu0 0.0
      %1217 = vmatprep.subr.mxu0 0.0
      %1218 = vmatpush1.msra.mxu0 0.0
      %1219 = vmatprep.subr.mxu0 0.0
      %1220 = vmatpush1.msra.mxu0 0.0
      %1221 = vmatprep.subr.mxu0 0.0
      %1222 = vmatpush1.msra.mxu0 0.0
      %1223 = vmatprep.subr.mxu0 0.0
      %1224 = vmatpush1.msra.mxu0 0.0
      %1225 = vmatprep.subr.mxu0 0.0
      %1226 = vmatpush1.msra.mxu0 0.0
      %1227 = vmatprep.subr.mxu0 0.0
      %1228 = vmatpush1.msra.mxu0 0.0
      %1229 = vmatprep.subr.mxu0 0.0
      %1230 = vmatpush1.msra.mxu0 0.0
      %1231 = vmatprep.subr.mxu0 0.0
      %1232 = vmatpush1.msra.mxu0 %v1199
      %1233 = vmatprep.subr.mxu0 0.0
      %1234 = vmatpush2.msra.mxu0 0.0
      %1235 = vmatprep.subr.mxu0 0.0
      %1236 = vmatpush2.msra.mxu0 0.0
      %1237 = vmatprep.subr.mxu0 0.0
      %1238 = vmatpush2.msra.mxu0 0.0
      %1239 = vmatprep.subr.mxu0 0.0
      %1240 = vmatpush2.msra.mxu0 0.0
      %1241 = vmatprep.subr.mxu0 0.0
      %1242 = vmatpush2.msra.mxu0 0.0
      %1243 = vmatprep.subr.mxu0 0.0
      %1244 = vmatpush2.msra.mxu0 0.0
      %1245 = vmatprep.subr.mxu0 0.0
      %1246 = vmatpush2.msra.mxu0 0.0
      %1247 = vmatprep.subr.mxu0 0.0
      %1248 = vmatpush2.msra.mxu0 0.0
      %1249 = vmatprep.subr.mxu0 0.0
      %1250 = vmatpush2.msra.mxu0 0.0
      %1251 = vmatprep.subr.mxu0 0.0
      %1252 = vmatpush2.msra.mxu0 0.0
      %1253 = vmatprep.subr.mxu0 0.0
      %1254 = vmatpush2.msra.mxu0 0.0
      %1255 = vmatprep.subr.mxu0 0.0
      %1256 = vmatpush2.msra.mxu0 0.0
      %1257 = vmatprep.subr.mxu0 0.0
      %1258 = vmatpush2.msra.mxu0 0.0
      %1259 = vmatprep.subr.mxu0 0.0
      %1260 = vmatpush2.msra.mxu0 0.0
      %1261 = vmatprep.subr.mxu0 0.0
      %1262 = vmatpush2.msra.mxu0 0.0
      %1263 = vmatprep.subr.mxu0 0.0
      %1264 = vmatpush2.msra.mxu0 0.0
      %1265 = vmatprep.mubr.f32.mxu0 0.0
      %1266 = vmatmul.mubr.f32.gmra.mxu0 %v1196
      %v1267 = vpop.f32.mrf.mxu0
      %v1268 = vadd.f32 0.0, %v1267
      %v1269 = vpop.f32.mrf.mxu0
      %1270 = vdwg.mxu0
      %v1271 = vadd.f32 %v1095, %v1268
      %s1272 = scalar_lea.vmem %s3, 1040
      %v1273 = vld [vmem:[%s1272] sm:$0xff]
      %v1274 = vld [vmem:[%s1272 + $0x8] sm:$0xff]
      %v1275 = vld [vmem:[%s1272 + $0x10] sm:$0xff]
      %v1276 = vld [vmem:[%s1272 + $0x18] sm:$0xff]
      %v1277 = vld [vmem:[%s1272 + $0x20] sm:$0xff]
      %v1278 = vld [vmem:[%s1272 + $0x28] sm:$0xff]
      %v1279 = vld [vmem:[%s1272 + $0x30] sm:$0xff]
      %v1280 = vld [vmem:[%s1272 + $0x38] sm:$0xff]
      %v1281 = vld [vmem:[%s1272 + $0x40] sm:$0xff]
      %v1282 = vld [vmem:[%s1272 + $0x48] sm:$0xff]
      %v1283 = vld [vmem:[%s1272 + $0x50] sm:$0xff]
      %v1284 = vld [vmem:[%s1272 + $0x58] sm:$0xff]
      %v1285 = vld [vmem:[%s1272 + $0x60] sm:$0xff]
      %v1286 = vld [vmem:[%s1272 + $0x68] sm:$0xff]
      %v1287 = vld [vmem:[%s1272 + $0x70] sm:$0xff]
      %v1288 = vld [vmem:[%s1272 + $0x78] sm:$0xff]
      %v1289 = vld [vmem:[%s1272 + $0x80] sm:$0xff]
      %v1290 = vld [vmem:[%s1272 + $0x88] sm:$0xff]
      %v1291 = vld [vmem:[%s1272 + $0x90] sm:$0xff]
      %v1292 = vld [vmem:[%s1272 + $0x98] sm:$0xff]
      %v1293 = vld [vmem:[%s1272 + $0xa0] sm:$0xff]
      %v1294 = vld [vmem:[%s1272 + $0xa8] sm:$0xff]
      %v1295 = vld [vmem:[%s1272 + $0xb0] sm:$0xff]
      %v1296 = vld [vmem:[%s1272 + $0xb8] sm:$0xff]
      %v1297 = vld [vmem:[%s1272 + $0xc0] sm:$0xff]
      %v1298 = vld [vmem:[%s1272 + $0xc8] sm:$0xff]
      %1299 = vmatprep.subr.mxu0 0.0
      %1300 = vmatpush1.msra.mxu0 %v1288
      %1301 = vmatprep.subr.mxu0 0.0
      %1302 = vmatpush1.msra.mxu0 %v1287
      %1303 = vmatprep.subr.mxu0 0.0
      %1304 = vmatpush1.msra.mxu0 %v1286
      %1305 = vmatprep.subr.mxu0 0.0
      %1306 = vmatpush1.msra.mxu0 %v1285
      %1307 = vmatprep.subr.mxu0 0.0
      %1308 = vmatpush1.msra.mxu0 %v1284
      %1309 = vmatprep.subr.mxu0 0.0
      %1310 = vmatpush1.msra.mxu0 %v1283
      %1311 = vmatprep.subr.mxu0 0.0
      %1312 = vmatpush1.msra.mxu0 %v1282
      %1313 = vmatprep.subr.mxu0 0.0
      %1314 = vmatpush1.msra.mxu0 %v1281
      %1315 = vmatprep.subr.mxu0 0.0
      %1316 = vmatpush1.msra.mxu0 %v1280
      %1317 = vmatprep.subr.mxu0 0.0
      %1318 = vmatpush1.msra.mxu0 %v1279
      %1319 = vmatprep.subr.mxu0 0.0
      %1320 = vmatpush1.msra.mxu0 %v1278
      %1321 = vmatprep.subr.mxu0 0.0
      %1322 = vmatpush1.msra.mxu0 %v1277
      %1323 = vmatprep.subr.mxu0 0.0
      %1324 = vmatpush1.msra.mxu0 %v1276
      %1325 = vmatprep.subr.mxu0 0.0
      %1326 = vmatpush1.msra.mxu0 %v1275
      %1327 = vmatprep.subr.mxu0 0.0
      %1328 = vmatpush1.msra.mxu0 %v1274
      %1329 = vmatprep.subr.mxu0 0.0
      %1330 = vmatpush1.msra.mxu0 %v1273
      %1331 = vmatprep.subr.mxu0 0.0
      %1332 = vmatpush2.msra.mxu0 0.0
      %1333 = vmatprep.subr.mxu0 0.0
      %1334 = vmatpush2.msra.mxu0 0.0
      %1335 = vmatprep.subr.mxu0 0.0
      %1336 = vmatpush2.msra.mxu0 0.0
      %1337 = vmatprep.subr.mxu0 0.0
      %1338 = vmatpush2.msra.mxu0 0.0
      %1339 = vmatprep.subr.mxu0 0.0
      %1340 = vmatpush2.msra.mxu0 0.0
      %1341 = vmatprep.subr.mxu0 0.0
      %1342 = vmatpush2.msra.mxu0 0.0
      %1343 = vmatprep.subr.mxu0 0.0
      %1344 = vmatpush2.msra.mxu0 %v1298
      %1345 = vmatprep.subr.mxu0 0.0
      %1346 = vmatpush2.msra.mxu0 %v1297
      %1347 = vmatprep.subr.mxu0 0.0
      %1348 = vmatpush2.msra.mxu0 %v1296
      %1349 = vmatprep.subr.mxu0 0.0
      %1350 = vmatpush2.msra.mxu0 %v1295
      %1351 = vmatprep.subr.mxu0 0.0
      %1352 = vmatpush2.msra.mxu0 %v1294
      %1353 = vmatprep.subr.mxu0 0.0
      %1354 = vmatpush2.msra.mxu0 %v1293
      %1355 = vmatprep.subr.mxu0 0.0
      %1356 = vmatpush2.msra.mxu0 %v1292
      %1357 = vmatprep.subr.mxu0 0.0
      %1358 = vmatpush2.msra.mxu0 %v1291
      %1359 = vmatprep.subr.mxu0 0.0
      %1360 = vmatpush2.msra.mxu0 %v1290
      %1361 = vmatprep.subr.mxu0 0.0
      %1362 = vmatpush2.msra.mxu0 %v1289
      %1363 = vmatprep.mubr.f32.mxu0 %v418
      %1364 = vmatmul.mubr.f32.gmra.mxu0 %v388
      %v1365 = vpop.f32.mrf.mxu0
      %v1366 = vadd.f32 0.0, %v1365
      %v1367 = vpop.f32.mrf.mxu0
      %1368 = vdwg.mxu0
      %s1369 = scalar_lea.vmem %s2, 40
      %v1370 = vld [vmem:[%s1369] sm:$0xff]
      %v1372 = vsel %vm590, %v1370, 0
      %v1375 = vsel %vm594, %v1366, 0
      %1377 = vmatprep.subr.mxu0 0.0
      %1378 = vmatpush1.msra.mxu0 0.0
      %1379 = vmatprep.subr.mxu0 0.0
      %1380 = vmatpush1.msra.mxu0 0.0
      %1381 = vmatprep.subr.mxu0 0.0
      %1382 = vmatpush1.msra.mxu0 0.0
      %1383 = vmatprep.subr.mxu0 0.0
      %1384 = vmatpush1.msra.mxu0 0.0
      %1385 = vmatprep.subr.mxu0 0.0
      %1386 = vmatpush1.msra.mxu0 0.0
      %1387 = vmatprep.subr.mxu0 0.0
      %1388 = vmatpush1.msra.mxu0 0.0
      %1389 = vmatprep.subr.mxu0 0.0
      %1390 = vmatpush1.msra.mxu0 0.0
      %1391 = vmatprep.subr.mxu0 0.0
      %1392 = vmatpush1.msra.mxu0 0.0
      %1393 = vmatprep.subr.mxu0 0.0
      %1394 = vmatpush1.msra.mxu0 0.0
      %1395 = vmatprep.subr.mxu0 0.0
      %1396 = vmatpush1.msra.mxu0 0.0
      %1397 = vmatprep.subr.mxu0 0.0
      %1398 = vmatpush1.msra.mxu0 0.0
      %1399 = vmatprep.subr.mxu0 0.0
      %1400 = vmatpush1.msra.mxu0 0.0
      %1401 = vmatprep.subr.mxu0 0.0
      %1402 = vmatpush1.msra.mxu0 0.0
      %1403 = vmatprep.subr.mxu0 0.0
      %1404 = vmatpush1.msra.mxu0 0.0
      %1405 = vmatprep.subr.mxu0 0.0
      %1406 = vmatpush1.msra.mxu0 0.0
      %1407 = vmatprep.subr.mxu0 0.0
      %1408 = vmatpush1.msra.mxu0 %v1375
      %1409 = vmatprep.subr.mxu0 0.0
      %1410 = vmatpush2.msra.mxu0 0.0
      %1411 = vmatprep.subr.mxu0 0.0
      %1412 = vmatpush2.msra.mxu0 0.0
      %1413 = vmatprep.subr.mxu0 0.0
      %1414 = vmatpush2.msra.mxu0 0.0
      %1415 = vmatprep.subr.mxu0 0.0
      %1416 = vmatpush2.msra.mxu0 0.0
      %1417 = vmatprep.subr.mxu0 0.0
      %1418 = vmatpush2.msra.mxu0 0.0
      %1419 = vmatprep.subr.mxu0 0.0
      %1420 = vmatpush2.msra.mxu0 0.0
      %1421 = vmatprep.subr.mxu0 0.0
      %1422 = vmatpush2.msra.mxu0 0.0
      %1423 = vmatprep.subr.mxu0 0.0
      %1424 = vmatpush2.msra.mxu0 0.0
      %1425 = vmatprep.subr.mxu0 0.0
      %1426 = vmatpush2.msra.mxu0 0.0
      %1427 = vmatprep.subr.mxu0 0.0
      %1428 = vmatpush2.msra.mxu0 0.0
      %1429 = vmatprep.subr.mxu0 0.0
      %1430 = vmatpush2.msra.mxu0 0.0
      %1431 = vmatprep.subr.mxu0 0.0
      %1432 = vmatpush2.msra.mxu0 0.0
      %1433 = vmatprep.subr.mxu0 0.0
      %1434 = vmatpush2.msra.mxu0 0.0
      %1435 = vmatprep.subr.mxu0 0.0
      %1436 = vmatpush2.msra.mxu0 0.0
      %1437 = vmatprep.subr.mxu0 0.0
      %1438 = vmatpush2.msra.mxu0 0.0
      %1439 = vmatprep.subr.mxu0 0.0
      %1440 = vmatpush2.msra.mxu0 0.0
      %1441 = vmatprep.mubr.f32.mxu0 0.0
      %1442 = vmatmul.mubr.f32.gmra.mxu0 %v1372
      %v1443 = vpop.f32.mrf.mxu0
      %v1444 = vadd.f32 0.0, %v1443
      %v1445 = vpop.f32.mrf.mxu0
      %1446 = vdwg.mxu0
      %v1447 = vadd.f32 %v1271, %v1444
      %s1448 = scalar_lea.vmem %s3, 1248
      %v1449 = vld [vmem:[%s1448] sm:$0xff]
      %v1450 = vld [vmem:[%s1448 + $0x8] sm:$0xff]
      %v1451 = vld [vmem:[%s1448 + $0x10] sm:$0xff]
      %v1452 = vld [vmem:[%s1448 + $0x18] sm:$0xff]
      %v1453 = vld [vmem:[%s1448 + $0x20] sm:$0xff]
      %v1454 = vld [vmem:[%s1448 + $0x28] sm:$0xff]
      %v1455 = vld [vmem:[%s1448 + $0x30] sm:$0xff]
      %v1456 = vld [vmem:[%s1448 + $0x38] sm:$0xff]
      %v1457 = vld [vmem:[%s1448 + $0x40] sm:$0xff]
      %v1458 = vld [vmem:[%s1448 + $0x48] sm:$0xff]
      %v1459 = vld [vmem:[%s1448 + $0x50] sm:$0xff]
      %v1460 = vld [vmem:[%s1448 + $0x58] sm:$0xff]
      %v1461 = vld [vmem:[%s1448 + $0x60] sm:$0xff]
      %v1462 = vld [vmem:[%s1448 + $0x68] sm:$0xff]
      %v1463 = vld [vmem:[%s1448 + $0x70] sm:$0xff]
      %v1464 = vld [vmem:[%s1448 + $0x78] sm:$0xff]
      %v1465 = vld [vmem:[%s1448 + $0x80] sm:$0xff]
      %v1466 = vld [vmem:[%s1448 + $0x88] sm:$0xff]
      %v1467 = vld [vmem:[%s1448 + $0x90] sm:$0xff]
      %v1468 = vld [vmem:[%s1448 + $0x98] sm:$0xff]
      %v1469 = vld [vmem:[%s1448 + $0xa0] sm:$0xff]
      %v1470 = vld [vmem:[%s1448 + $0xa8] sm:$0xff]
      %v1471 = vld [vmem:[%s1448 + $0xb0] sm:$0xff]
      %v1472 = vld [vmem:[%s1448 + $0xb8] sm:$0xff]
      %v1473 = vld [vmem:[%s1448 + $0xc0] sm:$0xff]
      %v1474 = vld [vmem:[%s1448 + $0xc8] sm:$0xff]
      %1475 = vmatprep.subr.mxu0 0.0
      %1476 = vmatpush1.msra.mxu0 %v1464
      %1477 = vmatprep.subr.mxu0 0.0
      %1478 = vmatpush1.msra.mxu0 %v1463
      %1479 = vmatprep.subr.mxu0 0.0
      %1480 = vmatpush1.msra.mxu0 %v1462
      %1481 = vmatprep.subr.mxu0 0.0
      %1482 = vmatpush1.msra.mxu0 %v1461
      %1483 = vmatprep.subr.mxu0 0.0
      %1484 = vmatpush1.msra.mxu0 %v1460
      %1485 = vmatprep.subr.mxu0 0.0
      %1486 = vmatpush1.msra.mxu0 %v1459
      %1487 = vmatprep.subr.mxu0 0.0
      %1488 = vmatpush1.msra.mxu0 %v1458
      %1489 = vmatprep.subr.mxu0 0.0
      %1490 = vmatpush1.msra.mxu0 %v1457
      %1491 = vmatprep.subr.mxu0 0.0
      %1492 = vmatpush1.msra.mxu0 %v1456
      %1493 = vmatprep.subr.mxu0 0.0
      %1494 = vmatpush1.msra.mxu0 %v1455
      %1495 = vmatprep.subr.mxu0 0.0
      %1496 = vmatpush1.msra.mxu0 %v1454
      %1497 = vmatprep.subr.mxu0 0.0
      %1498 = vmatpush1.msra.mxu0 %v1453
      %1499 = vmatprep.subr.mxu0 0.0
      %1500 = vmatpush1.msra.mxu0 %v1452
      %1501 = vmatprep.subr.mxu0 0.0
      %1502 = vmatpush1.msra.mxu0 %v1451
      %1503 = vmatprep.subr.mxu0 0.0
      %1504 = vmatpush1.msra.mxu0 %v1450
      %1505 = vmatprep.subr.mxu0 0.0
      %1506 = vmatpush1.msra.mxu0 %v1449
      %1507 = vmatprep.subr.mxu0 0.0
      %1508 = vmatpush2.msra.mxu0 0.0
      %1509 = vmatprep.subr.mxu0 0.0
      %1510 = vmatpush2.msra.mxu0 0.0
      %1511 = vmatprep.subr.mxu0 0.0
      %1512 = vmatpush2.msra.mxu0 0.0
      %1513 = vmatprep.subr.mxu0 0.0
      %1514 = vmatpush2.msra.mxu0 0.0
      %1515 = vmatprep.subr.mxu0 0.0
      %1516 = vmatpush2.msra.mxu0 0.0
      %1517 = vmatprep.subr.mxu0 0.0
      %1518 = vmatpush2.msra.mxu0 0.0
      %1519 = vmatprep.subr.mxu0 0.0
      %1520 = vmatpush2.msra.mxu0 %v1474
      %1521 = vmatprep.subr.mxu0 0.0
      %1522 = vmatpush2.msra.mxu0 %v1473
      %1523 = vmatprep.subr.mxu0 0.0
      %1524 = vmatpush2.msra.mxu0 %v1472
      %1525 = vmatprep.subr.mxu0 0.0
      %1526 = vmatpush2.msra.mxu0 %v1471
      %1527 = vmatprep.subr.mxu0 0.0
      %1528 = vmatpush2.msra.mxu0 %v1470
      %1529 = vmatprep.subr.mxu0 0.0
      %1530 = vmatpush2.msra.mxu0 %v1469
      %1531 = vmatprep.subr.mxu0 0.0
      %1532 = vmatpush2.msra.mxu0 %v1468
      %1533 = vmatprep.subr.mxu0 0.0
      %1534 = vmatpush2.msra.mxu0 %v1467
      %1535 = vmatprep.subr.mxu0 0.0
      %1536 = vmatpush2.msra.mxu0 %v1466
      %1537 = vmatprep.subr.mxu0 0.0
      %1538 = vmatpush2.msra.mxu0 %v1465
      %1539 = vmatprep.mubr.f32.mxu0 %v418
      %1540 = vmatmul.mubr.f32.gmra.mxu0 %v388
      %v1541 = vpop.f32.mrf.mxu0
      %v1542 = vadd.f32 0.0, %v1541
      %v1543 = vpop.f32.mrf.mxu0
      %1544 = vdwg.mxu0
      %s1545 = scalar_lea.vmem %s2, 48
      %v1546 = vld [vmem:[%s1545] sm:$0xff]
      %v1548 = vsel %vm590, %v1546, 0
      %v1551 = vsel %vm594, %v1542, 0
      %1553 = vmatprep.subr.mxu0 0.0
      %1554 = vmatpush1.msra.mxu0 0.0
      %1555 = vmatprep.subr.mxu0 0.0
      %1556 = vmatpush1.msra.mxu0 0.0
      %1557 = vmatprep.subr.mxu0 0.0
      %1558 = vmatpush1.msra.mxu0 0.0
      %1559 = vmatprep.subr.mxu0 0.0
      %1560 = vmatpush1.msra.mxu0 0.0
      %1561 = vmatprep.subr.mxu0 0.0
      %1562 = vmatpush1.msra.mxu0 0.0
      %1563 = vmatprep.subr.mxu0 0.0
      %1564 = vmatpush1.msra.mxu0 0.0
      %1565 = vmatprep.subr.mxu0 0.0
      %1566 = vmatpush1.msra.mxu0 0.0
      %1567 = vmatprep.subr.mxu0 0.0
      %1568 = vmatpush1.msra.mxu0 0.0
      %1569 = vmatprep.subr.mxu0 0.0
      %1570 = vmatpush1.msra.mxu0 0.0
      %1571 = vmatprep.subr.mxu0 0.0
      %1572 = vmatpush1.msra.mxu0 0.0
      %1573 = vmatprep.subr.mxu0 0.0
      %1574 = vmatpush1.msra.mxu0 0.0
      %1575 = vmatprep.subr.mxu0 0.0
      %1576 = vmatpush1.msra.mxu0 0.0
      %1577 = vmatprep.subr.mxu0 0.0
      %1578 = vmatpush1.msra.mxu0 0.0
      %1579 = vmatprep.subr.mxu0 0.0
      %1580 = vmatpush1.msra.mxu0 0.0
      %1581 = vmatprep.subr.mxu0 0.0
      %1582 = vmatpush1.msra.mxu0 0.0
      %1583 = vmatprep.subr.mxu0 0.0
      %1584 = vmatpush1.msra.mxu0 %v1551
      %1585 = vmatprep.subr.mxu0 0.0
      %1586 = vmatpush2.msra.mxu0 0.0
      %1587 = vmatprep.subr.mxu0 0.0
      %1588 = vmatpush2.msra.mxu0 0.0
      %1589 = vmatprep.subr.mxu0 0.0
      %1590 = vmatpush2.msra.mxu0 0.0
      %1591 = vmatprep.subr.mxu0 0.0
      %1592 = vmatpush2.msra.mxu0 0.0
      %1593 = vmatprep.subr.mxu0 0.0
      %1594 = vmatpush2.msra.mxu0 0.0
      %1595 = vmatprep.subr.mxu0 0.0
      %1596 = vmatpush2.msra.mxu0 0.0
      %1597 = vmatprep.subr.mxu0 0.0
      %1598 = vmatpush2.msra.mxu0 0.0
      %1599 = vmatprep.subr.mxu0 0.0
      %1600 = vmatpush2.msra.mxu0 0.0
      %1601 = vmatprep.subr.mxu0 0.0
      %1602 = vmatpush2.msra.mxu0 0.0
      %1603 = vmatprep.subr.mxu0 0.0
      %1604 = vmatpush2.msra.mxu0 0.0
      %1605 = vmatprep.subr.mxu0 0.0
      %1606 = vmatpush2.msra.mxu0 0.0
      %1607 = vmatprep.subr.mxu0 0.0
      %1608 = vmatpush2.msra.mxu0 0.0
      %1609 = vmatprep.subr.mxu0 0.0
      %1610 = vmatpush2.msra.mxu0 0.0
      %1611 = vmatprep.subr.mxu0 0.0
      %1612 = vmatpush2.msra.mxu0 0.0
      %1613 = vmatprep.subr.mxu0 0.0
      %1614 = vmatpush2.msra.mxu0 0.0
      %1615 = vmatprep.subr.mxu0 0.0
      %1616 = vmatpush2.msra.mxu0 0.0
      %1617 = vmatprep.mubr.f32.mxu0 0.0
      %1618 = vmatmul.mubr.f32.gmra.mxu0 %v1548
      %v1619 = vpop.f32.mrf.mxu0
      %v1620 = vadd.f32 0.0, %v1619
      %v1621 = vpop.f32.mrf.mxu0
      %1622 = vdwg.mxu0
      %v1623 = vadd.f32 %v1447, %v1620
      %s1624 = scalar_lea.vmem %s3, 1456
      %v1625 = vld [vmem:[%s1624] sm:$0xff]
      %v1626 = vld [vmem:[%s1624 + $0x8] sm:$0xff]
      %v1627 = vld [vmem:[%s1624 + $0x10] sm:$0xff]
      %v1628 = vld [vmem:[%s1624 + $0x18] sm:$0xff]
      %v1629 = vld [vmem:[%s1624 + $0x20] sm:$0xff]
      %v1630 = vld [vmem:[%s1624 + $0x28] sm:$0xff]
      %v1631 = vld [vmem:[%s1624 + $0x30] sm:$0xff]
      %v1632 = vld [vmem:[%s1624 + $0x38] sm:$0xff]
      %v1633 = vld [vmem:[%s1624 + $0x40] sm:$0xff]
      %v1634 = vld [vmem:[%s1624 + $0x48] sm:$0xff]
      %v1635 = vld [vmem:[%s1624 + $0x50] sm:$0xff]
      %v1636 = vld [vmem:[%s1624 + $0x58] sm:$0xff]
      %v1637 = vld [vmem:[%s1624 + $0x60] sm:$0xff]
      %v1638 = vld [vmem:[%s1624 + $0x68] sm:$0xff]
      %v1639 = vld [vmem:[%s1624 + $0x70] sm:$0xff]
      %v1640 = vld [vmem:[%s1624 + $0x78] sm:$0xff]
      %v1641 = vld [vmem:[%s1624 + $0x80] sm:$0xff]
      %v1642 = vld [vmem:[%s1624 + $0x88] sm:$0xff]
      %v1643 = vld [vmem:[%s1624 + $0x90] sm:$0xff]
      %v1644 = vld [vmem:[%s1624 + $0x98] sm:$0xff]
      %v1645 = vld [vmem:[%s1624 + $0xa0] sm:$0xff]
      %v1646 = vld [vmem:[%s1624 + $0xa8] sm:$0xff]
      %v1647 = vld [vmem:[%s1624 + $0xb0] sm:$0xff]
      %v1648 = vld [vmem:[%s1624 + $0xb8] sm:$0xff]
      %v1649 = vld [vmem:[%s1624 + $0xc0] sm:$0xff]
      %v1650 = vld [vmem:[%s1624 + $0xc8] sm:$0xff]
      %1651 = vmatprep.subr.mxu0 0.0
      %1652 = vmatpush1.msra.mxu0 %v1640
      %1653 = vmatprep.subr.mxu0 0.0
      %1654 = vmatpush1.msra.mxu0 %v1639
      %1655 = vmatprep.subr.mxu0 0.0
      %1656 = vmatpush1.msra.mxu0 %v1638
      %1657 = vmatprep.subr.mxu0 0.0
      %1658 = vmatpush1.msra.mxu0 %v1637
      %1659 = vmatprep.subr.mxu0 0.0
      %1660 = vmatpush1.msra.mxu0 %v1636
      %1661 = vmatprep.subr.mxu0 0.0
      %1662 = vmatpush1.msra.mxu0 %v1635
      %1663 = vmatprep.subr.mxu0 0.0
      %1664 = vmatpush1.msra.mxu0 %v1634
      %1665 = vmatprep.subr.mxu0 0.0
      %1666 = vmatpush1.msra.mxu0 %v1633
      %1667 = vmatprep.subr.mxu0 0.0
      %1668 = vmatpush1.msra.mxu0 %v1632
      %1669 = vmatprep.subr.mxu0 0.0
      %1670 = vmatpush1.msra.mxu0 %v1631
      %1671 = vmatprep.subr.mxu0 0.0
      %1672 = vmatpush1.msra.mxu0 %v1630
      %1673 = vmatprep.subr.mxu0 0.0
      %1674 = vmatpush1.msra.mxu0 %v1629
      %1675 = vmatprep.subr.mxu0 0.0
      %1676 = vmatpush1.msra.mxu0 %v1628
      %1677 = vmatprep.subr.mxu0 0.0
      %1678 = vmatpush1.msra.mxu0 %v1627
      %1679 = vmatprep.subr.mxu0 0.0
      %1680 = vmatpush1.msra.mxu0 %v1626
      %1681 = vmatprep.subr.mxu0 0.0
      %1682 = vmatpush1.msra.mxu0 %v1625
      %1683 = vmatprep.subr.mxu0 0.0
      %1684 = vmatpush2.msra.mxu0 0.0
      %1685 = vmatprep.subr.mxu0 0.0
      %1686 = vmatpush2.msra.mxu0 0.0
      %1687 = vmatprep.subr.mxu0 0.0
      %1688 = vmatpush2.msra.mxu0 0.0
      %1689 = vmatprep.subr.mxu0 0.0
      %1690 = vmatpush2.msra.mxu0 0.0
      %1691 = vmatprep.subr.mxu0 0.0
      %1692 = vmatpush2.msra.mxu0 0.0
      %1693 = vmatprep.subr.mxu0 0.0
      %1694 = vmatpush2.msra.mxu0 0.0
      %1695 = vmatprep.subr.mxu0 0.0
      %1696 = vmatpush2.msra.mxu0 %v1650
      %1697 = vmatprep.subr.mxu0 0.0
      %1698 = vmatpush2.msra.mxu0 %v1649
      %1699 = vmatprep.subr.mxu0 0.0
      %1700 = vmatpush2.msra.mxu0 %v1648
      %1701 = vmatprep.subr.mxu0 0.0
      %1702 = vmatpush2.msra.mxu0 %v1647
      %1703 = vmatprep.subr.mxu0 0.0
      %1704 = vmatpush2.msra.mxu0 %v1646
      %1705 = vmatprep.subr.mxu0 0.0
      %1706 = vmatpush2.msra.mxu0 %v1645
      %1707 = vmatprep.subr.mxu0 0.0
      %1708 = vmatpush2.msra.mxu0 %v1644
      %1709 = vmatprep.subr.mxu0 0.0
      %1710 = vmatpush2.msra.mxu0 %v1643
      %1711 = vmatprep.subr.mxu0 0.0
      %1712 = vmatpush2.msra.mxu0 %v1642
      %1713 = vmatprep.subr.mxu0 0.0
      %1714 = vmatpush2.msra.mxu0 %v1641
      %1715 = vmatprep.mubr.f32.mxu0 %v418
      %1716 = vmatmul.mubr.f32.gmra.mxu0 %v388
      %v1717 = vpop.f32.mrf.mxu0
      %v1718 = vadd.f32 0.0, %v1717
      %v1719 = vpop.f32.mrf.mxu0
      %1720 = vdwg.mxu0
      %s1721 = scalar_lea.vmem %s2, 56
      %v1722 = vld [vmem:[%s1721] sm:$0xff]
      %v1724 = vsel %vm590, %v1722, 0
      %v1727 = vsel %vm594, %v1718, 0
      %1729 = vmatprep.subr.mxu0 0.0
      %1730 = vmatpush1.msra.mxu0 0.0
      %1731 = vmatprep.subr.mxu0 0.0
      %1732 = vmatpush1.msra.mxu0 0.0
      %1733 = vmatprep.subr.mxu0 0.0
      %1734 = vmatpush1.msra.mxu0 0.0
      %1735 = vmatprep.subr.mxu0 0.0
      %1736 = vmatpush1.msra.mxu0 0.0
      %1737 = vmatprep.subr.mxu0 0.0
      %1738 = vmatpush1.msra.mxu0 0.0
      %1739 = vmatprep.subr.mxu0 0.0
      %1740 = vmatpush1.msra.mxu0 0.0
      %1741 = vmatprep.subr.mxu0 0.0
      %1742 = vmatpush1.msra.mxu0 0.0
      %1743 = vmatprep.subr.mxu0 0.0
      %1744 = vmatpush1.msra.mxu0 0.0
      %1745 = vmatprep.subr.mxu0 0.0
      %1746 = vmatpush1.msra.mxu0 0.0
      %1747 = vmatprep.subr.mxu0 0.0
      %1748 = vmatpush1.msra.mxu0 0.0
      %1749 = vmatprep.subr.mxu0 0.0
      %1750 = vmatpush1.msra.mxu0 0.0
      %1751 = vmatprep.subr.mxu0 0.0
      %1752 = vmatpush1.msra.mxu0 0.0
      %1753 = vmatprep.subr.mxu0 0.0
      %1754 = vmatpush1.msra.mxu0 0.0
      %1755 = vmatprep.subr.mxu0 0.0
      %1756 = vmatpush1.msra.mxu0 0.0
      %1757 = vmatprep.subr.mxu0 0.0
      %1758 = vmatpush1.msra.mxu0 0.0
      %1759 = vmatprep.subr.mxu0 0.0
      %1760 = vmatpush1.msra.mxu0 %v1727
      %1761 = vmatprep.subr.mxu0 0.0
      %1762 = vmatpush2.msra.mxu0 0.0
      %1763 = vmatprep.subr.mxu0 0.0
      %1764 = vmatpush2.msra.mxu0 0.0
      %1765 = vmatprep.subr.mxu0 0.0
      %1766 = vmatpush2.msra.mxu0 0.0
      %1767 = vmatprep.subr.mxu0 0.0
      %1768 = vmatpush2.msra.mxu0 0.0
      %1769 = vmatprep.subr.mxu0 0.0
      %1770 = vmatpush2.msra.mxu0 0.0
      %1771 = vmatprep.subr.mxu0 0.0
      %1772 = vmatpush2.msra.mxu0 0.0
      %1773 = vmatprep.subr.mxu0 0.0
      %1774 = vmatpush2.msra.mxu0 0.0
      %1775 = vmatprep.subr.mxu0 0.0
      %1776 = vmatpush2.msra.mxu0 0.0
      %1777 = vmatprep.subr.mxu0 0.0
      %1778 = vmatpush2.msra.mxu0 0.0
      %1779 = vmatprep.subr.mxu0 0.0
      %1780 = vmatpush2.msra.mxu0 0.0
      %1781 = vmatprep.subr.mxu0 0.0
      %1782 = vmatpush2.msra.mxu0 0.0
      %1783 = vmatprep.subr.mxu0 0.0
      %1784 = vmatpush2.msra.mxu0 0.0
      %1785 = vmatprep.subr.mxu0 0.0
      %1786 = vmatpush2.msra.mxu0 0.0
      %1787 = vmatprep.subr.mxu0 0.0
      %1788 = vmatpush2.msra.mxu0 0.0
      %1789 = vmatprep.subr.mxu0 0.0
      %1790 = vmatpush2.msra.mxu0 0.0
      %1791 = vmatprep.subr.mxu0 0.0
      %1792 = vmatpush2.msra.mxu0 0.0
      %1793 = vmatprep.mubr.f32.mxu0 0.0
      %1794 = vmatmul.mubr.f32.gmra.mxu0 %v1724
      %v1795 = vpop.f32.mrf.mxu0
      %v1796 = vadd.f32 0.0, %v1795
      %v1797 = vpop.f32.mrf.mxu0
      %1798 = vdwg.mxu0
      %v1799 = vadd.f32 %v1623, %v1796
      %s1800 = scalar_lea.vmem %s3, 1664
      %v1801 = vld [vmem:[%s1800] sm:$0xff]
      %v1802 = vld [vmem:[%s1800 + $0x8] sm:$0xff]
      %v1803 = vld [vmem:[%s1800 + $0x10] sm:$0xff]
      %v1804 = vld [vmem:[%s1800 + $0x18] sm:$0xff]
      %v1805 = vld [vmem:[%s1800 + $0x20] sm:$0xff]
      %v1806 = vld [vmem:[%s1800 + $0x28] sm:$0xff]
      %v1807 = vld [vmem:[%s1800 + $0x30] sm:$0xff]
      %v1808 = vld [vmem:[%s1800 + $0x38] sm:$0xff]
      %v1809 = vld [vmem:[%s1800 + $0x40] sm:$0xff]
      %v1810 = vld [vmem:[%s1800 + $0x48] sm:$0xff]
      %v1811 = vld [vmem:[%s1800 + $0x50] sm:$0xff]
      %v1812 = vld [vmem:[%s1800 + $0x58] sm:$0xff]
      %v1813 = vld [vmem:[%s1800 + $0x60] sm:$0xff]
      %v1814 = vld [vmem:[%s1800 + $0x68] sm:$0xff]
      %v1815 = vld [vmem:[%s1800 + $0x70] sm:$0xff]
      %v1816 = vld [vmem:[%s1800 + $0x78] sm:$0xff]
      %v1817 = vld [vmem:[%s1800 + $0x80] sm:$0xff]
      %v1818 = vld [vmem:[%s1800 + $0x88] sm:$0xff]
      %v1819 = vld [vmem:[%s1800 + $0x90] sm:$0xff]
      %v1820 = vld [vmem:[%s1800 + $0x98] sm:$0xff]
      %v1821 = vld [vmem:[%s1800 + $0xa0] sm:$0xff]
      %v1822 = vld [vmem:[%s1800 + $0xa8] sm:$0xff]
      %v1823 = vld [vmem:[%s1800 + $0xb0] sm:$0xff]
      %v1824 = vld [vmem:[%s1800 + $0xb8] sm:$0xff]
      %v1825 = vld [vmem:[%s1800 + $0xc0] sm:$0xff]
      %v1826 = vld [vmem:[%s1800 + $0xc8] sm:$0xff]
      %1827 = vmatprep.subr.mxu0 0.0
      %1828 = vmatpush1.msra.mxu0 %v1816
      %1829 = vmatprep.subr.mxu0 0.0
      %1830 = vmatpush1.msra.mxu0 %v1815
      %1831 = vmatprep.subr.mxu0 0.0
      %1832 = vmatpush1.msra.mxu0 %v1814
      %1833 = vmatprep.subr.mxu0 0.0
      %1834 = vmatpush1.msra.mxu0 %v1813
      %1835 = vmatprep.subr.mxu0 0.0
      %1836 = vmatpush1.msra.mxu0 %v1812
      %1837 = vmatprep.subr.mxu0 0.0
      %1838 = vmatpush1.msra.mxu0 %v1811
      %1839 = vmatprep.subr.mxu0 0.0
      %1840 = vmatpush1.msra.mxu0 %v1810
      %1841 = vmatprep.subr.mxu0 0.0
      %1842 = vmatpush1.msra.mxu0 %v1809
      %1843 = vmatprep.subr.mxu0 0.0
      %1844 = vmatpush1.msra.mxu0 %v1808
      %1845 = vmatprep.subr.mxu0 0.0
      %1846 = vmatpush1.msra.mxu0 %v1807
      %1847 = vmatprep.subr.mxu0 0.0
      %1848 = vmatpush1.msra.mxu0 %v1806
      %1849 = vmatprep.subr.mxu0 0.0
      %1850 = vmatpush1.msra.mxu0 %v1805
      %1851 = vmatprep.subr.mxu0 0.0
      %1852 = vmatpush1.msra.mxu0 %v1804
      %1853 = vmatprep.subr.mxu0 0.0
      %1854 = vmatpush1.msra.mxu0 %v1803
      %1855 = vmatprep.subr.mxu0 0.0
      %1856 = vmatpush1.msra.mxu0 %v1802
      %1857 = vmatprep.subr.mxu0 0.0
      %1858 = vmatpush1.msra.mxu0 %v1801
      %1859 = vmatprep.subr.mxu0 0.0
      %1860 = vmatpush2.msra.mxu0 0.0
      %1861 = vmatprep.subr.mxu0 0.0
      %1862 = vmatpush2.msra.mxu0 0.0
      %1863 = vmatprep.subr.mxu0 0.0
      %1864 = vmatpush2.msra.mxu0 0.0
      %1865 = vmatprep.subr.mxu0 0.0
      %1866 = vmatpush2.msra.mxu0 0.0
      %1867 = vmatprep.subr.mxu0 0.0
      %1868 = vmatpush2.msra.mxu0 0.0
      %1869 = vmatprep.subr.mxu0 0.0
      %1870 = vmatpush2.msra.mxu0 0.0
      %1871 = vmatprep.subr.mxu0 0.0
      %1872 = vmatpush2.msra.mxu0 %v1826
      %1873 = vmatprep.subr.mxu0 0.0
      %1874 = vmatpush2.msra.mxu0 %v1825
      %1875 = vmatprep.subr.mxu0 0.0
      %1876 = vmatpush2.msra.mxu0 %v1824
      %1877 = vmatprep.subr.mxu0 0.0
      %1878 = vmatpush2.msra.mxu0 %v1823
      %1879 = vmatprep.subr.mxu0 0.0
      %1880 = vmatpush2.msra.mxu0 %v1822
      %1881 = vmatprep.subr.mxu0 0.0
      %1882 = vmatpush2.msra.mxu0 %v1821
      %1883 = vmatprep.subr.mxu0 0.0
      %1884 = vmatpush2.msra.mxu0 %v1820
      %1885 = vmatprep.subr.mxu0 0.0
      %1886 = vmatpush2.msra.mxu0 %v1819
      %1887 = vmatprep.subr.mxu0 0.0
      %1888 = vmatpush2.msra.mxu0 %v1818
      %1889 = vmatprep.subr.mxu0 0.0
      %1890 = vmatpush2.msra.mxu0 %v1817
      %1891 = vmatprep.mubr.f32.mxu0 %v418
      %1892 = vmatmul.mubr.f32.gmra.mxu0 %v388
      %v1893 = vpop.f32.mrf.mxu0
      %v1894 = vadd.f32 0.0, %v1893
      %v1895 = vpop.f32.mrf.mxu0
      %1896 = vdwg.mxu0
      %s1897 = scalar_lea.vmem %s2, 64
      %v1898 = vld [vmem:[%s1897] sm:$0xff]
      %v1900 = vsel %vm590, %v1898, 0
      %v1903 = vsel %vm594, %v1894, 0
      %1905 = vmatprep.subr.mxu0 0.0
      %1906 = vmatpush1.msra.mxu0 0.0
      %1907 = vmatprep.subr.mxu0 0.0
      %1908 = vmatpush1.msra.mxu0 0.0
      %1909 = vmatprep.subr.mxu0 0.0
      %1910 = vmatpush1.msra.mxu0 0.0
      %1911 = vmatprep.subr.mxu0 0.0
      %1912 = vmatpush1.msra.mxu0 0.0
      %1913 = vmatprep.subr.mxu0 0.0
      %1914 = vmatpush1.msra.mxu0 0.0
      %1915 = vmatprep.subr.mxu0 0.0
      %1916 = vmatpush1.msra.mxu0 0.0
      %1917 = vmatprep.subr.mxu0 0.0
      %1918 = vmatpush1.msra.mxu0 0.0
      %1919 = vmatprep.subr.mxu0 0.0
      %1920 = vmatpush1.msra.mxu0 0.0
      %1921 = vmatprep.subr.mxu0 0.0
      %1922 = vmatpush1.msra.mxu0 0.0
      %1923 = vmatprep.subr.mxu0 0.0
      %1924 = vmatpush1.msra.mxu0 0.0
      %1925 = vmatprep.subr.mxu0 0.0
      %1926 = vmatpush1.msra.mxu0 0.0
      %1927 = vmatprep.subr.mxu0 0.0
      %1928 = vmatpush1.msra.mxu0 0.0
      %1929 = vmatprep.subr.mxu0 0.0
      %1930 = vmatpush1.msra.mxu0 0.0
      %1931 = vmatprep.subr.mxu0 0.0
      %1932 = vmatpush1.msra.mxu0 0.0
      %1933 = vmatprep.subr.mxu0 0.0
      %1934 = vmatpush1.msra.mxu0 0.0
      %1935 = vmatprep.subr.mxu0 0.0
      %1936 = vmatpush1.msra.mxu0 %v1903
      %1937 = vmatprep.subr.mxu0 0.0
      %1938 = vmatpush2.msra.mxu0 0.0
      %1939 = vmatprep.subr.mxu0 0.0
      %1940 = vmatpush2.msra.mxu0 0.0
      %1941 = vmatprep.subr.mxu0 0.0
      %1942 = vmatpush2.msra.mxu0 0.0
      %1943 = vmatprep.subr.mxu0 0.0
      %1944 = vmatpush2.msra.mxu0 0.0
      %1945 = vmatprep.subr.mxu0 0.0
      %1946 = vmatpush2.msra.mxu0 0.0
      %1947 = vmatprep.subr.mxu0 0.0
      %1948 = vmatpush2.msra.mxu0 0.0
      %1949 = vmatprep.subr.mxu0 0.0
      %1950 = vmatpush2.msra.mxu0 0.0
      %1951 = vmatprep.subr.mxu0 0.0
      %1952 = vmatpush2.msra.mxu0 0.0
      %1953 = vmatprep.subr.mxu0 0.0
      %1954 = vmatpush2.msra.mxu0 0.0
      %1955 = vmatprep.subr.mxu0 0.0
      %1956 = vmatpush2.msra.mxu0 0.0
      %1957 = vmatprep.subr.mxu0 0.0
      %1958 = vmatpush2.msra.mxu0 0.0
      %1959 = vmatprep.subr.mxu0 0.0
      %1960 = vmatpush2.msra.mxu0 0.0
      %1961 = vmatprep.subr.mxu0 0.0
      %1962 = vmatpush2.msra.mxu0 0.0
      %1963 = vmatprep.subr.mxu0 0.0
      %1964 = vmatpush2.msra.mxu0 0.0
      %1965 = vmatprep.subr.mxu0 0.0
      %1966 = vmatpush2.msra.mxu0 0.0
      %1967 = vmatprep.subr.mxu0 0.0
      %1968 = vmatpush2.msra.mxu0 0.0
      %1969 = vmatprep.mubr.f32.mxu0 0.0
      %1970 = vmatmul.mubr.f32.gmra.mxu0 %v1900
      %v1971 = vpop.f32.mrf.mxu0
      %v1972 = vadd.f32 0.0, %v1971
      %v1973 = vpop.f32.mrf.mxu0
      %1974 = vdwg.mxu0
      %v1975 = vadd.f32 %v1799, %v1972
      %s1976 = scalar_lea.vmem %s3, 1872
      %v1977 = vld [vmem:[%s1976] sm:$0xff]
      %v1978 = vld [vmem:[%s1976 + $0x8] sm:$0xff]
      %v1979 = vld [vmem:[%s1976 + $0x10] sm:$0xff]
      %v1980 = vld [vmem:[%s1976 + $0x18] sm:$0xff]
      %v1981 = vld [vmem:[%s1976 + $0x20] sm:$0xff]
      %v1982 = vld [vmem:[%s1976 + $0x28] sm:$0xff]
      %v1983 = vld [vmem:[%s1976 + $0x30] sm:$0xff]
      %v1984 = vld [vmem:[%s1976 + $0x38] sm:$0xff]
      %v1985 = vld [vmem:[%s1976 + $0x40] sm:$0xff]
      %v1986 = vld [vmem:[%s1976 + $0x48] sm:$0xff]
      %v1987 = vld [vmem:[%s1976 + $0x50] sm:$0xff]
      %v1988 = vld [vmem:[%s1976 + $0x58] sm:$0xff]
      %v1989 = vld [vmem:[%s1976 + $0x60] sm:$0xff]
      %v1990 = vld [vmem:[%s1976 + $0x68] sm:$0xff]
      %v1991 = vld [vmem:[%s1976 + $0x70] sm:$0xff]
      %v1992 = vld [vmem:[%s1976 + $0x78] sm:$0xff]
      %v1993 = vld [vmem:[%s1976 + $0x80] sm:$0xff]
      %v1994 = vld [vmem:[%s1976 + $0x88] sm:$0xff]
      %v1995 = vld [vmem:[%s1976 + $0x90] sm:$0xff]
      %v1996 = vld [vmem:[%s1976 + $0x98] sm:$0xff]
      %v1997 = vld [vmem:[%s1976 + $0xa0] sm:$0xff]
      %v1998 = vld [vmem:[%s1976 + $0xa8] sm:$0xff]
      %v1999 = vld [vmem:[%s1976 + $0xb0] sm:$0xff]
      %v2000 = vld [vmem:[%s1976 + $0xb8] sm:$0xff]
      %v2001 = vld [vmem:[%s1976 + $0xc0] sm:$0xff]
      %v2002 = vld [vmem:[%s1976 + $0xc8] sm:$0xff]
      %2003 = vmatprep.subr.mxu0 0.0
      %2004 = vmatpush1.msra.mxu0 %v1992
      %2005 = vmatprep.subr.mxu0 0.0
      %2006 = vmatpush1.msra.mxu0 %v1991
      %2007 = vmatprep.subr.mxu0 0.0
      %2008 = vmatpush1.msra.mxu0 %v1990
      %2009 = vmatprep.subr.mxu0 0.0
      %2010 = vmatpush1.msra.mxu0 %v1989
      %2011 = vmatprep.subr.mxu0 0.0
      %2012 = vmatpush1.msra.mxu0 %v1988
      %2013 = vmatprep.subr.mxu0 0.0
      %2014 = vmatpush1.msra.mxu0 %v1987
      %2015 = vmatprep.subr.mxu0 0.0
      %2016 = vmatpush1.msra.mxu0 %v1986
      %2017 = vmatprep.subr.mxu0 0.0
      %2018 = vmatpush1.msra.mxu0 %v1985
      %2019 = vmatprep.subr.mxu0 0.0
      %2020 = vmatpush1.msra.mxu0 %v1984
      %2021 = vmatprep.subr.mxu0 0.0
      %2022 = vmatpush1.msra.mxu0 %v1983
      %2023 = vmatprep.subr.mxu0 0.0
      %2024 = vmatpush1.msra.mxu0 %v1982
      %2025 = vmatprep.subr.mxu0 0.0
      %2026 = vmatpush1.msra.mxu0 %v1981
      %2027 = vmatprep.subr.mxu0 0.0
      %2028 = vmatpush1.msra.mxu0 %v1980
      %2029 = vmatprep.subr.mxu0 0.0
      %2030 = vmatpush1.msra.mxu0 %v1979
      %2031 = vmatprep.subr.mxu0 0.0
      %2032 = vmatpush1.msra.mxu0 %v1978
      %2033 = vmatprep.subr.mxu0 0.0
      %2034 = vmatpush1.msra.mxu0 %v1977
      %2035 = vmatprep.subr.mxu0 0.0
      %2036 = vmatpush2.msra.mxu0 0.0
      %2037 = vmatprep.subr.mxu0 0.0
      %2038 = vmatpush2.msra.mxu0 0.0
      %2039 = vmatprep.subr.mxu0 0.0
      %2040 = vmatpush2.msra.mxu0 0.0
      %2041 = vmatprep.subr.mxu0 0.0
      %2042 = vmatpush2.msra.mxu0 0.0
      %2043 = vmatprep.subr.mxu0 0.0
      %2044 = vmatpush2.msra.mxu0 0.0
      %2045 = vmatprep.subr.mxu0 0.0
      %2046 = vmatpush2.msra.mxu0 0.0
      %2047 = vmatprep.subr.mxu0 0.0
      %2048 = vmatpush2.msra.mxu0 %v2002
      %2049 = vmatprep.subr.mxu0 0.0
      %2050 = vmatpush2.msra.mxu0 %v2001
      %2051 = vmatprep.subr.mxu0 0.0
      %2052 = vmatpush2.msra.mxu0 %v2000
      %2053 = vmatprep.subr.mxu0 0.0
      %2054 = vmatpush2.msra.mxu0 %v1999
      %2055 = vmatprep.subr.mxu0 0.0
      %2056 = vmatpush2.msra.mxu0 %v1998
      %2057 = vmatprep.subr.mxu0 0.0
      %2058 = vmatpush2.msra.mxu0 %v1997
      %2059 = vmatprep.subr.mxu0 0.0
      %2060 = vmatpush2.msra.mxu0 %v1996
      %2061 = vmatprep.subr.mxu0 0.0
      %2062 = vmatpush2.msra.mxu0 %v1995
      %2063 = vmatprep.subr.mxu0 0.0
      %2064 = vmatpush2.msra.mxu0 %v1994
      %2065 = vmatprep.subr.mxu0 0.0
      %2066 = vmatpush2.msra.mxu0 %v1993
      %2067 = vmatprep.mubr.f32.mxu0 %v418
      %2068 = vmatmul.mubr.f32.gmra.mxu0 %v388
      %v2069 = vpop.f32.mrf.mxu0
      %v2070 = vadd.f32 0.0, %v2069
      %v2071 = vpop.f32.mrf.mxu0
      %2072 = vdwg.mxu0
      %s2073 = scalar_lea.vmem %s2, 72
      %v2074 = vld [vmem:[%s2073] sm:$0xff]
      %v2076 = vsel %vm590, %v2074, 0
      %v2079 = vsel %vm594, %v2070, 0
      %2081 = vmatprep.subr.mxu0 0.0
      %2082 = vmatpush1.msra.mxu0 0.0
      %2083 = vmatprep.subr.mxu0 0.0
      %2084 = vmatpush1.msra.mxu0 0.0
      %2085 = vmatprep.subr.mxu0 0.0
      %2086 = vmatpush1.msra.mxu0 0.0
      %2087 = vmatprep.subr.mxu0 0.0
      %2088 = vmatpush1.msra.mxu0 0.0
      %2089 = vmatprep.subr.mxu0 0.0
      %2090 = vmatpush1.msra.mxu0 0.0
      %2091 = vmatprep.subr.mxu0 0.0
      %2092 = vmatpush1.msra.mxu0 0.0
      %2093 = vmatprep.subr.mxu0 0.0
      %2094 = vmatpush1.msra.mxu0 0.0
      %2095 = vmatprep.subr.mxu0 0.0
      %2096 = vmatpush1.msra.mxu0 0.0
      %2097 = vmatprep.subr.mxu0 0.0
      %2098 = vmatpush1.msra.mxu0 0.0
      %2099 = vmatprep.subr.mxu0 0.0
      %2100 = vmatpush1.msra.mxu0 0.0
      %2101 = vmatprep.subr.mxu0 0.0
      %2102 = vmatpush1.msra.mxu0 0.0
      %2103 = vmatprep.subr.mxu0 0.0
      %2104 = vmatpush1.msra.mxu0 0.0
      %2105 = vmatprep.subr.mxu0 0.0
      %2106 = vmatpush1.msra.mxu0 0.0
      %2107 = vmatprep.subr.mxu0 0.0
      %2108 = vmatpush1.msra.mxu0 0.0
      %2109 = vmatprep.subr.mxu0 0.0
      %2110 = vmatpush1.msra.mxu0 0.0
      %2111 = vmatprep.subr.mxu0 0.0
      %2112 = vmatpush1.msra.mxu0 %v2079
      %2113 = vmatprep.subr.mxu0 0.0
      %2114 = vmatpush2.msra.mxu0 0.0
      %2115 = vmatprep.subr.mxu0 0.0
      %2116 = vmatpush2.msra.mxu0 0.0
      %2117 = vmatprep.subr.mxu0 0.0
      %2118 = vmatpush2.msra.mxu0 0.0
      %2119 = vmatprep.subr.mxu0 0.0
      %2120 = vmatpush2.msra.mxu0 0.0
      %2121 = vmatprep.subr.mxu0 0.0
      %2122 = vmatpush2.msra.mxu0 0.0
      %2123 = vmatprep.subr.mxu0 0.0
      %2124 = vmatpush2.msra.mxu0 0.0
      %2125 = vmatprep.subr.mxu0 0.0
      %2126 = vmatpush2.msra.mxu0 0.0
      %2127 = vmatprep.subr.mxu0 0.0
      %2128 = vmatpush2.msra.mxu0 0.0
      %2129 = vmatprep.subr.mxu0 0.0
      %2130 = vmatpush2.msra.mxu0 0.0
      %2131 = vmatprep.subr.mxu0 0.0
      %2132 = vmatpush2.msra.mxu0 0.0
      %2133 = vmatprep.subr.mxu0 0.0
      %2134 = vmatpush2.msra.mxu0 0.0
      %2135 = vmatprep.subr.mxu0 0.0
      %2136 = vmatpush2.msra.mxu0 0.0
      %2137 = vmatprep.subr.mxu0 0.0
      %2138 = vmatpush2.msra.mxu0 0.0
      %2139 = vmatprep.subr.mxu0 0.0
      %2140 = vmatpush2.msra.mxu0 0.0
      %2141 = vmatprep.subr.mxu0 0.0
      %2142 = vmatpush2.msra.mxu0 0.0
      %2143 = vmatprep.subr.mxu0 0.0
      %2144 = vmatpush2.msra.mxu0 0.0
      %2145 = vmatprep.mubr.f32.mxu0 0.0
      %2146 = vmatmul.mubr.f32.gmra.mxu0 %v2076
      %v2147 = vpop.f32.mrf.mxu0
      %v2148 = vadd.f32 0.0, %v2147
      %v2149 = vpop.f32.mrf.mxu0
      %2150 = vdwg.mxu0
      %v2151 = vadd.f32 %v1975, %v2148
      %s2152 = scalar_lea.vmem %s3, 2080
      %v2153 = vld [vmem:[%s2152] sm:$0xff]
      %v2154 = vld [vmem:[%s2152 + $0x8] sm:$0xff]
      %v2155 = vld [vmem:[%s2152 + $0x10] sm:$0xff]
      %v2156 = vld [vmem:[%s2152 + $0x18] sm:$0xff]
      %v2157 = vld [vmem:[%s2152 + $0x20] sm:$0xff]
      %v2158 = vld [vmem:[%s2152 + $0x28] sm:$0xff]
      %v2159 = vld [vmem:[%s2152 + $0x30] sm:$0xff]
      %v2160 = vld [vmem:[%s2152 + $0x38] sm:$0xff]
      %v2161 = vld [vmem:[%s2152 + $0x40] sm:$0xff]
      %v2162 = vld [vmem:[%s2152 + $0x48] sm:$0xff]
      %v2163 = vld [vmem:[%s2152 + $0x50] sm:$0xff]
      %v2164 = vld [vmem:[%s2152 + $0x58] sm:$0xff]
      %v2165 = vld [vmem:[%s2152 + $0x60] sm:$0xff]
      %v2166 = vld [vmem:[%s2152 + $0x68] sm:$0xff]
      %v2167 = vld [vmem:[%s2152 + $0x70] sm:$0xff]
      %v2168 = vld [vmem:[%s2152 + $0x78] sm:$0xff]
      %v2169 = vld [vmem:[%s2152 + $0x80] sm:$0xff]
      %v2170 = vld [vmem:[%s2152 + $0x88] sm:$0xff]
      %v2171 = vld [vmem:[%s2152 + $0x90] sm:$0xff]
      %v2172 = vld [vmem:[%s2152 + $0x98] sm:$0xff]
      %v2173 = vld [vmem:[%s2152 + $0xa0] sm:$0xff]
      %v2174 = vld [vmem:[%s2152 + $0xa8] sm:$0xff]
      %v2175 = vld [vmem:[%s2152 + $0xb0] sm:$0xff]
      %v2176 = vld [vmem:[%s2152 + $0xb8] sm:$0xff]
      %v2177 = vld [vmem:[%s2152 + $0xc0] sm:$0xff]
      %v2178 = vld [vmem:[%s2152 + $0xc8] sm:$0xff]
      %2179 = vmatprep.subr.mxu0 0.0
      %2180 = vmatpush1.msra.mxu0 %v2168
      %2181 = vmatprep.subr.mxu0 0.0
      %2182 = vmatpush1.msra.mxu0 %v2167
      %2183 = vmatprep.subr.mxu0 0.0
      %2184 = vmatpush1.msra.mxu0 %v2166
      %2185 = vmatprep.subr.mxu0 0.0
      %2186 = vmatpush1.msra.mxu0 %v2165
      %2187 = vmatprep.subr.mxu0 0.0
      %2188 = vmatpush1.msra.mxu0 %v2164
      %2189 = vmatprep.subr.mxu0 0.0
      %2190 = vmatpush1.msra.mxu0 %v2163
      %2191 = vmatprep.subr.mxu0 0.0
      %2192 = vmatpush1.msra.mxu0 %v2162
      %2193 = vmatprep.subr.mxu0 0.0
      %2194 = vmatpush1.msra.mxu0 %v2161
      %2195 = vmatprep.subr.mxu0 0.0
      %2196 = vmatpush1.msra.mxu0 %v2160
      %2197 = vmatprep.subr.mxu0 0.0
      %2198 = vmatpush1.msra.mxu0 %v2159
      %2199 = vmatprep.subr.mxu0 0.0
      %2200 = vmatpush1.msra.mxu0 %v2158
      %2201 = vmatprep.subr.mxu0 0.0
      %2202 = vmatpush1.msra.mxu0 %v2157
      %2203 = vmatprep.subr.mxu0 0.0
      %2204 = vmatpush1.msra.mxu0 %v2156
      %2205 = vmatprep.subr.mxu0 0.0
      %2206 = vmatpush1.msra.mxu0 %v2155
      %2207 = vmatprep.subr.mxu0 0.0
      %2208 = vmatpush1.msra.mxu0 %v2154
      %2209 = vmatprep.subr.mxu0 0.0
      %2210 = vmatpush1.msra.mxu0 %v2153
      %2211 = vmatprep.subr.mxu0 0.0
      %2212 = vmatpush2.msra.mxu0 0.0
      %2213 = vmatprep.subr.mxu0 0.0
      %2214 = vmatpush2.msra.mxu0 0.0
      %2215 = vmatprep.subr.mxu0 0.0
      %2216 = vmatpush2.msra.mxu0 0.0
      %2217 = vmatprep.subr.mxu0 0.0
      %2218 = vmatpush2.msra.mxu0 0.0
      %2219 = vmatprep.subr.mxu0 0.0
      %2220 = vmatpush2.msra.mxu0 0.0
      %2221 = vmatprep.subr.mxu0 0.0
      %2222 = vmatpush2.msra.mxu0 0.0
      %2223 = vmatprep.subr.mxu0 0.0
      %2224 = vmatpush2.msra.mxu0 %v2178
      %2225 = vmatprep.subr.mxu0 0.0
      %2226 = vmatpush2.msra.mxu0 %v2177
      %2227 = vmatprep.subr.mxu0 0.0
      %2228 = vmatpush2.msra.mxu0 %v2176
      %2229 = vmatprep.subr.mxu0 0.0
      %2230 = vmatpush2.msra.mxu0 %v2175
      %2231 = vmatprep.subr.mxu0 0.0
      %2232 = vmatpush2.msra.mxu0 %v2174
      %2233 = vmatprep.subr.mxu0 0.0
      %2234 = vmatpush2.msra.mxu0 %v2173
      %2235 = vmatprep.subr.mxu0 0.0
      %2236 = vmatpush2.msra.mxu0 %v2172
      %2237 = vmatprep.subr.mxu0 0.0
      %2238 = vmatpush2.msra.mxu0 %v2171
      %2239 = vmatprep.subr.mxu0 0.0
      %2240 = vmatpush2.msra.mxu0 %v2170
      %2241 = vmatprep.subr.mxu0 0.0
      %2242 = vmatpush2.msra.mxu0 %v2169
      %2243 = vmatprep.mubr.f32.mxu0 %v418
      %2244 = vmatmul.mubr.f32.gmra.mxu0 %v388
      %v2245 = vpop.f32.mrf.mxu0
      %v2246 = vadd.f32 0.0, %v2245
      %v2247 = vpop.f32.mrf.mxu0
      %2248 = vdwg.mxu0
      %s2249 = scalar_lea.vmem %s2, 80
      %v2250 = vld [vmem:[%s2249] sm:$0xff]
      %v2252 = vsel %vm590, %v2250, 0
      %v2255 = vsel %vm594, %v2246, 0
      %2257 = vmatprep.subr.mxu0 0.0
      %2258 = vmatpush1.msra.mxu0 0.0
      %2259 = vmatprep.subr.mxu0 0.0
      %2260 = vmatpush1.msra.mxu0 0.0
      %2261 = vmatprep.subr.mxu0 0.0
      %2262 = vmatpush1.msra.mxu0 0.0
      %2263 = vmatprep.subr.mxu0 0.0
      %2264 = vmatpush1.msra.mxu0 0.0
      %2265 = vmatprep.subr.mxu0 0.0
      %2266 = vmatpush1.msra.mxu0 0.0
      %2267 = vmatprep.subr.mxu0 0.0
      %2268 = vmatpush1.msra.mxu0 0.0
      %2269 = vmatprep.subr.mxu0 0.0
      %2270 = vmatpush1.msra.mxu0 0.0
      %2271 = vmatprep.subr.mxu0 0.0
      %2272 = vmatpush1.msra.mxu0 0.0
      %2273 = vmatprep.subr.mxu0 0.0
      %2274 = vmatpush1.msra.mxu0 0.0
      %2275 = vmatprep.subr.mxu0 0.0
      %2276 = vmatpush1.msra.mxu0 0.0
      %2277 = vmatprep.subr.mxu0 0.0
      %2278 = vmatpush1.msra.mxu0 0.0
      %2279 = vmatprep.subr.mxu0 0.0
      %2280 = vmatpush1.msra.mxu0 0.0
      %2281 = vmatprep.subr.mxu0 0.0
      %2282 = vmatpush1.msra.mxu0 0.0
      %2283 = vmatprep.subr.mxu0 0.0
      %2284 = vmatpush1.msra.mxu0 0.0
      %2285 = vmatprep.subr.mxu0 0.0
      %2286 = vmatpush1.msra.mxu0 0.0
      %2287 = vmatprep.subr.mxu0 0.0
      %2288 = vmatpush1.msra.mxu0 %v2255
      %2289 = vmatprep.subr.mxu0 0.0
      %2290 = vmatpush2.msra.mxu0 0.0
      %2291 = vmatprep.subr.mxu0 0.0
      %2292 = vmatpush2.msra.mxu0 0.0
      %2293 = vmatprep.subr.mxu0 0.0
      %2294 = vmatpush2.msra.mxu0 0.0
      %2295 = vmatprep.subr.mxu0 0.0
      %2296 = vmatpush2.msra.mxu0 0.0
      %2297 = vmatprep.subr.mxu0 0.0
      %2298 = vmatpush2.msra.mxu0 0.0
      %2299 = vmatprep.subr.mxu0 0.0
      %2300 = vmatpush2.msra.mxu0 0.0
      %2301 = vmatprep.subr.mxu0 0.0
      %2302 = vmatpush2.msra.mxu0 0.0
      %2303 = vmatprep.subr.mxu0 0.0
      %2304 = vmatpush2.msra.mxu0 0.0
      %2305 = vmatprep.subr.mxu0 0.0
      %2306 = vmatpush2.msra.mxu0 0.0
      %2307 = vmatprep.subr.mxu0 0.0
      %2308 = vmatpush2.msra.mxu0 0.0
      %2309 = vmatprep.subr.mxu0 0.0
      %2310 = vmatpush2.msra.mxu0 0.0
      %2311 = vmatprep.subr.mxu0 0.0
      %2312 = vmatpush2.msra.mxu0 0.0
      %2313 = vmatprep.subr.mxu0 0.0
      %2314 = vmatpush2.msra.mxu0 0.0
      %2315 = vmatprep.subr.mxu0 0.0
      %2316 = vmatpush2.msra.mxu0 0.0
      %2317 = vmatprep.subr.mxu0 0.0
      %2318 = vmatpush2.msra.mxu0 0.0
      %2319 = vmatprep.subr.mxu0 0.0
      %2320 = vmatpush2.msra.mxu0 0.0
      %2321 = vmatprep.mubr.f32.mxu0 0.0
      %2322 = vmatmul.mubr.f32.gmra.mxu0 %v2252
      %v2323 = vpop.f32.mrf.mxu0
      %v2324 = vadd.f32 0.0, %v2323
      %v2325 = vpop.f32.mrf.mxu0
      %2326 = vdwg.mxu0
      %v2327 = vadd.f32 %v2151, %v2324
      %s2328 = scalar_lea.vmem %s3, 2288
      %v2329 = vld [vmem:[%s2328] sm:$0xff]
      %v2330 = vld [vmem:[%s2328 + $0x8] sm:$0xff]
      %v2331 = vld [vmem:[%s2328 + $0x10] sm:$0xff]
      %v2332 = vld [vmem:[%s2328 + $0x18] sm:$0xff]
      %v2333 = vld [vmem:[%s2328 + $0x20] sm:$0xff]
      %v2334 = vld [vmem:[%s2328 + $0x28] sm:$0xff]
      %v2335 = vld [vmem:[%s2328 + $0x30] sm:$0xff]
      %v2336 = vld [vmem:[%s2328 + $0x38] sm:$0xff]
      %v2337 = vld [vmem:[%s2328 + $0x40] sm:$0xff]
      %v2338 = vld [vmem:[%s2328 + $0x48] sm:$0xff]
      %v2339 = vld [vmem:[%s2328 + $0x50] sm:$0xff]
      %v2340 = vld [vmem:[%s2328 + $0x58] sm:$0xff]
      %v2341 = vld [vmem:[%s2328 + $0x60] sm:$0xff]
      %v2342 = vld [vmem:[%s2328 + $0x68] sm:$0xff]
      %v2343 = vld [vmem:[%s2328 + $0x70] sm:$0xff]
      %v2344 = vld [vmem:[%s2328 + $0x78] sm:$0xff]
      %v2345 = vld [vmem:[%s2328 + $0x80] sm:$0xff]
      %v2346 = vld [vmem:[%s2328 + $0x88] sm:$0xff]
      %v2347 = vld [vmem:[%s2328 + $0x90] sm:$0xff]
      %v2348 = vld [vmem:[%s2328 + $0x98] sm:$0xff]
      %v2349 = vld [vmem:[%s2328 + $0xa0] sm:$0xff]
      %v2350 = vld [vmem:[%s2328 + $0xa8] sm:$0xff]
      %v2351 = vld [vmem:[%s2328 + $0xb0] sm:$0xff]
      %v2352 = vld [vmem:[%s2328 + $0xb8] sm:$0xff]
      %v2353 = vld [vmem:[%s2328 + $0xc0] sm:$0xff]
      %v2354 = vld [vmem:[%s2328 + $0xc8] sm:$0xff]
      %2355 = vmatprep.subr.mxu0 0.0
      %2356 = vmatpush1.msra.mxu0 %v2344
      %2357 = vmatprep.subr.mxu0 0.0
      %2358 = vmatpush1.msra.mxu0 %v2343
      %2359 = vmatprep.subr.mxu0 0.0
      %2360 = vmatpush1.msra.mxu0 %v2342
      %2361 = vmatprep.subr.mxu0 0.0
      %2362 = vmatpush1.msra.mxu0 %v2341
      %2363 = vmatprep.subr.mxu0 0.0
      %2364 = vmatpush1.msra.mxu0 %v2340
      %2365 = vmatprep.subr.mxu0 0.0
      %2366 = vmatpush1.msra.mxu0 %v2339
      %2367 = vmatprep.subr.mxu0 0.0
      %2368 = vmatpush1.msra.mxu0 %v2338
      %2369 = vmatprep.subr.mxu0 0.0
      %2370 = vmatpush1.msra.mxu0 %v2337
      %2371 = vmatprep.subr.mxu0 0.0
      %2372 = vmatpush1.msra.mxu0 %v2336
      %2373 = vmatprep.subr.mxu0 0.0
      %2374 = vmatpush1.msra.mxu0 %v2335
      %2375 = vmatprep.subr.mxu0 0.0
      %2376 = vmatpush1.msra.mxu0 %v2334
      %2377 = vmatprep.subr.mxu0 0.0
      %2378 = vmatpush1.msra.mxu0 %v2333
      %2379 = vmatprep.subr.mxu0 0.0
      %2380 = vmatpush1.msra.mxu0 %v2332
      %2381 = vmatprep.subr.mxu0 0.0
      %2382 = vmatpush1.msra.mxu0 %v2331
      %2383 = vmatprep.subr.mxu0 0.0
      %2384 = vmatpush1.msra.mxu0 %v2330
      %2385 = vmatprep.subr.mxu0 0.0
      %2386 = vmatpush1.msra.mxu0 %v2329
      %2387 = vmatprep.subr.mxu0 0.0
      %2388 = vmatpush2.msra.mxu0 0.0
      %2389 = vmatprep.subr.mxu0 0.0
      %2390 = vmatpush2.msra.mxu0 0.0
      %2391 = vmatprep.subr.mxu0 0.0
      %2392 = vmatpush2.msra.mxu0 0.0
      %2393 = vmatprep.subr.mxu0 0.0
      %2394 = vmatpush2.msra.mxu0 0.0
      %2395 = vmatprep.subr.mxu0 0.0
      %2396 = vmatpush2.msra.mxu0 0.0
      %2397 = vmatprep.subr.mxu0 0.0
      %2398 = vmatpush2.msra.mxu0 0.0
      %2399 = vmatprep.subr.mxu0 0.0
      %2400 = vmatpush2.msra.mxu0 %v2354
      %2401 = vmatprep.subr.mxu0 0.0
      %2402 = vmatpush2.msra.mxu0 %v2353
      %2403 = vmatprep.subr.mxu0 0.0
      %2404 = vmatpush2.msra.mxu0 %v2352
      %2405 = vmatprep.subr.mxu0 0.0
      %2406 = vmatpush2.msra.mxu0 %v2351
      %2407 = vmatprep.subr.mxu0 0.0
      %2408 = vmatpush2.msra.mxu0 %v2350
      %2409 = vmatprep.subr.mxu0 0.0
      %2410 = vmatpush2.msra.mxu0 %v2349
      %2411 = vmatprep.subr.mxu0 0.0
      %2412 = vmatpush2.msra.mxu0 %v2348
      %2413 = vmatprep.subr.mxu0 0.0
      %2414 = vmatpush2.msra.mxu0 %v2347
      %2415 = vmatprep.subr.mxu0 0.0
      %2416 = vmatpush2.msra.mxu0 %v2346
      %2417 = vmatprep.subr.mxu0 0.0
      %2418 = vmatpush2.msra.mxu0 %v2345
      %2419 = vmatprep.mubr.f32.mxu0 %v418
      %2420 = vmatmul.mubr.f32.gmra.mxu0 %v388
      %v2421 = vpop.f32.mrf.mxu0
      %v2422 = vadd.f32 0.0, %v2421
      %v2423 = vpop.f32.mrf.mxu0
      %2424 = vdwg.mxu0
      %s2425 = scalar_lea.vmem %s2, 88
      %v2426 = vld [vmem:[%s2425] sm:$0xff]
      %v2428 = vsel %vm590, %v2426, 0
      %v2431 = vsel %vm594, %v2422, 0
      %2433 = vmatprep.subr.mxu0 0.0
      %2434 = vmatpush1.msra.mxu0 0.0
      %2435 = vmatprep.subr.mxu0 0.0
      %2436 = vmatpush1.msra.mxu0 0.0
      %2437 = vmatprep.subr.mxu0 0.0
      %2438 = vmatpush1.msra.mxu0 0.0
      %2439 = vmatprep.subr.mxu0 0.0
      %2440 = vmatpush1.msra.mxu0 0.0
      %2441 = vmatprep.subr.mxu0 0.0
      %2442 = vmatpush1.msra.mxu0 0.0
      %2443 = vmatprep.subr.mxu0 0.0
      %2444 = vmatpush1.msra.mxu0 0.0
      %2445 = vmatprep.subr.mxu0 0.0
      %2446 = vmatpush1.msra.mxu0 0.0
      %2447 = vmatprep.subr.mxu0 0.0
      %2448 = vmatpush1.msra.mxu0 0.0
      %2449 = vmatprep.subr.mxu0 0.0
      %2450 = vmatpush1.msra.mxu0 0.0
      %2451 = vmatprep.subr.mxu0 0.0
      %2452 = vmatpush1.msra.mxu0 0.0
      %2453 = vmatprep.subr.mxu0 0.0
      %2454 = vmatpush1.msra.mxu0 0.0
      %2455 = vmatprep.subr.mxu0 0.0
      %2456 = vmatpush1.msra.mxu0 0.0
      %2457 = vmatprep.subr.mxu0 0.0
      %2458 = vmatpush1.msra.mxu0 0.0
      %2459 = vmatprep.subr.mxu0 0.0
      %2460 = vmatpush1.msra.mxu0 0.0
      %2461 = vmatprep.subr.mxu0 0.0
      %2462 = vmatpush1.msra.mxu0 0.0
      %2463 = vmatprep.subr.mxu0 0.0
      %2464 = vmatpush1.msra.mxu0 %v2431
      %2465 = vmatprep.subr.mxu0 0.0
      %2466 = vmatpush2.msra.mxu0 0.0
      %2467 = vmatprep.subr.mxu0 0.0
      %2468 = vmatpush2.msra.mxu0 0.0
      %2469 = vmatprep.subr.mxu0 0.0
      %2470 = vmatpush2.msra.mxu0 0.0
      %2471 = vmatprep.subr.mxu0 0.0
      %2472 = vmatpush2.msra.mxu0 0.0
      %2473 = vmatprep.subr.mxu0 0.0
      %2474 = vmatpush2.msra.mxu0 0.0
      %2475 = vmatprep.subr.mxu0 0.0
      %2476 = vmatpush2.msra.mxu0 0.0
      %2477 = vmatprep.subr.mxu0 0.0
      %2478 = vmatpush2.msra.mxu0 0.0
      %2479 = vmatprep.subr.mxu0 0.0
      %2480 = vmatpush2.msra.mxu0 0.0
      %2481 = vmatprep.subr.mxu0 0.0
      %2482 = vmatpush2.msra.mxu0 0.0
      %2483 = vmatprep.subr.mxu0 0.0
      %2484 = vmatpush2.msra.mxu0 0.0
      %2485 = vmatprep.subr.mxu0 0.0
      %2486 = vmatpush2.msra.mxu0 0.0
      %2487 = vmatprep.subr.mxu0 0.0
      %2488 = vmatpush2.msra.mxu0 0.0
      %2489 = vmatprep.subr.mxu0 0.0
      %2490 = vmatpush2.msra.mxu0 0.0
      %2491 = vmatprep.subr.mxu0 0.0
      %2492 = vmatpush2.msra.mxu0 0.0
      %2493 = vmatprep.subr.mxu0 0.0
      %2494 = vmatpush2.msra.mxu0 0.0
      %2495 = vmatprep.subr.mxu0 0.0
      %2496 = vmatpush2.msra.mxu0 0.0
      %2497 = vmatprep.mubr.f32.mxu0 0.0
      %2498 = vmatmul.mubr.f32.gmra.mxu0 %v2428
      %v2499 = vpop.f32.mrf.mxu0
      %v2500 = vadd.f32 0.0, %v2499
      %v2501 = vpop.f32.mrf.mxu0
      %2502 = vdwg.mxu0
      %v2503 = vadd.f32 %v2327, %v2500
      %s2504 = scalar_lea.vmem %s3, 2496
      %v2505 = vld [vmem:[%s2504] sm:$0xff]
      %v2506 = vld [vmem:[%s2504 + $0x8] sm:$0xff]
      %v2507 = vld [vmem:[%s2504 + $0x10] sm:$0xff]
      %v2508 = vld [vmem:[%s2504 + $0x18] sm:$0xff]
      %v2509 = vld [vmem:[%s2504 + $0x20] sm:$0xff]
      %v2510 = vld [vmem:[%s2504 + $0x28] sm:$0xff]
      %v2511 = vld [vmem:[%s2504 + $0x30] sm:$0xff]
      %v2512 = vld [vmem:[%s2504 + $0x38] sm:$0xff]
      %v2513 = vld [vmem:[%s2504 + $0x40] sm:$0xff]
      %v2514 = vld [vmem:[%s2504 + $0x48] sm:$0xff]
      %v2515 = vld [vmem:[%s2504 + $0x50] sm:$0xff]
      %v2516 = vld [vmem:[%s2504 + $0x58] sm:$0xff]
      %v2517 = vld [vmem:[%s2504 + $0x60] sm:$0xff]
      %v2518 = vld [vmem:[%s2504 + $0x68] sm:$0xff]
      %v2519 = vld [vmem:[%s2504 + $0x70] sm:$0xff]
      %v2520 = vld [vmem:[%s2504 + $0x78] sm:$0xff]
      %v2521 = vld [vmem:[%s2504 + $0x80] sm:$0xff]
      %v2522 = vld [vmem:[%s2504 + $0x88] sm:$0xff]
      %v2523 = vld [vmem:[%s2504 + $0x90] sm:$0xff]
      %v2524 = vld [vmem:[%s2504 + $0x98] sm:$0xff]
      %v2525 = vld [vmem:[%s2504 + $0xa0] sm:$0xff]
      %v2526 = vld [vmem:[%s2504 + $0xa8] sm:$0xff]
      %v2527 = vld [vmem:[%s2504 + $0xb0] sm:$0xff]
      %v2528 = vld [vmem:[%s2504 + $0xb8] sm:$0xff]
      %v2529 = vld [vmem:[%s2504 + $0xc0] sm:$0xff]
      %v2530 = vld [vmem:[%s2504 + $0xc8] sm:$0xff]
      %2531 = vmatprep.subr.mxu0 0.0
      %2532 = vmatpush1.msra.mxu0 %v2520
      %2533 = vmatprep.subr.mxu0 0.0
      %2534 = vmatpush1.msra.mxu0 %v2519
      %2535 = vmatprep.subr.mxu0 0.0
      %2536 = vmatpush1.msra.mxu0 %v2518
      %2537 = vmatprep.subr.mxu0 0.0
      %2538 = vmatpush1.msra.mxu0 %v2517
      %2539 = vmatprep.subr.mxu0 0.0
      %2540 = vmatpush1.msra.mxu0 %v2516
      %2541 = vmatprep.subr.mxu0 0.0
      %2542 = vmatpush1.msra.mxu0 %v2515
      %2543 = vmatprep.subr.mxu0 0.0
      %2544 = vmatpush1.msra.mxu0 %v2514
      %2545 = vmatprep.subr.mxu0 0.0
      %2546 = vmatpush1.msra.mxu0 %v2513
      %2547 = vmatprep.subr.mxu0 0.0
      %2548 = vmatpush1.msra.mxu0 %v2512
      %2549 = vmatprep.subr.mxu0 0.0
      %2550 = vmatpush1.msra.mxu0 %v2511
      %2551 = vmatprep.subr.mxu0 0.0
      %2552 = vmatpush1.msra.mxu0 %v2510
      %2553 = vmatprep.subr.mxu0 0.0
      %2554 = vmatpush1.msra.mxu0 %v2509
      %2555 = vmatprep.subr.mxu0 0.0
      %2556 = vmatpush1.msra.mxu0 %v2508
      %2557 = vmatprep.subr.mxu0 0.0
      %2558 = vmatpush1.msra.mxu0 %v2507
      %2559 = vmatprep.subr.mxu0 0.0
      %2560 = vmatpush1.msra.mxu0 %v2506
      %2561 = vmatprep.subr.mxu0 0.0
      %2562 = vmatpush1.msra.mxu0 %v2505
      %2563 = vmatprep.subr.mxu0 0.0
      %2564 = vmatpush2.msra.mxu0 0.0
      %2565 = vmatprep.subr.mxu0 0.0
      %2566 = vmatpush2.msra.mxu0 0.0
      %2567 = vmatprep.subr.mxu0 0.0
      %2568 = vmatpush2.msra.mxu0 0.0
      %2569 = vmatprep.subr.mxu0 0.0
      %2570 = vmatpush2.msra.mxu0 0.0
      %2571 = vmatprep.subr.mxu0 0.0
      %2572 = vmatpush2.msra.mxu0 0.0
      %2573 = vmatprep.subr.mxu0 0.0
      %2574 = vmatpush2.msra.mxu0 0.0
      %2575 = vmatprep.subr.mxu0 0.0
      %2576 = vmatpush2.msra.mxu0 %v2530
      %2577 = vmatprep.subr.mxu0 0.0
      %2578 = vmatpush2.msra.mxu0 %v2529
      %2579 = vmatprep.subr.mxu0 0.0
      %2580 = vmatpush2.msra.mxu0 %v2528
      %2581 = vmatprep.subr.mxu0 0.0
      %2582 = vmatpush2.msra.mxu0 %v2527
      %2583 = vmatprep.subr.mxu0 0.0
      %2584 = vmatpush2.msra.mxu0 %v2526
      %2585 = vmatprep.subr.mxu0 0.0
      %2586 = vmatpush2.msra.mxu0 %v2525
      %2587 = vmatprep.subr.mxu0 0.0
      %2588 = vmatpush2.msra.mxu0 %v2524
      %2589 = vmatprep.subr.mxu0 0.0
      %2590 = vmatpush2.msra.mxu0 %v2523
      %2591 = vmatprep.subr.mxu0 0.0
      %2592 = vmatpush2.msra.mxu0 %v2522
      %2593 = vmatprep.subr.mxu0 0.0
      %2594 = vmatpush2.msra.mxu0 %v2521
      %2595 = vmatprep.mubr.f32.mxu0 %v418
      %2596 = vmatmul.mubr.f32.gmra.mxu0 %v388
      %v2597 = vpop.f32.mrf.mxu0
      %v2598 = vadd.f32 0.0, %v2597
      %v2599 = vpop.f32.mrf.mxu0
      %2600 = vdwg.mxu0
      %s2601 = scalar_lea.vmem %s2, 96
      %v2602 = vld [vmem:[%s2601] sm:$0xff]
      %v2604 = vsel %vm590, %v2602, 0
      %v2607 = vsel %vm594, %v2598, 0
      %2609 = vmatprep.subr.mxu0 0.0
      %2610 = vmatpush1.msra.mxu0 0.0
      %2611 = vmatprep.subr.mxu0 0.0
      %2612 = vmatpush1.msra.mxu0 0.0
      %2613 = vmatprep.subr.mxu0 0.0
      %2614 = vmatpush1.msra.mxu0 0.0
      %2615 = vmatprep.subr.mxu0 0.0
      %2616 = vmatpush1.msra.mxu0 0.0
      %2617 = vmatprep.subr.mxu0 0.0
      %2618 = vmatpush1.msra.mxu0 0.0
      %2619 = vmatprep.subr.mxu0 0.0
      %2620 = vmatpush1.msra.mxu0 0.0
      %2621 = vmatprep.subr.mxu0 0.0
      %2622 = vmatpush1.msra.mxu0 0.0
      %2623 = vmatprep.subr.mxu0 0.0
      %2624 = vmatpush1.msra.mxu0 0.0
      %2625 = vmatprep.subr.mxu0 0.0
      %2626 = vmatpush1.msra.mxu0 0.0
      %2627 = vmatprep.subr.mxu0 0.0
      %2628 = vmatpush1.msra.mxu0 0.0
      %2629 = vmatprep.subr.mxu0 0.0
      %2630 = vmatpush1.msra.mxu0 0.0
      %2631 = vmatprep.subr.mxu0 0.0
      %2632 = vmatpush1.msra.mxu0 0.0
      %2633 = vmatprep.subr.mxu0 0.0
      %2634 = vmatpush1.msra.mxu0 0.0
      %2635 = vmatprep.subr.mxu0 0.0
      %2636 = vmatpush1.msra.mxu0 0.0
      %2637 = vmatprep.subr.mxu0 0.0
      %2638 = vmatpush1.msra.mxu0 0.0
      %2639 = vmatprep.subr.mxu0 0.0
      %2640 = vmatpush1.msra.mxu0 %v2607
      %2641 = vmatprep.subr.mxu0 0.0
      %2642 = vmatpush2.msra.mxu0 0.0
      %2643 = vmatprep.subr.mxu0 0.0
      %2644 = vmatpush2.msra.mxu0 0.0
      %2645 = vmatprep.subr.mxu0 0.0
      %2646 = vmatpush2.msra.mxu0 0.0
      %2647 = vmatprep.subr.mxu0 0.0
      %2648 = vmatpush2.msra.mxu0 0.0
      %2649 = vmatprep.subr.mxu0 0.0
      %2650 = vmatpush2.msra.mxu0 0.0
      %2651 = vmatprep.subr.mxu0 0.0
      %2652 = vmatpush2.msra.mxu0 0.0
      %2653 = vmatprep.subr.mxu0 0.0
      %2654 = vmatpush2.msra.mxu0 0.0
      %2655 = vmatprep.subr.mxu0 0.0
      %2656 = vmatpush2.msra.mxu0 0.0
      %2657 = vmatprep.subr.mxu0 0.0
      %2658 = vmatpush2.msra.mxu0 0.0
      %2659 = vmatprep.subr.mxu0 0.0
      %2660 = vmatpush2.msra.mxu0 0.0
      %2661 = vmatprep.subr.mxu0 0.0
      %2662 = vmatpush2.msra.mxu0 0.0
      %2663 = vmatprep.subr.mxu0 0.0
      %2664 = vmatpush2.msra.mxu0 0.0
      %2665 = vmatprep.subr.mxu0 0.0
      %2666 = vmatpush2.msra.mxu0 0.0
      %2667 = vmatprep.subr.mxu0 0.0
      %2668 = vmatpush2.msra.mxu0 0.0
      %2669 = vmatprep.subr.mxu0 0.0
      %2670 = vmatpush2.msra.mxu0 0.0
      %2671 = vmatprep.subr.mxu0 0.0
      %2672 = vmatpush2.msra.mxu0 0.0
      %2673 = vmatprep.mubr.f32.mxu0 0.0
      %2674 = vmatmul.mubr.f32.gmra.mxu0 %v2604
      %v2675 = vpop.f32.mrf.mxu0
      %v2676 = vadd.f32 0.0, %v2675
      %v2677 = vpop.f32.mrf.mxu0
      %2678 = vdwg.mxu0
      %v2679 = vadd.f32 %v2503, %v2676
      %s2680 = scalar_lea.vmem %s3, 2704
      %v2681 = vld [vmem:[%s2680] sm:$0xff]
      %v2682 = vld [vmem:[%s2680 + $0x8] sm:$0xff]
      %v2683 = vld [vmem:[%s2680 + $0x10] sm:$0xff]
      %v2684 = vld [vmem:[%s2680 + $0x18] sm:$0xff]
      %v2685 = vld [vmem:[%s2680 + $0x20] sm:$0xff]
      %v2686 = vld [vmem:[%s2680 + $0x28] sm:$0xff]
      %v2687 = vld [vmem:[%s2680 + $0x30] sm:$0xff]
      %v2688 = vld [vmem:[%s2680 + $0x38] sm:$0xff]
      %v2689 = vld [vmem:[%s2680 + $0x40] sm:$0xff]
      %v2690 = vld [vmem:[%s2680 + $0x48] sm:$0xff]
      %v2691 = vld [vmem:[%s2680 + $0x50] sm:$0xff]
      %v2692 = vld [vmem:[%s2680 + $0x58] sm:$0xff]
      %v2693 = vld [vmem:[%s2680 + $0x60] sm:$0xff]
      %v2694 = vld [vmem:[%s2680 + $0x68] sm:$0xff]
      %v2695 = vld [vmem:[%s2680 + $0x70] sm:$0xff]
      %v2696 = vld [vmem:[%s2680 + $0x78] sm:$0xff]
      %v2697 = vld [vmem:[%s2680 + $0x80] sm:$0xff]
      %v2698 = vld [vmem:[%s2680 + $0x88] sm:$0xff]
      %v2699 = vld [vmem:[%s2680 + $0x90] sm:$0xff]
      %v2700 = vld [vmem:[%s2680 + $0x98] sm:$0xff]
      %v2701 = vld [vmem:[%s2680 + $0xa0] sm:$0xff]
      %v2702 = vld [vmem:[%s2680 + $0xa8] sm:$0xff]
      %v2703 = vld [vmem:[%s2680 + $0xb0] sm:$0xff]
      %v2704 = vld [vmem:[%s2680 + $0xb8] sm:$0xff]
      %v2705 = vld [vmem:[%s2680 + $0xc0] sm:$0xff]
      %v2706 = vld [vmem:[%s2680 + $0xc8] sm:$0xff]
      %2707 = vmatprep.subr.mxu0 0.0
      %2708 = vmatpush1.msra.mxu0 %v2696
      %2709 = vmatprep.subr.mxu0 0.0
      %2710 = vmatpush1.msra.mxu0 %v2695
      %2711 = vmatprep.subr.mxu0 0.0
      %2712 = vmatpush1.msra.mxu0 %v2694
      %2713 = vmatprep.subr.mxu0 0.0
      %2714 = vmatpush1.msra.mxu0 %v2693
      %2715 = vmatprep.subr.mxu0 0.0
      %2716 = vmatpush1.msra.mxu0 %v2692
      %2717 = vmatprep.subr.mxu0 0.0
      %2718 = vmatpush1.msra.mxu0 %v2691
      %2719 = vmatprep.subr.mxu0 0.0
      %2720 = vmatpush1.msra.mxu0 %v2690
      %2721 = vmatprep.subr.mxu0 0.0
      %2722 = vmatpush1.msra.mxu0 %v2689
      %2723 = vmatprep.subr.mxu0 0.0
      %2724 = vmatpush1.msra.mxu0 %v2688
      %2725 = vmatprep.subr.mxu0 0.0
      %2726 = vmatpush1.msra.mxu0 %v2687
      %2727 = vmatprep.subr.mxu0 0.0
      %2728 = vmatpush1.msra.mxu0 %v2686
      %2729 = vmatprep.subr.mxu0 0.0
      %2730 = vmatpush1.msra.mxu0 %v2685
      %2731 = vmatprep.subr.mxu0 0.0
      %2732 = vmatpush1.msra.mxu0 %v2684
      %2733 = vmatprep.subr.mxu0 0.0
      %2734 = vmatpush1.msra.mxu0 %v2683
      %2735 = vmatprep.subr.mxu0 0.0
      %2736 = vmatpush1.msra.mxu0 %v2682
      %2737 = vmatprep.subr.mxu0 0.0
      %2738 = vmatpush1.msra.mxu0 %v2681
      %2739 = vmatprep.subr.mxu0 0.0
      %2740 = vmatpush2.msra.mxu0 0.0
      %2741 = vmatprep.subr.mxu0 0.0
      %2742 = vmatpush2.msra.mxu0 0.0
      %2743 = vmatprep.subr.mxu0 0.0
      %2744 = vmatpush2.msra.mxu0 0.0
      %2745 = vmatprep.subr.mxu0 0.0
      %2746 = vmatpush2.msra.mxu0 0.0
      %2747 = vmatprep.subr.mxu0 0.0
      %2748 = vmatpush2.msra.mxu0 0.0
      %2749 = vmatprep.subr.mxu0 0.0
      %2750 = vmatpush2.msra.mxu0 0.0
      %2751 = vmatprep.subr.mxu0 0.0
      %2752 = vmatpush2.msra.mxu0 %v2706
      %2753 = vmatprep.subr.mxu0 0.0
      %2754 = vmatpush2.msra.mxu0 %v2705
      %2755 = vmatprep.subr.mxu0 0.0
      %2756 = vmatpush2.msra.mxu0 %v2704
      %2757 = vmatprep.subr.mxu0 0.0
      %2758 = vmatpush2.msra.mxu0 %v2703
      %2759 = vmatprep.subr.mxu0 0.0
      %2760 = vmatpush2.msra.mxu0 %v2702
      %2761 = vmatprep.subr.mxu0 0.0
      %2762 = vmatpush2.msra.mxu0 %v2701
      %2763 = vmatprep.subr.mxu0 0.0
      %2764 = vmatpush2.msra.mxu0 %v2700
      %2765 = vmatprep.subr.mxu0 0.0
      %2766 = vmatpush2.msra.mxu0 %v2699
      %2767 = vmatprep.subr.mxu0 0.0
      %2768 = vmatpush2.msra.mxu0 %v2698
      %2769 = vmatprep.subr.mxu0 0.0
      %2770 = vmatpush2.msra.mxu0 %v2697
      %2771 = vmatprep.mubr.f32.mxu0 %v418
      %2772 = vmatmul.mubr.f32.gmra.mxu0 %v388
      %v2773 = vpop.f32.mrf.mxu0
      %v2774 = vadd.f32 0.0, %v2773
      %v2775 = vpop.f32.mrf.mxu0
      %2776 = vdwg.mxu0
      %s2777 = scalar_lea.vmem %s2, 104
      %v2778 = vld [vmem:[%s2777] sm:$0xff]
      %v2780 = vsel %vm590, %v2778, 0
      %v2783 = vsel %vm594, %v2774, 0
      %2785 = vmatprep.subr.mxu0 0.0
      %2786 = vmatpush1.msra.mxu0 0.0
      %2787 = vmatprep.subr.mxu0 0.0
      %2788 = vmatpush1.msra.mxu0 0.0
      %2789 = vmatprep.subr.mxu0 0.0
      %2790 = vmatpush1.msra.mxu0 0.0
      %2791 = vmatprep.subr.mxu0 0.0
      %2792 = vmatpush1.msra.mxu0 0.0
      %2793 = vmatprep.subr.mxu0 0.0
      %2794 = vmatpush1.msra.mxu0 0.0
      %2795 = vmatprep.subr.mxu0 0.0
      %2796 = vmatpush1.msra.mxu0 0.0
      %2797 = vmatprep.subr.mxu0 0.0
      %2798 = vmatpush1.msra.mxu0 0.0
      %2799 = vmatprep.subr.mxu0 0.0
      %2800 = vmatpush1.msra.mxu0 0.0
      %2801 = vmatprep.subr.mxu0 0.0
      %2802 = vmatpush1.msra.mxu0 0.0
      %2803 = vmatprep.subr.mxu0 0.0
      %2804 = vmatpush1.msra.mxu0 0.0
      %2805 = vmatprep.subr.mxu0 0.0
      %2806 = vmatpush1.msra.mxu0 0.0
      %2807 = vmatprep.subr.mxu0 0.0
      %2808 = vmatpush1.msra.mxu0 0.0
      %2809 = vmatprep.subr.mxu0 0.0
      %2810 = vmatpush1.msra.mxu0 0.0
      %2811 = vmatprep.subr.mxu0 0.0
      %2812 = vmatpush1.msra.mxu0 0.0
      %2813 = vmatprep.subr.mxu0 0.0
      %2814 = vmatpush1.msra.mxu0 0.0
      %2815 = vmatprep.subr.mxu0 0.0
      %2816 = vmatpush1.msra.mxu0 %v2783
      %2817 = vmatprep.subr.mxu0 0.0
      %2818 = vmatpush2.msra.mxu0 0.0
      %2819 = vmatprep.subr.mxu0 0.0
      %2820 = vmatpush2.msra.mxu0 0.0
      %2821 = vmatprep.subr.mxu0 0.0
      %2822 = vmatpush2.msra.mxu0 0.0
      %2823 = vmatprep.subr.mxu0 0.0
      %2824 = vmatpush2.msra.mxu0 0.0
      %2825 = vmatprep.subr.mxu0 0.0
      %2826 = vmatpush2.msra.mxu0 0.0
      %2827 = vmatprep.subr.mxu0 0.0
      %2828 = vmatpush2.msra.mxu0 0.0
      %2829 = vmatprep.subr.mxu0 0.0
      %2830 = vmatpush2.msra.mxu0 0.0
      %2831 = vmatprep.subr.mxu0 0.0
      %2832 = vmatpush2.msra.mxu0 0.0
      %2833 = vmatprep.subr.mxu0 0.0
      %2834 = vmatpush2.msra.mxu0 0.0
      %2835 = vmatprep.subr.mxu0 0.0
      %2836 = vmatpush2.msra.mxu0 0.0
      %2837 = vmatprep.subr.mxu0 0.0
      %2838 = vmatpush2.msra.mxu0 0.0
      %2839 = vmatprep.subr.mxu0 0.0
      %2840 = vmatpush2.msra.mxu0 0.0
      %2841 = vmatprep.subr.mxu0 0.0
      %2842 = vmatpush2.msra.mxu0 0.0
      %2843 = vmatprep.subr.mxu0 0.0
      %2844 = vmatpush2.msra.mxu0 0.0
      %2845 = vmatprep.subr.mxu0 0.0
      %2846 = vmatpush2.msra.mxu0 0.0
      %2847 = vmatprep.subr.mxu0 0.0
      %2848 = vmatpush2.msra.mxu0 0.0
      %2849 = vmatprep.mubr.f32.mxu0 0.0
      %2850 = vmatmul.mubr.f32.gmra.mxu0 %v2780
      %v2851 = vpop.f32.mrf.mxu0
      %v2852 = vadd.f32 0.0, %v2851
      %v2853 = vpop.f32.mrf.mxu0
      %2854 = vdwg.mxu0
      %v2855 = vadd.f32 %v2679, %v2852
      %s2856 = scalar_lea.vmem %s3, 2912
      %v2857 = vld [vmem:[%s2856] sm:$0xff]
      %v2858 = vld [vmem:[%s2856 + $0x8] sm:$0xff]
      %v2859 = vld [vmem:[%s2856 + $0x10] sm:$0xff]
      %v2860 = vld [vmem:[%s2856 + $0x18] sm:$0xff]
      %v2861 = vld [vmem:[%s2856 + $0x20] sm:$0xff]
      %v2862 = vld [vmem:[%s2856 + $0x28] sm:$0xff]
      %v2863 = vld [vmem:[%s2856 + $0x30] sm:$0xff]
      %v2864 = vld [vmem:[%s2856 + $0x38] sm:$0xff]
      %v2865 = vld [vmem:[%s2856 + $0x40] sm:$0xff]
      %v2866 = vld [vmem:[%s2856 + $0x48] sm:$0xff]
      %v2867 = vld [vmem:[%s2856 + $0x50] sm:$0xff]
      %v2868 = vld [vmem:[%s2856 + $0x58] sm:$0xff]
      %v2869 = vld [vmem:[%s2856 + $0x60] sm:$0xff]
      %v2870 = vld [vmem:[%s2856 + $0x68] sm:$0xff]
      %v2871 = vld [vmem:[%s2856 + $0x70] sm:$0xff]
      %v2872 = vld [vmem:[%s2856 + $0x78] sm:$0xff]
      %v2873 = vld [vmem:[%s2856 + $0x80] sm:$0xff]
      %v2874 = vld [vmem:[%s2856 + $0x88] sm:$0xff]
      %v2875 = vld [vmem:[%s2856 + $0x90] sm:$0xff]
      %v2876 = vld [vmem:[%s2856 + $0x98] sm:$0xff]
      %v2877 = vld [vmem:[%s2856 + $0xa0] sm:$0xff]
      %v2878 = vld [vmem:[%s2856 + $0xa8] sm:$0xff]
      %v2879 = vld [vmem:[%s2856 + $0xb0] sm:$0xff]
      %v2880 = vld [vmem:[%s2856 + $0xb8] sm:$0xff]
      %v2881 = vld [vmem:[%s2856 + $0xc0] sm:$0xff]
      %v2882 = vld [vmem:[%s2856 + $0xc8] sm:$0xff]
      %2883 = vmatprep.subr.mxu0 0.0
      %2884 = vmatpush1.msra.mxu0 %v2872
      %2885 = vmatprep.subr.mxu0 0.0
      %2886 = vmatpush1.msra.mxu0 %v2871
      %2887 = vmatprep.subr.mxu0 0.0
      %2888 = vmatpush1.msra.mxu0 %v2870
      %2889 = vmatprep.subr.mxu0 0.0
      %2890 = vmatpush1.msra.mxu0 %v2869
      %2891 = vmatprep.subr.mxu0 0.0
      %2892 = vmatpush1.msra.mxu0 %v2868
      %2893 = vmatprep.subr.mxu0 0.0
      %2894 = vmatpush1.msra.mxu0 %v2867
      %2895 = vmatprep.subr.mxu0 0.0
      %2896 = vmatpush1.msra.mxu0 %v2866
      %2897 = vmatprep.subr.mxu0 0.0
      %2898 = vmatpush1.msra.mxu0 %v2865
      %2899 = vmatprep.subr.mxu0 0.0
      %2900 = vmatpush1.msra.mxu0 %v2864
      %2901 = vmatprep.subr.mxu0 0.0
      %2902 = vmatpush1.msra.mxu0 %v2863
      %2903 = vmatprep.subr.mxu0 0.0
      %2904 = vmatpush1.msra.mxu0 %v2862
      %2905 = vmatprep.subr.mxu0 0.0
      %2906 = vmatpush1.msra.mxu0 %v2861
      %2907 = vmatprep.subr.mxu0 0.0
      %2908 = vmatpush1.msra.mxu0 %v2860
      %2909 = vmatprep.subr.mxu0 0.0
      %2910 = vmatpush1.msra.mxu0 %v2859
      %2911 = vmatprep.subr.mxu0 0.0
      %2912 = vmatpush1.msra.mxu0 %v2858
      %2913 = vmatprep.subr.mxu0 0.0
      %2914 = vmatpush1.msra.mxu0 %v2857
      %2915 = vmatprep.subr.mxu0 0.0
      %2916 = vmatpush2.msra.mxu0 0.0
      %2917 = vmatprep.subr.mxu0 0.0
      %2918 = vmatpush2.msra.mxu0 0.0
      %2919 = vmatprep.subr.mxu0 0.0
      %2920 = vmatpush2.msra.mxu0 0.0
      %2921 = vmatprep.subr.mxu0 0.0
      %2922 = vmatpush2.msra.mxu0 0.0
      %2923 = vmatprep.subr.mxu0 0.0
      %2924 = vmatpush2.msra.mxu0 0.0
      %2925 = vmatprep.subr.mxu0 0.0
      %2926 = vmatpush2.msra.mxu0 0.0
      %2927 = vmatprep.subr.mxu0 0.0
      %2928 = vmatpush2.msra.mxu0 %v2882
      %2929 = vmatprep.subr.mxu0 0.0
      %2930 = vmatpush2.msra.mxu0 %v2881
      %2931 = vmatprep.subr.mxu0 0.0
      %2932 = vmatpush2.msra.mxu0 %v2880
      %2933 = vmatprep.subr.mxu0 0.0
      %2934 = vmatpush2.msra.mxu0 %v2879
      %2935 = vmatprep.subr.mxu0 0.0
      %2936 = vmatpush2.msra.mxu0 %v2878
      %2937 = vmatprep.subr.mxu0 0.0
      %2938 = vmatpush2.msra.mxu0 %v2877
      %2939 = vmatprep.subr.mxu0 0.0
      %2940 = vmatpush2.msra.mxu0 %v2876
      %2941 = vmatprep.subr.mxu0 0.0
      %2942 = vmatpush2.msra.mxu0 %v2875
      %2943 = vmatprep.subr.mxu0 0.0
      %2944 = vmatpush2.msra.mxu0 %v2874
      %2945 = vmatprep.subr.mxu0 0.0
      %2946 = vmatpush2.msra.mxu0 %v2873
      %2947 = vmatprep.mubr.f32.mxu0 %v418
      %2948 = vmatmul.mubr.f32.gmra.mxu0 %v388
      %v2949 = vpop.f32.mrf.mxu0
      %v2950 = vadd.f32 0.0, %v2949
      %v2951 = vpop.f32.mrf.mxu0
      %2952 = vdwg.mxu0
      %s2953 = scalar_lea.vmem %s2, 112
      %v2954 = vld [vmem:[%s2953] sm:$0xff]
      %v2956 = vsel %vm590, %v2954, 0
      %v2959 = vsel %vm594, %v2950, 0
      %2961 = vmatprep.subr.mxu0 0.0
      %2962 = vmatpush1.msra.mxu0 0.0
      %2963 = vmatprep.subr.mxu0 0.0
      %2964 = vmatpush1.msra.mxu0 0.0
      %2965 = vmatprep.subr.mxu0 0.0
      %2966 = vmatpush1.msra.mxu0 0.0
      %2967 = vmatprep.subr.mxu0 0.0
      %2968 = vmatpush1.msra.mxu0 0.0
      %2969 = vmatprep.subr.mxu0 0.0
      %2970 = vmatpush1.msra.mxu0 0.0
      %2971 = vmatprep.subr.mxu0 0.0
      %2972 = vmatpush1.msra.mxu0 0.0
      %2973 = vmatprep.subr.mxu0 0.0
      %2974 = vmatpush1.msra.mxu0 0.0
      %2975 = vmatprep.subr.mxu0 0.0
      %2976 = vmatpush1.msra.mxu0 0.0
      %2977 = vmatprep.subr.mxu0 0.0
      %2978 = vmatpush1.msra.mxu0 0.0
      %2979 = vmatprep.subr.mxu0 0.0
      %2980 = vmatpush1.msra.mxu0 0.0
      %2981 = vmatprep.subr.mxu0 0.0
      %2982 = vmatpush1.msra.mxu0 0.0
      %2983 = vmatprep.subr.mxu0 0.0
      %2984 = vmatpush1.msra.mxu0 0.0
      %2985 = vmatprep.subr.mxu0 0.0
      %2986 = vmatpush1.msra.mxu0 0.0
      %2987 = vmatprep.subr.mxu0 0.0
      %2988 = vmatpush1.msra.mxu0 0.0
      %2989 = vmatprep.subr.mxu0 0.0
      %2990 = vmatpush1.msra.mxu0 0.0
      %2991 = vmatprep.subr.mxu0 0.0
      %2992 = vmatpush1.msra.mxu0 %v2959
      %2993 = vmatprep.subr.mxu0 0.0
      %2994 = vmatpush2.msra.mxu0 0.0
      %2995 = vmatprep.subr.mxu0 0.0
      %2996 = vmatpush2.msra.mxu0 0.0
      %2997 = vmatprep.subr.mxu0 0.0
      %2998 = vmatpush2.msra.mxu0 0.0
      %2999 = vmatprep.subr.mxu0 0.0
      %3000 = vmatpush2.msra.mxu0 0.0
      %3001 = vmatprep.subr.mxu0 0.0
      %3002 = vmatpush2.msra.mxu0 0.0
      %3003 = vmatprep.subr.mxu0 0.0
      %3004 = vmatpush2.msra.mxu0 0.0
      %3005 = vmatprep.subr.mxu0 0.0
      %3006 = vmatpush2.msra.mxu0 0.0
      %3007 = vmatprep.subr.mxu0 0.0
      %3008 = vmatpush2.msra.mxu0 0.0
      %3009 = vmatprep.subr.mxu0 0.0
      %3010 = vmatpush2.msra.mxu0 0.0
      %3011 = vmatprep.subr.mxu0 0.0
      %3012 = vmatpush2.msra.mxu0 0.0
      %3013 = vmatprep.subr.mxu0 0.0
      %3014 = vmatpush2.msra.mxu0 0.0
      %3015 = vmatprep.subr.mxu0 0.0
      %3016 = vmatpush2.msra.mxu0 0.0
      %3017 = vmatprep.subr.mxu0 0.0
      %3018 = vmatpush2.msra.mxu0 0.0
      %3019 = vmatprep.subr.mxu0 0.0
      %3020 = vmatpush2.msra.mxu0 0.0
      %3021 = vmatprep.subr.mxu0 0.0
      %3022 = vmatpush2.msra.mxu0 0.0
      %3023 = vmatprep.subr.mxu0 0.0
      %3024 = vmatpush2.msra.mxu0 0.0
      %3025 = vmatprep.mubr.f32.mxu0 0.0
      %3026 = vmatmul.mubr.f32.gmra.mxu0 %v2956
      %v3027 = vpop.f32.mrf.mxu0
      %v3028 = vadd.f32 0.0, %v3027
      %v3029 = vpop.f32.mrf.mxu0
      %3030 = vdwg.mxu0
      %v3031 = vadd.f32 %v2855, %v3028
      %s3032 = scalar_lea.vmem %s3, 3120
      %v3033 = vld [vmem:[%s3032] sm:$0xff]
      %v3034 = vld [vmem:[%s3032 + $0x8] sm:$0xff]
      %v3035 = vld [vmem:[%s3032 + $0x10] sm:$0xff]
      %v3036 = vld [vmem:[%s3032 + $0x18] sm:$0xff]
      %v3037 = vld [vmem:[%s3032 + $0x20] sm:$0xff]
      %v3038 = vld [vmem:[%s3032 + $0x28] sm:$0xff]
      %v3039 = vld [vmem:[%s3032 + $0x30] sm:$0xff]
      %v3040 = vld [vmem:[%s3032 + $0x38] sm:$0xff]
      %v3041 = vld [vmem:[%s3032 + $0x40] sm:$0xff]
      %v3042 = vld [vmem:[%s3032 + $0x48] sm:$0xff]
      %v3043 = vld [vmem:[%s3032 + $0x50] sm:$0xff]
      %v3044 = vld [vmem:[%s3032 + $0x58] sm:$0xff]
      %v3045 = vld [vmem:[%s3032 + $0x60] sm:$0xff]
      %v3046 = vld [vmem:[%s3032 + $0x68] sm:$0xff]
      %v3047 = vld [vmem:[%s3032 + $0x70] sm:$0xff]
      %v3048 = vld [vmem:[%s3032 + $0x78] sm:$0xff]
      %v3049 = vld [vmem:[%s3032 + $0x80] sm:$0xff]
      %v3050 = vld [vmem:[%s3032 + $0x88] sm:$0xff]
      %v3051 = vld [vmem:[%s3032 + $0x90] sm:$0xff]
      %v3052 = vld [vmem:[%s3032 + $0x98] sm:$0xff]
      %v3053 = vld [vmem:[%s3032 + $0xa0] sm:$0xff]
      %v3054 = vld [vmem:[%s3032 + $0xa8] sm:$0xff]
      %v3055 = vld [vmem:[%s3032 + $0xb0] sm:$0xff]
      %v3056 = vld [vmem:[%s3032 + $0xb8] sm:$0xff]
      %v3057 = vld [vmem:[%s3032 + $0xc0] sm:$0xff]
      %v3058 = vld [vmem:[%s3032 + $0xc8] sm:$0xff]
      %3059 = vmatprep.subr.mxu0 0.0
      %3060 = vmatpush1.msra.mxu0 %v3048
      %3061 = vmatprep.subr.mxu0 0.0
      %3062 = vmatpush1.msra.mxu0 %v3047
      %3063 = vmatprep.subr.mxu0 0.0
      %3064 = vmatpush1.msra.mxu0 %v3046
      %3065 = vmatprep.subr.mxu0 0.0
      %3066 = vmatpush1.msra.mxu0 %v3045
      %3067 = vmatprep.subr.mxu0 0.0
      %3068 = vmatpush1.msra.mxu0 %v3044
      %3069 = vmatprep.subr.mxu0 0.0
      %3070 = vmatpush1.msra.mxu0 %v3043
      %3071 = vmatprep.subr.mxu0 0.0
      %3072 = vmatpush1.msra.mxu0 %v3042
      %3073 = vmatprep.subr.mxu0 0.0
      %3074 = vmatpush1.msra.mxu0 %v3041
      %3075 = vmatprep.subr.mxu0 0.0
      %3076 = vmatpush1.msra.mxu0 %v3040
      %3077 = vmatprep.subr.mxu0 0.0
      %3078 = vmatpush1.msra.mxu0 %v3039
      %3079 = vmatprep.subr.mxu0 0.0
      %3080 = vmatpush1.msra.mxu0 %v3038
      %3081 = vmatprep.subr.mxu0 0.0
      %3082 = vmatpush1.msra.mxu0 %v3037
      %3083 = vmatprep.subr.mxu0 0.0
      %3084 = vmatpush1.msra.mxu0 %v3036
      %3085 = vmatprep.subr.mxu0 0.0
      %3086 = vmatpush1.msra.mxu0 %v3035
      %3087 = vmatprep.subr.mxu0 0.0
      %3088 = vmatpush1.msra.mxu0 %v3034
      %3089 = vmatprep.subr.mxu0 0.0
      %3090 = vmatpush1.msra.mxu0 %v3033
      %3091 = vmatprep.subr.mxu0 0.0
      %3092 = vmatpush2.msra.mxu0 0.0
      %3093 = vmatprep.subr.mxu0 0.0
      %3094 = vmatpush2.msra.mxu0 0.0
      %3095 = vmatprep.subr.mxu0 0.0
      %3096 = vmatpush2.msra.mxu0 0.0
      %3097 = vmatprep.subr.mxu0 0.0
      %3098 = vmatpush2.msra.mxu0 0.0
      %3099 = vmatprep.subr.mxu0 0.0
      %3100 = vmatpush2.msra.mxu0 0.0
      %3101 = vmatprep.subr.mxu0 0.0
      %3102 = vmatpush2.msra.mxu0 0.0
      %3103 = vmatprep.subr.mxu0 0.0
      %3104 = vmatpush2.msra.mxu0 %v3058
      %3105 = vmatprep.subr.mxu0 0.0
      %3106 = vmatpush2.msra.mxu0 %v3057
      %3107 = vmatprep.subr.mxu0 0.0
      %3108 = vmatpush2.msra.mxu0 %v3056
      %3109 = vmatprep.subr.mxu0 0.0
      %3110 = vmatpush2.msra.mxu0 %v3055
      %3111 = vmatprep.subr.mxu0 0.0
      %3112 = vmatpush2.msra.mxu0 %v3054
      %3113 = vmatprep.subr.mxu0 0.0
      %3114 = vmatpush2.msra.mxu0 %v3053
      %3115 = vmatprep.subr.mxu0 0.0
      %3116 = vmatpush2.msra.mxu0 %v3052
      %3117 = vmatprep.subr.mxu0 0.0
      %3118 = vmatpush2.msra.mxu0 %v3051
      %3119 = vmatprep.subr.mxu0 0.0
      %3120 = vmatpush2.msra.mxu0 %v3050
      %3121 = vmatprep.subr.mxu0 0.0
      %3122 = vmatpush2.msra.mxu0 %v3049
      %3123 = vmatprep.mubr.f32.mxu0 %v418
      %3124 = vmatmul.mubr.f32.gmra.mxu0 %v388
      %v3125 = vpop.f32.mrf.mxu0
      %v3126 = vadd.f32 0.0, %v3125
      %v3127 = vpop.f32.mrf.mxu0
      %3128 = vdwg.mxu0
      %s3129 = scalar_lea.vmem %s2, 120
      %v3130 = vld [vmem:[%s3129] sm:$0xff]
      %v3132 = vsel %vm590, %v3130, 0
      %v3135 = vsel %vm594, %v3126, 0
      %3137 = vmatprep.subr.mxu0 0.0
      %3138 = vmatpush1.msra.mxu0 0.0
      %3139 = vmatprep.subr.mxu0 0.0
      %3140 = vmatpush1.msra.mxu0 0.0
      %3141 = vmatprep.subr.mxu0 0.0
      %3142 = vmatpush1.msra.mxu0 0.0
      %3143 = vmatprep.subr.mxu0 0.0
      %3144 = vmatpush1.msra.mxu0 0.0
      %3145 = vmatprep.subr.mxu0 0.0
      %3146 = vmatpush1.msra.mxu0 0.0
      %3147 = vmatprep.subr.mxu0 0.0
      %3148 = vmatpush1.msra.mxu0 0.0
      %3149 = vmatprep.subr.mxu0 0.0
      %3150 = vmatpush1.msra.mxu0 0.0
      %3151 = vmatprep.subr.mxu0 0.0
      %3152 = vmatpush1.msra.mxu0 0.0
      %3153 = vmatprep.subr.mxu0 0.0
      %3154 = vmatpush1.msra.mxu0 0.0
      %3155 = vmatprep.subr.mxu0 0.0
      %3156 = vmatpush1.msra.mxu0 0.0
      %3157 = vmatprep.subr.mxu0 0.0
      %3158 = vmatpush1.msra.mxu0 0.0
      %3159 = vmatprep.subr.mxu0 0.0
      %3160 = vmatpush1.msra.mxu0 0.0
      %3161 = vmatprep.subr.mxu0 0.0
      %3162 = vmatpush1.msra.mxu0 0.0
      %3163 = vmatprep.subr.mxu0 0.0
      %3164 = vmatpush1.msra.mxu0 0.0
      %3165 = vmatprep.subr.mxu0 0.0
      %3166 = vmatpush1.msra.mxu0 0.0
      %3167 = vmatprep.subr.mxu0 0.0
      %3168 = vmatpush1.msra.mxu0 %v3135
      %3169 = vmatprep.subr.mxu0 0.0
      %3170 = vmatpush2.msra.mxu0 0.0
      %3171 = vmatprep.subr.mxu0 0.0
      %3172 = vmatpush2.msra.mxu0 0.0
      %3173 = vmatprep.subr.mxu0 0.0
      %3174 = vmatpush2.msra.mxu0 0.0
      %3175 = vmatprep.subr.mxu0 0.0
      %3176 = vmatpush2.msra.mxu0 0.0
      %3177 = vmatprep.subr.mxu0 0.0
      %3178 = vmatpush2.msra.mxu0 0.0
      %3179 = vmatprep.subr.mxu0 0.0
      %3180 = vmatpush2.msra.mxu0 0.0
      %3181 = vmatprep.subr.mxu0 0.0
      %3182 = vmatpush2.msra.mxu0 0.0
      %3183 = vmatprep.subr.mxu0 0.0
      %3184 = vmatpush2.msra.mxu0 0.0
      %3185 = vmatprep.subr.mxu0 0.0
      %3186 = vmatpush2.msra.mxu0 0.0
      %3187 = vmatprep.subr.mxu0 0.0
      %3188 = vmatpush2.msra.mxu0 0.0
      %3189 = vmatprep.subr.mxu0 0.0
      %3190 = vmatpush2.msra.mxu0 0.0
      %3191 = vmatprep.subr.mxu0 0.0
      %3192 = vmatpush2.msra.mxu0 0.0
      %3193 = vmatprep.subr.mxu0 0.0
      %3194 = vmatpush2.msra.mxu0 0.0
      %3195 = vmatprep.subr.mxu0 0.0
      %3196 = vmatpush2.msra.mxu0 0.0
      %3197 = vmatprep.subr.mxu0 0.0
      %3198 = vmatpush2.msra.mxu0 0.0
      %3199 = vmatprep.subr.mxu0 0.0
      %3200 = vmatpush2.msra.mxu0 0.0
      %3201 = vmatprep.mubr.f32.mxu0 0.0
      %3202 = vmatmul.mubr.f32.gmra.mxu0 %v3132
      %v3203 = vpop.f32.mrf.mxu0
      %v3204 = vadd.f32 0.0, %v3203
      %v3205 = vpop.f32.mrf.mxu0
      %3206 = vdwg.mxu0
      %v3207 = vadd.f32 %v3031, %v3204
      %vm3208 = vcmask 424960
      %v3209 = vsel %vm3208, %v3207, 0.0
      %3210 = vadd.xlane.f32.xlu0 %v3209
      %v3211 = vpop.xlane.xlu0 %3210
      %v3212 = vrcp.pop 52.0
      %v3213 = vmul.f32 %v3211, %v3212
      %v3214 = vmul.f32 %v3207, %v3207
      %v3215 = vsel %vm3208, %v3214, 0.0
      %3216 = vadd.xlane.f32.xlu0 %v3215
      %v3217 = vpop.xlane.xlu0 %3216
      %v3218 = vmul.f32 %v3217, %v3212
      %v3219 = vmul.f32 %v3213, %v3213
      %v3220 = vsub.f32 %v3218, %v3219
      %v3221 = vmax.f32 %v3220, 0.0
      %v3222 = vsub.f32 %v3207, %v3213
      %v3223 = vadd.f32 %v3221, 1e-05
      %v3224 = vrsqrt.pop %v3223
      %v3225 = vmul.f32 %v3222, %v3224
      %vm3226 = vcmp.ge.f32.partialorder %v3225, 0.0
      %v3227 = vmul.f32 %v3225, 0.2
      %v3228 = vsel %vm3226, %v3225, %v3227
      %v3229 = vld [vmem:[%s5] sm:$0xff]
      %v3230 = vld [vmem:[%s5 + $0x8] sm:$0xff]
      %v3231 = vld [vmem:[%s5 + $0x10] sm:$0xff]
      %v3232 = vld [vmem:[%s5 + $0x18] sm:$0xff]
      %v3233 = vld [vmem:[%s5 + $0x20] sm:$0xff]
      %v3234 = vld [vmem:[%s5 + $0x28] sm:$0xff]
      %v3235 = vld [vmem:[%s5 + $0x30] sm:$0xf]
      %v3237 = vsel %vm3208, %v3228, 0
      %v3240 = vsel %vm594, %v3235, 0
      %3242 = vmatprep.subr.mxu0 0.0
      %3243 = vmatpush1.msra.mxu0 0.0
      %3244 = vmatprep.subr.mxu0 0.0
      %3245 = vmatpush1.msra.mxu0 0.0
      %3246 = vmatprep.subr.mxu0 0.0
      %3247 = vmatpush1.msra.mxu0 0.0
      %3248 = vmatprep.subr.mxu0 0.0
      %3249 = vmatpush1.msra.mxu0 0.0
      %3250 = vmatprep.subr.mxu0 0.0
      %3251 = vmatpush1.msra.mxu0 0.0
      %3252 = vmatprep.subr.mxu0 0.0
      %3253 = vmatpush1.msra.mxu0 0.0
      %3254 = vmatprep.subr.mxu0 0.0
      %3255 = vmatpush1.msra.mxu0 0.0
      %3256 = vmatprep.subr.mxu0 0.0
      %3257 = vmatpush1.msra.mxu0 0.0
      %3258 = vmatprep.subr.mxu0 0.0
      %3259 = vmatpush1.msra.mxu0 0.0
      %3260 = vmatprep.subr.mxu0 0.0
      %3261 = vmatpush1.msra.mxu0 %v3240
      %3262 = vmatprep.subr.mxu0 0.0
      %3263 = vmatpush1.msra.mxu0 %v3234
      %3264 = vmatprep.subr.mxu0 0.0
      %3265 = vmatpush1.msra.mxu0 %v3233
      %3266 = vmatprep.subr.mxu0 0.0
      %3267 = vmatpush1.msra.mxu0 %v3232
      %3268 = vmatprep.subr.mxu0 0.0
      %3269 = vmatpush1.msra.mxu0 %v3231
      %3270 = vmatprep.subr.mxu0 0.0
      %3271 = vmatpush1.msra.mxu0 %v3230
      %3272 = vmatprep.subr.mxu0 0.0
      %3273 = vmatpush1.msra.mxu0 %v3229
      %3274 = vmatprep.subr.mxu0 0.0
      %3275 = vmatpush2.msra.mxu0 0.0
      %3276 = vmatprep.subr.mxu0 0.0
      %3277 = vmatpush2.msra.mxu0 0.0
      %3278 = vmatprep.subr.mxu0 0.0
      %3279 = vmatpush2.msra.mxu0 0.0
      %3280 = vmatprep.subr.mxu0 0.0
      %3281 = vmatpush2.msra.mxu0 0.0
      %3282 = vmatprep.subr.mxu0 0.0
      %3283 = vmatpush2.msra.mxu0 0.0
      %3284 = vmatprep.subr.mxu0 0.0
      %3285 = vmatpush2.msra.mxu0 0.0
      %3286 = vmatprep.subr.mxu0 0.0
      %3287 = vmatpush2.msra.mxu0 0.0
      %3288 = vmatprep.subr.mxu0 0.0
      %3289 = vmatpush2.msra.mxu0 0.0
      %3290 = vmatprep.subr.mxu0 0.0
      %3291 = vmatpush2.msra.mxu0 0.0
      %3292 = vmatprep.subr.mxu0 0.0
      %3293 = vmatpush2.msra.mxu0 0.0
      %3294 = vmatprep.subr.mxu0 0.0
      %3295 = vmatpush2.msra.mxu0 0.0
      %3296 = vmatprep.subr.mxu0 0.0
      %3297 = vmatpush2.msra.mxu0 0.0
      %3298 = vmatprep.subr.mxu0 0.0
      %3299 = vmatpush2.msra.mxu0 0.0
      %3300 = vmatprep.subr.mxu0 0.0
      %3301 = vmatpush2.msra.mxu0 0.0
      %3302 = vmatprep.subr.mxu0 0.0
      %3303 = vmatpush2.msra.mxu0 0.0
      %3304 = vmatprep.subr.mxu0 0.0
      %3305 = vmatpush2.msra.mxu0 0.0
      %3306 = vmatprep.mubr.f32.mxu0 0.0
      %3307 = vmatmul.mubr.f32.gmra.mxu0 %v3237
      %v3308 = vpop.f32.mrf.mxu0
      %v3309 = vadd.f32 0.0, %v3308
      %v3310 = vpop.f32.mrf.mxu0
      %3311 = vdwg.mxu0
      %v3312 = vld [vmem:[%s4] sm:$0xff]
      %v3313 = vld [vmem:[%s4 + $0x8] sm:$0xff]
      %s3314 = scalar_lea.vmem %s5, 56
      %v3315 = vld [vmem:[%s3314] sm:$0xff]
      %v3316 = vld [vmem:[%s3314 + $0x8] sm:$0xff]
      %v3317 = vld [vmem:[%s3314 + $0x10] sm:$0xff]
      %v3318 = vld [vmem:[%s3314 + $0x18] sm:$0xff]
      %v3319 = vld [vmem:[%s3314 + $0x20] sm:$0xff]
      %v3320 = vld [vmem:[%s3314 + $0x28] sm:$0xff]
      %v3321 = vld [vmem:[%s3314 + $0x30] sm:$0xf]
      %v3323 = vsel %vm594, %v3321, 0
      %3325 = vmatprep.subr.mxu0 0.0
      %3326 = vmatpush1.msra.mxu0 0.0
      %3327 = vmatprep.subr.mxu0 0.0
      %3328 = vmatpush1.msra.mxu0 0.0
      %3329 = vmatprep.subr.mxu0 0.0
      %3330 = vmatpush1.msra.mxu0 0.0
      %3331 = vmatprep.subr.mxu0 0.0
      %3332 = vmatpush1.msra.mxu0 0.0
      %3333 = vmatprep.subr.mxu0 0.0
      %3334 = vmatpush1.msra.mxu0 0.0
      %3335 = vmatprep.subr.mxu0 0.0
      %3336 = vmatpush1.msra.mxu0 0.0
      %3337 = vmatprep.subr.mxu0 0.0
      %3338 = vmatpush1.msra.mxu0 0.0
      %3339 = vmatprep.subr.mxu0 0.0
      %3340 = vmatpush1.msra.mxu0 0.0
      %3341 = vmatprep.subr.mxu0 0.0
      %3342 = vmatpush1.msra.mxu0 0.0
      %3343 = vmatprep.subr.mxu0 0.0
      %3344 = vmatpush1.msra.mxu0 %v3323
      %3345 = vmatprep.subr.mxu0 0.0
      %3346 = vmatpush1.msra.mxu0 %v3320
      %3347 = vmatprep.subr.mxu0 0.0
      %3348 = vmatpush1.msra.mxu0 %v3319
      %3349 = vmatprep.subr.mxu0 0.0
      %3350 = vmatpush1.msra.mxu0 %v3318
      %3351 = vmatprep.subr.mxu0 0.0
      %3352 = vmatpush1.msra.mxu0 %v3317
      %3353 = vmatprep.subr.mxu0 0.0
      %3354 = vmatpush1.msra.mxu0 %v3316
      %3355 = vmatprep.subr.mxu0 0.0
      %3356 = vmatpush1.msra.mxu0 %v3315
      %3357 = vmatprep.subr.mxu0 0.0
      %3358 = vmatpush2.msra.mxu0 0.0
      %3359 = vmatprep.subr.mxu0 0.0
      %3360 = vmatpush2.msra.mxu0 0.0
      %3361 = vmatprep.subr.mxu0 0.0
      %3362 = vmatpush2.msra.mxu0 0.0
      %3363 = vmatprep.subr.mxu0 0.0
      %3364 = vmatpush2.msra.mxu0 0.0
      %3365 = vmatprep.subr.mxu0 0.0
      %3366 = vmatpush2.msra.mxu0 0.0
      %3367 = vmatprep.subr.mxu0 0.0
      %3368 = vmatpush2.msra.mxu0 0.0
      %3369 = vmatprep.subr.mxu0 0.0
      %3370 = vmatpush2.msra.mxu0 0.0
      %3371 = vmatprep.subr.mxu0 0.0
      %3372 = vmatpush2.msra.mxu0 0.0
      %3373 = vmatprep.subr.mxu0 0.0
      %3374 = vmatpush2.msra.mxu0 0.0
      %3375 = vmatprep.subr.mxu0 0.0
      %3376 = vmatpush2.msra.mxu0 0.0
      %3377 = vmatprep.subr.mxu0 0.0
      %3378 = vmatpush2.msra.mxu0 0.0
      %3379 = vmatprep.subr.mxu0 0.0
      %3380 = vmatpush2.msra.mxu0 0.0
      %3381 = vmatprep.subr.mxu0 0.0
      %3382 = vmatpush2.msra.mxu0 0.0
      %3383 = vmatprep.subr.mxu0 0.0
      %3384 = vmatpush2.msra.mxu0 0.0
      %3385 = vmatprep.subr.mxu0 0.0
      %3386 = vmatpush2.msra.mxu0 0.0
      %3387 = vmatprep.subr.mxu0 0.0
      %3388 = vmatpush2.msra.mxu0 0.0
      %3389 = vmatprep.mubr.f32.mxu0 0.0
      %3390 = vmatmul.mubr.f32.gmra.mxu0 %v3237
      %v3391 = vpop.f32.mrf.mxu0
      %v3392 = vadd.f32 0.0, %v3391
      %v3393 = vpop.f32.mrf.mxu0
      %3394 = vdwg.mxu0
      %s3395 = scalar_lea.vmem %s4, 16
      %v3396 = vld [vmem:[%s3395] sm:$0xff]
      %v3397 = vld [vmem:[%s3395 + $0x8] sm:$0xff]
      %vm3398 = vcmask 64512
      %v3400 = vsel %vm3398, %v3396, 0
      %v3403 = vsel %vm3398, %v3397, 0
      %3405 = vmatprep.subr.mxu0 0.0
      %3406 = vmatpush1.msra.mxu0 0.0
      %3407 = vmatprep.subr.mxu0 0.0
      %3408 = vmatpush1.msra.mxu0 0.0
      %3409 = vmatprep.subr.mxu0 0.0
      %3410 = vmatpush1.msra.mxu0 0.0
      %3411 = vmatprep.subr.mxu0 0.0
      %3412 = vmatpush1.msra.mxu0 0.0
      %3413 = vmatprep.subr.mxu0 0.0
      %3414 = vmatpush1.msra.mxu0 0.0
      %3415 = vmatprep.subr.mxu0 0.0
      %3416 = vmatpush1.msra.mxu0 0.0
      %3417 = vmatprep.subr.mxu0 0.0
      %3418 = vmatpush1.msra.mxu0 0.0
      %3419 = vmatprep.subr.mxu0 0.0
      %3420 = vmatpush1.msra.mxu0 0.0
      %3421 = vmatprep.subr.mxu0 0.0
      %3422 = vmatpush1.msra.mxu0 0.0
      %3423 = vmatprep.subr.mxu0 0.0
      %3424 = vmatpush1.msra.mxu0 0.0
      %3425 = vmatprep.subr.mxu0 0.0
      %3426 = vmatpush1.msra.mxu0 0.0
      %3427 = vmatprep.subr.mxu0 0.0
      %3428 = vmatpush1.msra.mxu0 0.0
      %3429 = vmatprep.subr.mxu0 0.0
      %3430 = vmatpush1.msra.mxu0 0.0
      %3431 = vmatprep.subr.mxu0 0.0
      %3432 = vmatpush1.msra.mxu0 0.0
      %3433 = vmatprep.subr.mxu0 0.0
      %3434 = vmatpush1.msra.mxu0 0.0
      %3435 = vmatprep.subr.mxu0 0.0
      %3436 = vmatpush1.msra.mxu0 %v3392
      %3437 = vmatprep.subr.mxu0 0.0
      %3438 = vmatpush2.msra.mxu0 0.0
      %3439 = vmatprep.subr.mxu0 0.0
      %3440 = vmatpush2.msra.mxu0 0.0
      %3441 = vmatprep.subr.mxu0 0.0
      %3442 = vmatpush2.msra.mxu0 0.0
      %3443 = vmatprep.subr.mxu0 0.0
      %3444 = vmatpush2.msra.mxu0 0.0
      %3445 = vmatprep.subr.mxu0 0.0
      %3446 = vmatpush2.msra.mxu0 0.0
      %3447 = vmatprep.subr.mxu0 0.0
      %3448 = vmatpush2.msra.mxu0 0.0
      %3449 = vmatprep.subr.mxu0 0.0
      %3450 = vmatpush2.msra.mxu0 0.0
      %3451 = vmatprep.subr.mxu0 0.0
      %3452 = vmatpush2.msra.mxu0 0.0
      %3453 = vmatprep.subr.mxu0 0.0
      %3454 = vmatpush2.msra.mxu0 0.0
      %3455 = vmatprep.subr.mxu0 0.0
      %3456 = vmatpush2.msra.mxu0 0.0
      %3457 = vmatprep.subr.mxu0 0.0
      %3458 = vmatpush2.msra.mxu0 0.0
      %3459 = vmatprep.subr.mxu0 0.0
      %3460 = vmatpush2.msra.mxu0 0.0
      %3461 = vmatprep.subr.mxu0 0.0
      %3462 = vmatpush2.msra.mxu0 0.0
      %3463 = vmatprep.subr.mxu0 0.0
      %3464 = vmatpush2.msra.mxu0 0.0
      %3465 = vmatprep.subr.mxu0 0.0
      %3466 = vmatpush2.msra.mxu0 0.0
      %3467 = vmatprep.subr.mxu0 0.0
      %3468 = vmatpush2.msra.mxu0 0.0
      %3469 = vmatprep.mubr.f32.mxu0 0.0
      %3470 = vmatmul.mubr.f32.gmra.mxu0 %v3400
      %v3471 = vpop.f32.mrf.mxu0
      %v3472 = vadd.f32 0.0, %v3471
      %v3473 = vpop.f32.mrf.mxu0
      %3474 = vmatprep.mubr.f32.mxu0 0.0
      %3475 = vmatmul.mubr.f32.gmra.mxu0 %v3403
      %v3476 = vpop.f32.mrf.mxu0
      %v3477 = vadd.f32 0.0, %v3476
      %v3478 = vpop.f32.mrf.mxu0
      %3479 = vdwg.mxu0
      %v3481 = vsel %vm3398, %v3312, 0
      %v3484 = vsel %vm3398, %v3313, 0
      %3486 = vmatprep.subr.mxu0 0.0
      %3487 = vmatpush1.msra.mxu0 0.0
      %3488 = vmatprep.subr.mxu0 0.0
      %3489 = vmatpush1.msra.mxu0 0.0
      %3490 = vmatprep.subr.mxu0 0.0
      %3491 = vmatpush1.msra.mxu0 0.0
      %3492 = vmatprep.subr.mxu0 0.0
      %3493 = vmatpush1.msra.mxu0 0.0
      %3494 = vmatprep.subr.mxu0 0.0
      %3495 = vmatpush1.msra.mxu0 0.0
      %3496 = vmatprep.subr.mxu0 0.0
      %3497 = vmatpush1.msra.mxu0 0.0
      %3498 = vmatprep.subr.mxu0 0.0
      %3499 = vmatpush1.msra.mxu0 0.0
      %3500 = vmatprep.subr.mxu0 0.0
      %3501 = vmatpush1.msra.mxu0 0.0
      %3502 = vmatprep.subr.mxu0 0.0
      %3503 = vmatpush1.msra.mxu0 0.0
      %3504 = vmatprep.subr.mxu0 0.0
      %3505 = vmatpush1.msra.mxu0 0.0
      %3506 = vmatprep.subr.mxu0 0.0
      %3507 = vmatpush1.msra.mxu0 0.0
      %3508 = vmatprep.subr.mxu0 0.0
      %3509 = vmatpush1.msra.mxu0 0.0
      %3510 = vmatprep.subr.mxu0 0.0
      %3511 = vmatpush1.msra.mxu0 0.0
      %3512 = vmatprep.subr.mxu0 0.0
      %3513 = vmatpush1.msra.mxu0 0.0
      %3514 = vmatprep.subr.mxu0 0.0
      %3515 = vmatpush1.msra.mxu0 0.0
      %3516 = vmatprep.subr.mxu0 0.0
      %3517 = vmatpush1.msra.mxu0 %v3309
      %3518 = vmatprep.subr.mxu0 0.0
      %3519 = vmatpush2.msra.mxu0 0.0
      %3520 = vmatprep.subr.mxu0 0.0
      %3521 = vmatpush2.msra.mxu0 0.0
      %3522 = vmatprep.subr.mxu0 0.0
      %3523 = vmatpush2.msra.mxu0 0.0
      %3524 = vmatprep.subr.mxu0 0.0
      %3525 = vmatpush2.msra.mxu0 0.0
      %3526 = vmatprep.subr.mxu0 0.0
      %3527 = vmatpush2.msra.mxu0 0.0
      %3528 = vmatprep.subr.mxu0 0.0
      %3529 = vmatpush2.msra.mxu0 0.0
      %3530 = vmatprep.subr.mxu0 0.0
      %3531 = vmatpush2.msra.mxu0 0.0
      %3532 = vmatprep.subr.mxu0 0.0
      %3533 = vmatpush2.msra.mxu0 0.0
      %3534 = vmatprep.subr.mxu0 0.0
      %3535 = vmatpush2.msra.mxu0 0.0
      %3536 = vmatprep.subr.mxu0 0.0
      %3537 = vmatpush2.msra.mxu0 0.0
      %3538 = vmatprep.subr.mxu0 0.0
      %3539 = vmatpush2.msra.mxu0 0.0
      %3540 = vmatprep.subr.mxu0 0.0
      %3541 = vmatpush2.msra.mxu0 0.0
      %3542 = vmatprep.subr.mxu0 0.0
      %3543 = vmatpush2.msra.mxu0 0.0
      %3544 = vmatprep.subr.mxu0 0.0
      %3545 = vmatpush2.msra.mxu0 0.0
      %3546 = vmatprep.subr.mxu0 0.0
      %3547 = vmatpush2.msra.mxu0 0.0
      %3548 = vmatprep.subr.mxu0 0.0
      %3549 = vmatpush2.msra.mxu0 0.0
      %3550 = vmatprep.mubr.f32.mxu0 0.0
      %3551 = vmatmul.mubr.f32.gmra.mxu0 %v3481
      %v3552 = vpop.f32.mrf.mxu0
      %v3553 = vadd.f32 %v3472, %v3552
      %v3554 = vpop.f32.mrf.mxu0
      %3555 = vmatprep.mubr.f32.mxu0 0.0
      %3556 = vmatmul.mubr.f32.gmra.mxu0 %v3484
      %v3557 = vpop.f32.mrf.mxu0
      %v3558 = vadd.f32 %v3477, %v3557
      %v3559 = vpop.f32.mrf.mxu0
      %3560 = vdwg.mxu0
      %s3561 = scalar_lea.vmem %s5, 112
      %v3562 = vld [vmem:[%s3561] sm:$0xff]
      %v3563 = vld [vmem:[%s3561 + $0x8] sm:$0xff]
      %v3564 = vld [vmem:[%s3561 + $0x10] sm:$0xff]
      %v3565 = vld [vmem:[%s3561 + $0x18] sm:$0xff]
      %v3566 = vld [vmem:[%s3561 + $0x20] sm:$0xff]
      %v3567 = vld [vmem:[%s3561 + $0x28] sm:$0xff]
      %v3568 = vld [vmem:[%s3561 + $0x30] sm:$0xf]
      %v3570 = vsel %vm594, %v3568, 0
      %3572 = vmatprep.subr.mxu0 0.0
      %3573 = vmatpush1.msra.mxu0 0.0
      %3574 = vmatprep.subr.mxu0 0.0
      %3575 = vmatpush1.msra.mxu0 0.0
      %3576 = vmatprep.subr.mxu0 0.0
      %3577 = vmatpush1.msra.mxu0 0.0
      %3578 = vmatprep.subr.mxu0 0.0
      %3579 = vmatpush1.msra.mxu0 0.0
      %3580 = vmatprep.subr.mxu0 0.0
      %3581 = vmatpush1.msra.mxu0 0.0
      %3582 = vmatprep.subr.mxu0 0.0
      %3583 = vmatpush1.msra.mxu0 0.0
      %3584 = vmatprep.subr.mxu0 0.0
      %3585 = vmatpush1.msra.mxu0 0.0
      %3586 = vmatprep.subr.mxu0 0.0
      %3587 = vmatpush1.msra.mxu0 0.0
      %3588 = vmatprep.subr.mxu0 0.0
      %3589 = vmatpush1.msra.mxu0 0.0
      %3590 = vmatprep.subr.mxu0 0.0
      %3591 = vmatpush1.msra.mxu0 %v3570
      %3592 = vmatprep.subr.mxu0 0.0
      %3593 = vmatpush1.msra.mxu0 %v3567
      %3594 = vmatprep.subr.mxu0 0.0
      %3595 = vmatpush1.msra.mxu0 %v3566
      %3596 = vmatprep.subr.mxu0 0.0
      %3597 = vmatpush1.msra.mxu0 %v3565
      %3598 = vmatprep.subr.mxu0 0.0
      %3599 = vmatpush1.msra.mxu0 %v3564
      %3600 = vmatprep.subr.mxu0 0.0
      %3601 = vmatpush1.msra.mxu0 %v3563
      %3602 = vmatprep.subr.mxu0 0.0
      %3603 = vmatpush1.msra.mxu0 %v3562
      %3604 = vmatprep.subr.mxu0 0.0
      %3605 = vmatpush2.msra.mxu0 0.0
      %3606 = vmatprep.subr.mxu0 0.0
      %3607 = vmatpush2.msra.mxu0 0.0
      %3608 = vmatprep.subr.mxu0 0.0
      %3609 = vmatpush2.msra.mxu0 0.0
      %3610 = vmatprep.subr.mxu0 0.0
      %3611 = vmatpush2.msra.mxu0 0.0
      %3612 = vmatprep.subr.mxu0 0.0
      %3613 = vmatpush2.msra.mxu0 0.0
      %3614 = vmatprep.subr.mxu0 0.0
      %3615 = vmatpush2.msra.mxu0 0.0
      %3616 = vmatprep.subr.mxu0 0.0
      %3617 = vmatpush2.msra.mxu0 0.0
      %3618 = vmatprep.subr.mxu0 0.0
      %3619 = vmatpush2.msra.mxu0 0.0
      %3620 = vmatprep.subr.mxu0 0.0
      %3621 = vmatpush2.msra.mxu0 0.0
      %3622 = vmatprep.subr.mxu0 0.0
      %3623 = vmatpush2.msra.mxu0 0.0
      %3624 = vmatprep.subr.mxu0 0.0
      %3625 = vmatpush2.msra.mxu0 0.0
      %3626 = vmatprep.subr.mxu0 0.0
      %3627 = vmatpush2.msra.mxu0 0.0
      %3628 = vmatprep.subr.mxu0 0.0
      %3629 = vmatpush2.msra.mxu0 0.0
      %3630 = vmatprep.subr.mxu0 0.0
      %3631 = vmatpush2.msra.mxu0 0.0
      %3632 = vmatprep.subr.mxu0 0.0
      %3633 = vmatpush2.msra.mxu0 0.0
      %3634 = vmatprep.subr.mxu0 0.0
      %3635 = vmatpush2.msra.mxu0 0.0
      %3636 = vmatprep.mubr.f32.mxu0 0.0
      %3637 = vmatmul.mubr.f32.gmra.mxu0 %v3237
      %v3638 = vpop.f32.mrf.mxu0
      %v3639 = vadd.f32 0.0, %v3638
      %v3640 = vpop.f32.mrf.mxu0
      %3641 = vdwg.mxu0
      %s3642 = scalar_lea.vmem %s4, 32
      %v3643 = vld [vmem:[%s3642] sm:$0xff]
      %v3644 = vld [vmem:[%s3642 + $0x8] sm:$0xff]
      %v3646 = vsel %vm3398, %v3643, 0
      %v3649 = vsel %vm3398, %v3644, 0
      %3651 = vmatprep.subr.mxu0 0.0
      %3652 = vmatpush1.msra.mxu0 0.0
      %3653 = vmatprep.subr.mxu0 0.0
      %3654 = vmatpush1.msra.mxu0 0.0
      %3655 = vmatprep.subr.mxu0 0.0
      %3656 = vmatpush1.msra.mxu0 0.0
      %3657 = vmatprep.subr.mxu0 0.0
      %3658 = vmatpush1.msra.mxu0 0.0
      %3659 = vmatprep.subr.mxu0 0.0
      %3660 = vmatpush1.msra.mxu0 0.0
      %3661 = vmatprep.subr.mxu0 0.0
      %3662 = vmatpush1.msra.mxu0 0.0
      %3663 = vmatprep.subr.mxu0 0.0
      %3664 = vmatpush1.msra.mxu0 0.0
      %3665 = vmatprep.subr.mxu0 0.0
      %3666 = vmatpush1.msra.mxu0 0.0
      %3667 = vmatprep.subr.mxu0 0.0
      %3668 = vmatpush1.msra.mxu0 0.0
      %3669 = vmatprep.subr.mxu0 0.0
      %3670 = vmatpush1.msra.mxu0 0.0
      %3671 = vmatprep.subr.mxu0 0.0
      %3672 = vmatpush1.msra.mxu0 0.0
      %3673 = vmatprep.subr.mxu0 0.0
      %3674 = vmatpush1.msra.mxu0 0.0
      %3675 = vmatprep.subr.mxu0 0.0
      %3676 = vmatpush1.msra.mxu0 0.0
      %3677 = vmatprep.subr.mxu0 0.0
      %3678 = vmatpush1.msra.mxu0 0.0
      %3679 = vmatprep.subr.mxu0 0.0
      %3680 = vmatpush1.msra.mxu0 0.0
      %3681 = vmatprep.subr.mxu0 0.0
      %3682 = vmatpush1.msra.mxu0 %v3639
      %3683 = vmatprep.subr.mxu0 0.0
      %3684 = vmatpush2.msra.mxu0 0.0
      %3685 = vmatprep.subr.mxu0 0.0
      %3686 = vmatpush2.msra.mxu0 0.0
      %3687 = vmatprep.subr.mxu0 0.0
      %3688 = vmatpush2.msra.mxu0 0.0
      %3689 = vmatprep.subr.mxu0 0.0
      %3690 = vmatpush2.msra.mxu0 0.0
      %3691 = vmatprep.subr.mxu0 0.0
      %3692 = vmatpush2.msra.mxu0 0.0
      %3693 = vmatprep.subr.mxu0 0.0
      %3694 = vmatpush2.msra.mxu0 0.0
      %3695 = vmatprep.subr.mxu0 0.0
      %3696 = vmatpush2.msra.mxu0 0.0
      %3697 = vmatprep.subr.mxu0 0.0
      %3698 = vmatpush2.msra.mxu0 0.0
      %3699 = vmatprep.subr.mxu0 0.0
      %3700 = vmatpush2.msra.mxu0 0.0
      %3701 = vmatprep.subr.mxu0 0.0
      %3702 = vmatpush2.msra.mxu0 0.0
      %3703 = vmatprep.subr.mxu0 0.0
      %3704 = vmatpush2.msra.mxu0 0.0
      %3705 = vmatprep.subr.mxu0 0.0
      %3706 = vmatpush2.msra.mxu0 0.0
      %3707 = vmatprep.subr.mxu0 0.0
      %3708 = vmatpush2.msra.mxu0 0.0
      %3709 = vmatprep.subr.mxu0 0.0
      %3710 = vmatpush2.msra.mxu0 0.0
      %3711 = vmatprep.subr.mxu0 0.0
      %3712 = vmatpush2.msra.mxu0 0.0
      %3713 = vmatprep.subr.mxu0 0.0
      %3714 = vmatpush2.msra.mxu0 0.0
      %3715 = vmatprep.mubr.f32.mxu0 0.0
      %3716 = vmatmul.mubr.f32.gmra.mxu0 %v3646
      %v3717 = vpop.f32.mrf.mxu0
      %v3718 = vadd.f32 0.0, %v3717
      %v3719 = vpop.f32.mrf.mxu0
      %3720 = vmatprep.mubr.f32.mxu0 0.0
      %3721 = vmatmul.mubr.f32.gmra.mxu0 %v3649
      %v3722 = vpop.f32.mrf.mxu0
      %v3723 = vadd.f32 0.0, %v3722
      %v3724 = vpop.f32.mrf.mxu0
      %3725 = vdwg.mxu0
      %v3726 = vadd.f32 %v3553, %v3718
      %v3727 = vadd.f32 %v3558, %v3723
      %s3728 = scalar_lea.vmem %s5, 168
      %v3729 = vld [vmem:[%s3728] sm:$0xff]
      %v3730 = vld [vmem:[%s3728 + $0x8] sm:$0xff]
      %v3731 = vld [vmem:[%s3728 + $0x10] sm:$0xff]
      %v3732 = vld [vmem:[%s3728 + $0x18] sm:$0xff]
      %v3733 = vld [vmem:[%s3728 + $0x20] sm:$0xff]
      %v3734 = vld [vmem:[%s3728 + $0x28] sm:$0xff]
      %v3735 = vld [vmem:[%s3728 + $0x30] sm:$0xf]
      %v3737 = vsel %vm594, %v3735, 0
      %3739 = vmatprep.subr.mxu0 0.0
      %3740 = vmatpush1.msra.mxu0 0.0
      %3741 = vmatprep.subr.mxu0 0.0
      %3742 = vmatpush1.msra.mxu0 0.0
      %3743 = vmatprep.subr.mxu0 0.0
      %3744 = vmatpush1.msra.mxu0 0.0
      %3745 = vmatprep.subr.mxu0 0.0
      %3746 = vmatpush1.msra.mxu0 0.0
      %3747 = vmatprep.subr.mxu0 0.0
      %3748 = vmatpush1.msra.mxu0 0.0
      %3749 = vmatprep.subr.mxu0 0.0
      %3750 = vmatpush1.msra.mxu0 0.0
      %3751 = vmatprep.subr.mxu0 0.0
      %3752 = vmatpush1.msra.mxu0 0.0
      %3753 = vmatprep.subr.mxu0 0.0
      %3754 = vmatpush1.msra.mxu0 0.0
      %3755 = vmatprep.subr.mxu0 0.0
      %3756 = vmatpush1.msra.mxu0 0.0
      %3757 = vmatprep.subr.mxu0 0.0
      %3758 = vmatpush1.msra.mxu0 %v3737
      %3759 = vmatprep.subr.mxu0 0.0
      %3760 = vmatpush1.msra.mxu0 %v3734
      %3761 = vmatprep.subr.mxu0 0.0
      %3762 = vmatpush1.msra.mxu0 %v3733
      %3763 = vmatprep.subr.mxu0 0.0
      %3764 = vmatpush1.msra.mxu0 %v3732
      %3765 = vmatprep.subr.mxu0 0.0
      %3766 = vmatpush1.msra.mxu0 %v3731
      %3767 = vmatprep.subr.mxu0 0.0
      %3768 = vmatpush1.msra.mxu0 %v3730
      %3769 = vmatprep.subr.mxu0 0.0
      %3770 = vmatpush1.msra.mxu0 %v3729
      %3771 = vmatprep.subr.mxu0 0.0
      %3772 = vmatpush2.msra.mxu0 0.0
      %3773 = vmatprep.subr.mxu0 0.0
      %3774 = vmatpush2.msra.mxu0 0.0
      %3775 = vmatprep.subr.mxu0 0.0
      %3776 = vmatpush2.msra.mxu0 0.0
      %3777 = vmatprep.subr.mxu0 0.0
      %3778 = vmatpush2.msra.mxu0 0.0
      %3779 = vmatprep.subr.mxu0 0.0
      %3780 = vmatpush2.msra.mxu0 0.0
      %3781 = vmatprep.subr.mxu0 0.0
      %3782 = vmatpush2.msra.mxu0 0.0
      %3783 = vmatprep.subr.mxu0 0.0
      %3784 = vmatpush2.msra.mxu0 0.0
      %3785 = vmatprep.subr.mxu0 0.0
      %3786 = vmatpush2.msra.mxu0 0.0
      %3787 = vmatprep.subr.mxu0 0.0
      %3788 = vmatpush2.msra.mxu0 0.0
      %3789 = vmatprep.subr.mxu0 0.0
      %3790 = vmatpush2.msra.mxu0 0.0
      %3791 = vmatprep.subr.mxu0 0.0
      %3792 = vmatpush2.msra.mxu0 0.0
      %3793 = vmatprep.subr.mxu0 0.0
      %3794 = vmatpush2.msra.mxu0 0.0
      %3795 = vmatprep.subr.mxu0 0.0
      %3796 = vmatpush2.msra.mxu0 0.0
      %3797 = vmatprep.subr.mxu0 0.0
      %3798 = vmatpush2.msra.mxu0 0.0
      %3799 = vmatprep.subr.mxu0 0.0
      %3800 = vmatpush2.msra.mxu0 0.0
      %3801 = vmatprep.subr.mxu0 0.0
      %3802 = vmatpush2.msra.mxu0 0.0
      %3803 = vmatprep.mubr.f32.mxu0 0.0
      %3804 = vmatmul.mubr.f32.gmra.mxu0 %v3237
      %v3805 = vpop.f32.mrf.mxu0
      %v3806 = vadd.f32 0.0, %v3805
      %v3807 = vpop.f32.mrf.mxu0
      %3808 = vdwg.mxu0
      %s3809 = scalar_lea.vmem %s4, 48
      %v3810 = vld [vmem:[%s3809] sm:$0xff]
      %v3811 = vld [vmem:[%s3809 + $0x8] sm:$0xff]
      %v3813 = vsel %vm3398, %v3810, 0
      %v3816 = vsel %vm3398, %v3811, 0
      %3818 = vmatprep.subr.mxu0 0.0
      %3819 = vmatpush1.msra.mxu0 0.0
      %3820 = vmatprep.subr.mxu0 0.0
      %3821 = vmatpush1.msra.mxu0 0.0
      %3822 = vmatprep.subr.mxu0 0.0
      %3823 = vmatpush1.msra.mxu0 0.0
      %3824 = vmatprep.subr.mxu0 0.0
      %3825 = vmatpush1.msra.mxu0 0.0
      %3826 = vmatprep.subr.mxu0 0.0
      %3827 = vmatpush1.msra.mxu0 0.0
      %3828 = vmatprep.subr.mxu0 0.0
      %3829 = vmatpush1.msra.mxu0 0.0
      %3830 = vmatprep.subr.mxu0 0.0
      %3831 = vmatpush1.msra.mxu0 0.0
      %3832 = vmatprep.subr.mxu0 0.0
      %3833 = vmatpush1.msra.mxu0 0.0
      %3834 = vmatprep.subr.mxu0 0.0
      %3835 = vmatpush1.msra.mxu0 0.0
      %3836 = vmatprep.subr.mxu0 0.0
      %3837 = vmatpush1.msra.mxu0 0.0
      %3838 = vmatprep.subr.mxu0 0.0
      %3839 = vmatpush1.msra.mxu0 0.0
      %3840 = vmatprep.subr.mxu0 0.0
      %3841 = vmatpush1.msra.mxu0 0.0
      %3842 = vmatprep.subr.mxu0 0.0
      %3843 = vmatpush1.msra.mxu0 0.0
      %3844 = vmatprep.subr.mxu0 0.0
      %3845 = vmatpush1.msra.mxu0 0.0
      %3846 = vmatprep.subr.mxu0 0.0
      %3847 = vmatpush1.msra.mxu0 0.0
      %3848 = vmatprep.subr.mxu0 0.0
      %3849 = vmatpush1.msra.mxu0 %v3806
      %3850 = vmatprep.subr.mxu0 0.0
      %3851 = vmatpush2.msra.mxu0 0.0
      %3852 = vmatprep.subr.mxu0 0.0
      %3853 = vmatpush2.msra.mxu0 0.0
      %3854 = vmatprep.subr.mxu0 0.0
      %3855 = vmatpush2.msra.mxu0 0.0
      %3856 = vmatprep.subr.mxu0 0.0
      %3857 = vmatpush2.msra.mxu0 0.0
      %3858 = vmatprep.subr.mxu0 0.0
      %3859 = vmatpush2.msra.mxu0 0.0
      %3860 = vmatprep.subr.mxu0 0.0
      %3861 = vmatpush2.msra.mxu0 0.0
      %3862 = vmatprep.subr.mxu0 0.0
      %3863 = vmatpush2.msra.mxu0 0.0
      %3864 = vmatprep.subr.mxu0 0.0
      %3865 = vmatpush2.msra.mxu0 0.0
      %3866 = vmatprep.subr.mxu0 0.0
      %3867 = vmatpush2.msra.mxu0 0.0
      %3868 = vmatprep.subr.mxu0 0.0
      %3869 = vmatpush2.msra.mxu0 0.0
      %3870 = vmatprep.subr.mxu0 0.0
      %3871 = vmatpush2.msra.mxu0 0.0
      %3872 = vmatprep.subr.mxu0 0.0
      %3873 = vmatpush2.msra.mxu0 0.0
      %3874 = vmatprep.subr.mxu0 0.0
      %3875 = vmatpush2.msra.mxu0 0.0
      %3876 = vmatprep.subr.mxu0 0.0
      %3877 = vmatpush2.msra.mxu0 0.0
      %3878 = vmatprep.subr.mxu0 0.0
      %3879 = vmatpush2.msra.mxu0 0.0
      %3880 = vmatprep.subr.mxu0 0.0
      %3881 = vmatpush2.msra.mxu0 0.0
      %3882 = vmatprep.mubr.f32.mxu0 0.0
      %3883 = vmatmul.mubr.f32.gmra.mxu0 %v3813
      %v3884 = vpop.f32.mrf.mxu0
      %v3885 = vadd.f32 0.0, %v3884
      %v3886 = vpop.f32.mrf.mxu0
      %3887 = vmatprep.mubr.f32.mxu0 0.0
      %3888 = vmatmul.mubr.f32.gmra.mxu0 %v3816
      %v3889 = vpop.f32.mrf.mxu0
      %v3890 = vadd.f32 0.0, %v3889
      %v3891 = vpop.f32.mrf.mxu0
      %3892 = vdwg.mxu0
      %v3893 = vadd.f32 %v3726, %v3885
      %v3894 = vadd.f32 %v3727, %v3890
      %s3895 = scalar_lea.vmem %s5, 224
      %v3896 = vld [vmem:[%s3895] sm:$0xff]
      %v3897 = vld [vmem:[%s3895 + $0x8] sm:$0xff]
      %v3898 = vld [vmem:[%s3895 + $0x10] sm:$0xff]
      %v3899 = vld [vmem:[%s3895 + $0x18] sm:$0xff]
      %v3900 = vld [vmem:[%s3895 + $0x20] sm:$0xff]
      %v3901 = vld [vmem:[%s3895 + $0x28] sm:$0xff]
      %v3902 = vld [vmem:[%s3895 + $0x30] sm:$0xf]
      %v3904 = vsel %vm594, %v3902, 0
      %3906 = vmatprep.subr.mxu0 0.0
      %3907 = vmatpush1.msra.mxu0 0.0
      %3908 = vmatprep.subr.mxu0 0.0
      %3909 = vmatpush1.msra.mxu0 0.0
      %3910 = vmatprep.subr.mxu0 0.0
      %3911 = vmatpush1.msra.mxu0 0.0
      %3912 = vmatprep.subr.mxu0 0.0
      %3913 = vmatpush1.msra.mxu0 0.0
      %3914 = vmatprep.subr.mxu0 0.0
      %3915 = vmatpush1.msra.mxu0 0.0
      %3916 = vmatprep.subr.mxu0 0.0
      %3917 = vmatpush1.msra.mxu0 0.0
      %3918 = vmatprep.subr.mxu0 0.0
      %3919 = vmatpush1.msra.mxu0 0.0
      %3920 = vmatprep.subr.mxu0 0.0
      %3921 = vmatpush1.msra.mxu0 0.0
      %3922 = vmatprep.subr.mxu0 0.0
      %3923 = vmatpush1.msra.mxu0 0.0
      %3924 = vmatprep.subr.mxu0 0.0
      %3925 = vmatpush1.msra.mxu0 %v3904
      %3926 = vmatprep.subr.mxu0 0.0
      %3927 = vmatpush1.msra.mxu0 %v3901
      %3928 = vmatprep.subr.mxu0 0.0
      %3929 = vmatpush1.msra.mxu0 %v3900
      %3930 = vmatprep.subr.mxu0 0.0
      %3931 = vmatpush1.msra.mxu0 %v3899
      %3932 = vmatprep.subr.mxu0 0.0
      %3933 = vmatpush1.msra.mxu0 %v3898
      %3934 = vmatprep.subr.mxu0 0.0
      %3935 = vmatpush1.msra.mxu0 %v3897
      %3936 = vmatprep.subr.mxu0 0.0
      %3937 = vmatpush1.msra.mxu0 %v3896
      %3938 = vmatprep.subr.mxu0 0.0
      %3939 = vmatpush2.msra.mxu0 0.0
      %3940 = vmatprep.subr.mxu0 0.0
      %3941 = vmatpush2.msra.mxu0 0.0
      %3942 = vmatprep.subr.mxu0 0.0
      %3943 = vmatpush2.msra.mxu0 0.0
      %3944 = vmatprep.subr.mxu0 0.0
      %3945 = vmatpush2.msra.mxu0 0.0
      %3946 = vmatprep.subr.mxu0 0.0
      %3947 = vmatpush2.msra.mxu0 0.0
      %3948 = vmatprep.subr.mxu0 0.0
      %3949 = vmatpush2.msra.mxu0 0.0
      %3950 = vmatprep.subr.mxu0 0.0
      %3951 = vmatpush2.msra.mxu0 0.0
      %3952 = vmatprep.subr.mxu0 0.0
      %3953 = vmatpush2.msra.mxu0 0.0
      %3954 = vmatprep.subr.mxu0 0.0
      %3955 = vmatpush2.msra.mxu0 0.0
      %3956 = vmatprep.subr.mxu0 0.0
      %3957 = vmatpush2.msra.mxu0 0.0
      %3958 = vmatprep.subr.mxu0 0.0
      %3959 = vmatpush2.msra.mxu0 0.0
      %3960 = vmatprep.subr.mxu0 0.0
      %3961 = vmatpush2.msra.mxu0 0.0
      %3962 = vmatprep.subr.mxu0 0.0
      %3963 = vmatpush2.msra.mxu0 0.0
      %3964 = vmatprep.subr.mxu0 0.0
      %3965 = vmatpush2.msra.mxu0 0.0
      %3966 = vmatprep.subr.mxu0 0.0
      %3967 = vmatpush2.msra.mxu0 0.0
      %3968 = vmatprep.subr.mxu0 0.0
      %3969 = vmatpush2.msra.mxu0 0.0
      %3970 = vmatprep.mubr.f32.mxu0 0.0
      %3971 = vmatmul.mubr.f32.gmra.mxu0 %v3237
      %v3972 = vpop.f32.mrf.mxu0
      %v3973 = vadd.f32 0.0, %v3972
      %v3974 = vpop.f32.mrf.mxu0
      %3975 = vdwg.mxu0
      %s3976 = scalar_lea.vmem %s4, 64
      %v3977 = vld [vmem:[%s3976] sm:$0xff]
      %v3978 = vld [vmem:[%s3976 + $0x8] sm:$0xff]
      %v3980 = vsel %vm3398, %v3977, 0
      %v3983 = vsel %vm3398, %v3978, 0
      %3985 = vmatprep.subr.mxu0 0.0
      %3986 = vmatpush1.msra.mxu0 0.0
      %3987 = vmatprep.subr.mxu0 0.0
      %3988 = vmatpush1.msra.mxu0 0.0
      %3989 = vmatprep.subr.mxu0 0.0
      %3990 = vmatpush1.msra.mxu0 0.0
      %3991 = vmatprep.subr.mxu0 0.0
      %3992 = vmatpush1.msra.mxu0 0.0
      %3993 = vmatprep.subr.mxu0 0.0
      %3994 = vmatpush1.msra.mxu0 0.0
      %3995 = vmatprep.subr.mxu0 0.0
      %3996 = vmatpush1.msra.mxu0 0.0
      %3997 = vmatprep.subr.mxu0 0.0
      %3998 = vmatpush1.msra.mxu0 0.0
      %3999 = vmatprep.subr.mxu0 0.0
      %4000 = vmatpush1.msra.mxu0 0.0
      %4001 = vmatprep.subr.mxu0 0.0
      %4002 = vmatpush1.msra.mxu0 0.0
      %4003 = vmatprep.subr.mxu0 0.0
      %4004 = vmatpush1.msra.mxu0 0.0
      %4005 = vmatprep.subr.mxu0 0.0
      %4006 = vmatpush1.msra.mxu0 0.0
      %4007 = vmatprep.subr.mxu0 0.0
      %4008 = vmatpush1.msra.mxu0 0.0
      %4009 = vmatprep.subr.mxu0 0.0
      %4010 = vmatpush1.msra.mxu0 0.0
      %4011 = vmatprep.subr.mxu0 0.0
      %4012 = vmatpush1.msra.mxu0 0.0
      %4013 = vmatprep.subr.mxu0 0.0
      %4014 = vmatpush1.msra.mxu0 0.0
      %4015 = vmatprep.subr.mxu0 0.0
      %4016 = vmatpush1.msra.mxu0 %v3973
      %4017 = vmatprep.subr.mxu0 0.0
      %4018 = vmatpush2.msra.mxu0 0.0
      %4019 = vmatprep.subr.mxu0 0.0
      %4020 = vmatpush2.msra.mxu0 0.0
      %4021 = vmatprep.subr.mxu0 0.0
      %4022 = vmatpush2.msra.mxu0 0.0
      %4023 = vmatprep.subr.mxu0 0.0
      %4024 = vmatpush2.msra.mxu0 0.0
      %4025 = vmatprep.subr.mxu0 0.0
      %4026 = vmatpush2.msra.mxu0 0.0
      %4027 = vmatprep.subr.mxu0 0.0
      %4028 = vmatpush2.msra.mxu0 0.0
      %4029 = vmatprep.subr.mxu0 0.0
      %4030 = vmatpush2.msra.mxu0 0.0
      %4031 = vmatprep.subr.mxu0 0.0
      %4032 = vmatpush2.msra.mxu0 0.0
      %4033 = vmatprep.subr.mxu0 0.0
      %4034 = vmatpush2.msra.mxu0 0.0
      %4035 = vmatprep.subr.mxu0 0.0
      %4036 = vmatpush2.msra.mxu0 0.0
      %4037 = vmatprep.subr.mxu0 0.0
      %4038 = vmatpush2.msra.mxu0 0.0
      %4039 = vmatprep.subr.mxu0 0.0
      %4040 = vmatpush2.msra.mxu0 0.0
      %4041 = vmatprep.subr.mxu0 0.0
      %4042 = vmatpush2.msra.mxu0 0.0
      %4043 = vmatprep.subr.mxu0 0.0
      %4044 = vmatpush2.msra.mxu0 0.0
      %4045 = vmatprep.subr.mxu0 0.0
      %4046 = vmatpush2.msra.mxu0 0.0
      %4047 = vmatprep.subr.mxu0 0.0
      %4048 = vmatpush2.msra.mxu0 0.0
      %4049 = vmatprep.mubr.f32.mxu0 0.0
      %4050 = vmatmul.mubr.f32.gmra.mxu0 %v3980
      %v4051 = vpop.f32.mrf.mxu0
      %v4052 = vadd.f32 0.0, %v4051
      %v4053 = vpop.f32.mrf.mxu0
      %4054 = vmatprep.mubr.f32.mxu0 0.0
      %4055 = vmatmul.mubr.f32.gmra.mxu0 %v3983
      %v4056 = vpop.f32.mrf.mxu0
      %v4057 = vadd.f32 0.0, %v4056
      %v4058 = vpop.f32.mrf.mxu0
      %4059 = vdwg.mxu0
      %v4060 = vadd.f32 %v3893, %v4052
      %v4061 = vadd.f32 %v3894, %v4057
      %s4062 = scalar_lea.vmem %s5, 280
      %v4063 = vld [vmem:[%s4062] sm:$0xff]
      %v4064 = vld [vmem:[%s4062 + $0x8] sm:$0xff]
      %v4065 = vld [vmem:[%s4062 + $0x10] sm:$0xff]
      %v4066 = vld [vmem:[%s4062 + $0x18] sm:$0xff]
      %v4067 = vld [vmem:[%s4062 + $0x20] sm:$0xff]
      %v4068 = vld [vmem:[%s4062 + $0x28] sm:$0xff]
      %v4069 = vld [vmem:[%s4062 + $0x30] sm:$0xf]
      %v4071 = vsel %vm594, %v4069, 0
      %4073 = vmatprep.subr.mxu0 0.0
      %4074 = vmatpush1.msra.mxu0 0.0
      %4075 = vmatprep.subr.mxu0 0.0
      %4076 = vmatpush1.msra.mxu0 0.0
      %4077 = vmatprep.subr.mxu0 0.0
      %4078 = vmatpush1.msra.mxu0 0.0
      %4079 = vmatprep.subr.mxu0 0.0
      %4080 = vmatpush1.msra.mxu0 0.0
      %4081 = vmatprep.subr.mxu0 0.0
      %4082 = vmatpush1.msra.mxu0 0.0
      %4083 = vmatprep.subr.mxu0 0.0
      %4084 = vmatpush1.msra.mxu0 0.0
      %4085 = vmatprep.subr.mxu0 0.0
      %4086 = vmatpush1.msra.mxu0 0.0
      %4087 = vmatprep.subr.mxu0 0.0
      %4088 = vmatpush1.msra.mxu0 0.0
      %4089 = vmatprep.subr.mxu0 0.0
      %4090 = vmatpush1.msra.mxu0 0.0
      %4091 = vmatprep.subr.mxu0 0.0
      %4092 = vmatpush1.msra.mxu0 %v4071
      %4093 = vmatprep.subr.mxu0 0.0
      %4094 = vmatpush1.msra.mxu0 %v4068
      %4095 = vmatprep.subr.mxu0 0.0
      %4096 = vmatpush1.msra.mxu0 %v4067
      %4097 = vmatprep.subr.mxu0 0.0
      %4098 = vmatpush1.msra.mxu0 %v4066
      %4099 = vmatprep.subr.mxu0 0.0
      %4100 = vmatpush1.msra.mxu0 %v4065
      %4101 = vmatprep.subr.mxu0 0.0
      %4102 = vmatpush1.msra.mxu0 %v4064
      %4103 = vmatprep.subr.mxu0 0.0
      %4104 = vmatpush1.msra.mxu0 %v4063
      %4105 = vmatprep.subr.mxu0 0.0
      %4106 = vmatpush2.msra.mxu0 0.0
      %4107 = vmatprep.subr.mxu0 0.0
      %4108 = vmatpush2.msra.mxu0 0.0
      %4109 = vmatprep.subr.mxu0 0.0
      %4110 = vmatpush2.msra.mxu0 0.0
      %4111 = vmatprep.subr.mxu0 0.0
      %4112 = vmatpush2.msra.mxu0 0.0
      %4113 = vmatprep.subr.mxu0 0.0
      %4114 = vmatpush2.msra.mxu0 0.0
      %4115 = vmatprep.subr.mxu0 0.0
      %4116 = vmatpush2.msra.mxu0 0.0
      %4117 = vmatprep.subr.mxu0 0.0
      %4118 = vmatpush2.msra.mxu0 0.0
      %4119 = vmatprep.subr.mxu0 0.0
      %4120 = vmatpush2.msra.mxu0 0.0
      %4121 = vmatprep.subr.mxu0 0.0
      %4122 = vmatpush2.msra.mxu0 0.0
      %4123 = vmatprep.subr.mxu0 0.0
      %4124 = vmatpush2.msra.mxu0 0.0
      %4125 = vmatprep.subr.mxu0 0.0
      %4126 = vmatpush2.msra.mxu0 0.0
      %4127 = vmatprep.subr.mxu0 0.0
      %4128 = vmatpush2.msra.mxu0 0.0
      %4129 = vmatprep.subr.mxu0 0.0
      %4130 = vmatpush2.msra.mxu0 0.0
      %4131 = vmatprep.subr.mxu0 0.0
      %4132 = vmatpush2.msra.mxu0 0.0
      %4133 = vmatprep.subr.mxu0 0.0
      %4134 = vmatpush2.msra.mxu0 0.0
      %4135 = vmatprep.subr.mxu0 0.0
      %4136 = vmatpush2.msra.mxu0 0.0
      %4137 = vmatprep.mubr.f32.mxu0 0.0
      %4138 = vmatmul.mubr.f32.gmra.mxu0 %v3237
      %v4139 = vpop.f32.mrf.mxu0
      %v4140 = vadd.f32 0.0, %v4139
      %v4141 = vpop.f32.mrf.mxu0
      %4142 = vdwg.mxu0
      %s4143 = scalar_lea.vmem %s4, 80
      %v4144 = vld [vmem:[%s4143] sm:$0xff]
      %v4145 = vld [vmem:[%s4143 + $0x8] sm:$0xff]
      %v4147 = vsel %vm3398, %v4144, 0
      %v4150 = vsel %vm3398, %v4145, 0
      %4152 = vmatprep.subr.mxu0 0.0
      %4153 = vmatpush1.msra.mxu0 0.0
      %4154 = vmatprep.subr.mxu0 0.0
      %4155 = vmatpush1.msra.mxu0 0.0
      %4156 = vmatprep.subr.mxu0 0.0
      %4157 = vmatpush1.msra.mxu0 0.0
      %4158 = vmatprep.subr.mxu0 0.0
      %4159 = vmatpush1.msra.mxu0 0.0
      %4160 = vmatprep.subr.mxu0 0.0
      %4161 = vmatpush1.msra.mxu0 0.0
      %4162 = vmatprep.subr.mxu0 0.0
      %4163 = vmatpush1.msra.mxu0 0.0
      %4164 = vmatprep.subr.mxu0 0.0
      %4165 = vmatpush1.msra.mxu0 0.0
      %4166 = vmatprep.subr.mxu0 0.0
      %4167 = vmatpush1.msra.mxu0 0.0
      %4168 = vmatprep.subr.mxu0 0.0
      %4169 = vmatpush1.msra.mxu0 0.0
      %4170 = vmatprep.subr.mxu0 0.0
      %4171 = vmatpush1.msra.mxu0 0.0
      %4172 = vmatprep.subr.mxu0 0.0
      %4173 = vmatpush1.msra.mxu0 0.0
      %4174 = vmatprep.subr.mxu0 0.0
      %4175 = vmatpush1.msra.mxu0 0.0
      %4176 = vmatprep.subr.mxu0 0.0
      %4177 = vmatpush1.msra.mxu0 0.0
      %4178 = vmatprep.subr.mxu0 0.0
      %4179 = vmatpush1.msra.mxu0 0.0
      %4180 = vmatprep.subr.mxu0 0.0
      %4181 = vmatpush1.msra.mxu0 0.0
      %4182 = vmatprep.subr.mxu0 0.0
      %4183 = vmatpush1.msra.mxu0 %v4140
      %4184 = vmatprep.subr.mxu0 0.0
      %4185 = vmatpush2.msra.mxu0 0.0
      %4186 = vmatprep.subr.mxu0 0.0
      %4187 = vmatpush2.msra.mxu0 0.0
      %4188 = vmatprep.subr.mxu0 0.0
      %4189 = vmatpush2.msra.mxu0 0.0
      %4190 = vmatprep.subr.mxu0 0.0
      %4191 = vmatpush2.msra.mxu0 0.0
      %4192 = vmatprep.subr.mxu0 0.0
      %4193 = vmatpush2.msra.mxu0 0.0
      %4194 = vmatprep.subr.mxu0 0.0
      %4195 = vmatpush2.msra.mxu0 0.0
      %4196 = vmatprep.subr.mxu0 0.0
      %4197 = vmatpush2.msra.mxu0 0.0
      %4198 = vmatprep.subr.mxu0 0.0
      %4199 = vmatpush2.msra.mxu0 0.0
      %4200 = vmatprep.subr.mxu0 0.0
      %4201 = vmatpush2.msra.mxu0 0.0
      %4202 = vmatprep.subr.mxu0 0.0
      %4203 = vmatpush2.msra.mxu0 0.0
      %4204 = vmatprep.subr.mxu0 0.0
      %4205 = vmatpush2.msra.mxu0 0.0
      %4206 = vmatprep.subr.mxu0 0.0
      %4207 = vmatpush2.msra.mxu0 0.0
      %4208 = vmatprep.subr.mxu0 0.0
      %4209 = vmatpush2.msra.mxu0 0.0
      %4210 = vmatprep.subr.mxu0 0.0
      %4211 = vmatpush2.msra.mxu0 0.0
      %4212 = vmatprep.subr.mxu0 0.0
      %4213 = vmatpush2.msra.mxu0 0.0
      %4214 = vmatprep.subr.mxu0 0.0
      %4215 = vmatpush2.msra.mxu0 0.0
      %4216 = vmatprep.mubr.f32.mxu0 0.0
      %4217 = vmatmul.mubr.f32.gmra.mxu0 %v4147
      %v4218 = vpop.f32.mrf.mxu0
      %v4219 = vadd.f32 0.0, %v4218
      %v4220 = vpop.f32.mrf.mxu0
      %4221 = vmatprep.mubr.f32.mxu0 0.0
      %4222 = vmatmul.mubr.f32.gmra.mxu0 %v4150
      %v4223 = vpop.f32.mrf.mxu0
      %v4224 = vadd.f32 0.0, %v4223
      %v4225 = vpop.f32.mrf.mxu0
      %4226 = vdwg.mxu0
      %v4227 = vadd.f32 %v4060, %v4219
      %v4228 = vadd.f32 %v4061, %v4224
      %s4229 = scalar_lea.vmem %s5, 336
      %v4230 = vld [vmem:[%s4229] sm:$0xff]
      %v4231 = vld [vmem:[%s4229 + $0x8] sm:$0xff]
      %v4232 = vld [vmem:[%s4229 + $0x10] sm:$0xff]
      %v4233 = vld [vmem:[%s4229 + $0x18] sm:$0xff]
      %v4234 = vld [vmem:[%s4229 + $0x20] sm:$0xff]
      %v4235 = vld [vmem:[%s4229 + $0x28] sm:$0xff]
      %v4236 = vld [vmem:[%s4229 + $0x30] sm:$0xf]
      %v4238 = vsel %vm594, %v4236, 0
      %4240 = vmatprep.subr.mxu0 0.0
      %4241 = vmatpush1.msra.mxu0 0.0
      %4242 = vmatprep.subr.mxu0 0.0
      %4243 = vmatpush1.msra.mxu0 0.0
      %4244 = vmatprep.subr.mxu0 0.0
      %4245 = vmatpush1.msra.mxu0 0.0
      %4246 = vmatprep.subr.mxu0 0.0
      %4247 = vmatpush1.msra.mxu0 0.0
      %4248 = vmatprep.subr.mxu0 0.0
      %4249 = vmatpush1.msra.mxu0 0.0
      %4250 = vmatprep.subr.mxu0 0.0
      %4251 = vmatpush1.msra.mxu0 0.0
      %4252 = vmatprep.subr.mxu0 0.0
      %4253 = vmatpush1.msra.mxu0 0.0
      %4254 = vmatprep.subr.mxu0 0.0
      %4255 = vmatpush1.msra.mxu0 0.0
      %4256 = vmatprep.subr.mxu0 0.0
      %4257 = vmatpush1.msra.mxu0 0.0
      %4258 = vmatprep.subr.mxu0 0.0
      %4259 = vmatpush1.msra.mxu0 %v4238
      %4260 = vmatprep.subr.mxu0 0.0
      %4261 = vmatpush1.msra.mxu0 %v4235
      %4262 = vmatprep.subr.mxu0 0.0
      %4263 = vmatpush1.msra.mxu0 %v4234
      %4264 = vmatprep.subr.mxu0 0.0
      %4265 = vmatpush1.msra.mxu0 %v4233
      %4266 = vmatprep.subr.mxu0 0.0
      %4267 = vmatpush1.msra.mxu0 %v4232
      %4268 = vmatprep.subr.mxu0 0.0
      %4269 = vmatpush1.msra.mxu0 %v4231
      %4270 = vmatprep.subr.mxu0 0.0
      %4271 = vmatpush1.msra.mxu0 %v4230
      %4272 = vmatprep.subr.mxu0 0.0
      %4273 = vmatpush2.msra.mxu0 0.0
      %4274 = vmatprep.subr.mxu0 0.0
      %4275 = vmatpush2.msra.mxu0 0.0
      %4276 = vmatprep.subr.mxu0 0.0
      %4277 = vmatpush2.msra.mxu0 0.0
      %4278 = vmatprep.subr.mxu0 0.0
      %4279 = vmatpush2.msra.mxu0 0.0
      %4280 = vmatprep.subr.mxu0 0.0
      %4281 = vmatpush2.msra.mxu0 0.0
      %4282 = vmatprep.subr.mxu0 0.0
      %4283 = vmatpush2.msra.mxu0 0.0
      %4284 = vmatprep.subr.mxu0 0.0
      %4285 = vmatpush2.msra.mxu0 0.0
      %4286 = vmatprep.subr.mxu0 0.0
      %4287 = vmatpush2.msra.mxu0 0.0
      %4288 = vmatprep.subr.mxu0 0.0
      %4289 = vmatpush2.msra.mxu0 0.0
      %4290 = vmatprep.subr.mxu0 0.0
      %4291 = vmatpush2.msra.mxu0 0.0
      %4292 = vmatprep.subr.mxu0 0.0
      %4293 = vmatpush2.msra.mxu0 0.0
      %4294 = vmatprep.subr.mxu0 0.0
      %4295 = vmatpush2.msra.mxu0 0.0
      %4296 = vmatprep.subr.mxu0 0.0
      %4297 = vmatpush2.msra.mxu0 0.0
      %4298 = vmatprep.subr.mxu0 0.0
      %4299 = vmatpush2.msra.mxu0 0.0
      %4300 = vmatprep.subr.mxu0 0.0
      %4301 = vmatpush2.msra.mxu0 0.0
      %4302 = vmatprep.subr.mxu0 0.0
      %4303 = vmatpush2.msra.mxu0 0.0
      %4304 = vmatprep.mubr.f32.mxu0 0.0
      %4305 = vmatmul.mubr.f32.gmra.mxu0 %v3237
      %v4306 = vpop.f32.mrf.mxu0
      %v4307 = vadd.f32 0.0, %v4306
      %v4308 = vpop.f32.mrf.mxu0
      %4309 = vdwg.mxu0
      %s4310 = scalar_lea.vmem %s4, 96
      %v4311 = vld [vmem:[%s4310] sm:$0xff]
      %v4312 = vld [vmem:[%s4310 + $0x8] sm:$0xff]
      %v4314 = vsel %vm3398, %v4311, 0
      %v4317 = vsel %vm3398, %v4312, 0
      %4319 = vmatprep.subr.mxu0 0.0
      %4320 = vmatpush1.msra.mxu0 0.0
      %4321 = vmatprep.subr.mxu0 0.0
      %4322 = vmatpush1.msra.mxu0 0.0
      %4323 = vmatprep.subr.mxu0 0.0
      %4324 = vmatpush1.msra.mxu0 0.0
      %4325 = vmatprep.subr.mxu0 0.0
      %4326 = vmatpush1.msra.mxu0 0.0
      %4327 = vmatprep.subr.mxu0 0.0
      %4328 = vmatpush1.msra.mxu0 0.0
      %4329 = vmatprep.subr.mxu0 0.0
      %4330 = vmatpush1.msra.mxu0 0.0
      %4331 = vmatprep.subr.mxu0 0.0
      %4332 = vmatpush1.msra.mxu0 0.0
      %4333 = vmatprep.subr.mxu0 0.0
      %4334 = vmatpush1.msra.mxu0 0.0
      %4335 = vmatprep.subr.mxu0 0.0
      %4336 = vmatpush1.msra.mxu0 0.0
      %4337 = vmatprep.subr.mxu0 0.0
      %4338 = vmatpush1.msra.mxu0 0.0
      %4339 = vmatprep.subr.mxu0 0.0
      %4340 = vmatpush1.msra.mxu0 0.0
      %4341 = vmatprep.subr.mxu0 0.0
      %4342 = vmatpush1.msra.mxu0 0.0
      %4343 = vmatprep.subr.mxu0 0.0
      %4344 = vmatpush1.msra.mxu0 0.0
      %4345 = vmatprep.subr.mxu0 0.0
      %4346 = vmatpush1.msra.mxu0 0.0
      %4347 = vmatprep.subr.mxu0 0.0
      %4348 = vmatpush1.msra.mxu0 0.0
      %4349 = vmatprep.subr.mxu0 0.0
      %4350 = vmatpush1.msra.mxu0 %v4307
      %4351 = vmatprep.subr.mxu0 0.0
      %4352 = vmatpush2.msra.mxu0 0.0
      %4353 = vmatprep.subr.mxu0 0.0
      %4354 = vmatpush2.msra.mxu0 0.0
      %4355 = vmatprep.subr.mxu0 0.0
      %4356 = vmatpush2.msra.mxu0 0.0
      %4357 = vmatprep.subr.mxu0 0.0
      %4358 = vmatpush2.msra.mxu0 0.0
      %4359 = vmatprep.subr.mxu0 0.0
      %4360 = vmatpush2.msra.mxu0 0.0
      %4361 = vmatprep.subr.mxu0 0.0
      %4362 = vmatpush2.msra.mxu0 0.0
      %4363 = vmatprep.subr.mxu0 0.0
      %4364 = vmatpush2.msra.mxu0 0.0
      %4365 = vmatprep.subr.mxu0 0.0
      %4366 = vmatpush2.msra.mxu0 0.0
      %4367 = vmatprep.subr.mxu0 0.0
      %4368 = vmatpush2.msra.mxu0 0.0
      %4369 = vmatprep.subr.mxu0 0.0
      %4370 = vmatpush2.msra.mxu0 0.0
      %4371 = vmatprep.subr.mxu0 0.0
      %4372 = vmatpush2.msra.mxu0 0.0
      %4373 = vmatprep.subr.mxu0 0.0
      %4374 = vmatpush2.msra.mxu0 0.0
      %4375 = vmatprep.subr.mxu0 0.0
      %4376 = vmatpush2.msra.mxu0 0.0
      %4377 = vmatprep.subr.mxu0 0.0
      %4378 = vmatpush2.msra.mxu0 0.0
      %4379 = vmatprep.subr.mxu0 0.0
      %4380 = vmatpush2.msra.mxu0 0.0
      %4381 = vmatprep.subr.mxu0 0.0
      %4382 = vmatpush2.msra.mxu0 0.0
      %4383 = vmatprep.mubr.f32.mxu0 0.0
      %4384 = vmatmul.mubr.f32.gmra.mxu0 %v4314
      %v4385 = vpop.f32.mrf.mxu0
      %v4386 = vadd.f32 0.0, %v4385
      %v4387 = vpop.f32.mrf.mxu0
      %4388 = vmatprep.mubr.f32.mxu0 0.0
      %4389 = vmatmul.mubr.f32.gmra.mxu0 %v4317
      %v4390 = vpop.f32.mrf.mxu0
      %v4391 = vadd.f32 0.0, %v4390
      %v4392 = vpop.f32.mrf.mxu0
      %4393 = vdwg.mxu0
      %v4394 = vadd.f32 %v4227, %v4386
      %v4395 = vadd.f32 %v4228, %v4391
      %s4396 = scalar_lea.vmem %s5, 392
      %v4397 = vld [vmem:[%s4396] sm:$0xff]
      %v4398 = vld [vmem:[%s4396 + $0x8] sm:$0xff]
      %v4399 = vld [vmem:[%s4396 + $0x10] sm:$0xff]
      %v4400 = vld [vmem:[%s4396 + $0x18] sm:$0xff]
      %v4401 = vld [vmem:[%s4396 + $0x20] sm:$0xff]
      %v4402 = vld [vmem:[%s4396 + $0x28] sm:$0xff]
      %v4403 = vld [vmem:[%s4396 + $0x30] sm:$0xf]
      %v4405 = vsel %vm594, %v4403, 0
      %4407 = vmatprep.subr.mxu0 0.0
      %4408 = vmatpush1.msra.mxu0 0.0
      %4409 = vmatprep.subr.mxu0 0.0
      %4410 = vmatpush1.msra.mxu0 0.0
      %4411 = vmatprep.subr.mxu0 0.0
      %4412 = vmatpush1.msra.mxu0 0.0
      %4413 = vmatprep.subr.mxu0 0.0
      %4414 = vmatpush1.msra.mxu0 0.0
      %4415 = vmatprep.subr.mxu0 0.0
      %4416 = vmatpush1.msra.mxu0 0.0
      %4417 = vmatprep.subr.mxu0 0.0
      %4418 = vmatpush1.msra.mxu0 0.0
      %4419 = vmatprep.subr.mxu0 0.0
      %4420 = vmatpush1.msra.mxu0 0.0
      %4421 = vmatprep.subr.mxu0 0.0
      %4422 = vmatpush1.msra.mxu0 0.0
      %4423 = vmatprep.subr.mxu0 0.0
      %4424 = vmatpush1.msra.mxu0 0.0
      %4425 = vmatprep.subr.mxu0 0.0
      %4426 = vmatpush1.msra.mxu0 %v4405
      %4427 = vmatprep.subr.mxu0 0.0
      %4428 = vmatpush1.msra.mxu0 %v4402
      %4429 = vmatprep.subr.mxu0 0.0
      %4430 = vmatpush1.msra.mxu0 %v4401
      %4431 = vmatprep.subr.mxu0 0.0
      %4432 = vmatpush1.msra.mxu0 %v4400
      %4433 = vmatprep.subr.mxu0 0.0
      %4434 = vmatpush1.msra.mxu0 %v4399
      %4435 = vmatprep.subr.mxu0 0.0
      %4436 = vmatpush1.msra.mxu0 %v4398
      %4437 = vmatprep.subr.mxu0 0.0
      %4438 = vmatpush1.msra.mxu0 %v4397
      %4439 = vmatprep.subr.mxu0 0.0
      %4440 = vmatpush2.msra.mxu0 0.0
      %4441 = vmatprep.subr.mxu0 0.0
      %4442 = vmatpush2.msra.mxu0 0.0
      %4443 = vmatprep.subr.mxu0 0.0
      %4444 = vmatpush2.msra.mxu0 0.0
      %4445 = vmatprep.subr.mxu0 0.0
      %4446 = vmatpush2.msra.mxu0 0.0
      %4447 = vmatprep.subr.mxu0 0.0
      %4448 = vmatpush2.msra.mxu0 0.0
      %4449 = vmatprep.subr.mxu0 0.0
      %4450 = vmatpush2.msra.mxu0 0.0
      %4451 = vmatprep.subr.mxu0 0.0
      %4452 = vmatpush2.msra.mxu0 0.0
      %4453 = vmatprep.subr.mxu0 0.0
      %4454 = vmatpush2.msra.mxu0 0.0
      %4455 = vmatprep.subr.mxu0 0.0
      %4456 = vmatpush2.msra.mxu0 0.0
      %4457 = vmatprep.subr.mxu0 0.0
      %4458 = vmatpush2.msra.mxu0 0.0
      %4459 = vmatprep.subr.mxu0 0.0
      %4460 = vmatpush2.msra.mxu0 0.0
      %4461 = vmatprep.subr.mxu0 0.0
      %4462 = vmatpush2.msra.mxu0 0.0
      %4463 = vmatprep.subr.mxu0 0.0
      %4464 = vmatpush2.msra.mxu0 0.0
      %4465 = vmatprep.subr.mxu0 0.0
      %4466 = vmatpush2.msra.mxu0 0.0
      %4467 = vmatprep.subr.mxu0 0.0
      %4468 = vmatpush2.msra.mxu0 0.0
      %4469 = vmatprep.subr.mxu0 0.0
      %4470 = vmatpush2.msra.mxu0 0.0
      %4471 = vmatprep.mubr.f32.mxu0 0.0
      %4472 = vmatmul.mubr.f32.gmra.mxu0 %v3237
      %v4473 = vpop.f32.mrf.mxu0
      %v4474 = vadd.f32 0.0, %v4473
      %v4475 = vpop.f32.mrf.mxu0
      %4476 = vdwg.mxu0
      %s4477 = scalar_lea.vmem %s4, 112
      %v4478 = vld [vmem:[%s4477] sm:$0xff]
      %v4479 = vld [vmem:[%s4477 + $0x8] sm:$0xff]
      %v4481 = vsel %vm3398, %v4478, 0
      %v4484 = vsel %vm3398, %v4479, 0
      %4486 = vmatprep.subr.mxu0 0.0
      %4487 = vmatpush1.msra.mxu0 0.0
      %4488 = vmatprep.subr.mxu0 0.0
      %4489 = vmatpush1.msra.mxu0 0.0
      %4490 = vmatprep.subr.mxu0 0.0
      %4491 = vmatpush1.msra.mxu0 0.0
      %4492 = vmatprep.subr.mxu0 0.0
      %4493 = vmatpush1.msra.mxu0 0.0
      %4494 = vmatprep.subr.mxu0 0.0
      %4495 = vmatpush1.msra.mxu0 0.0
      %4496 = vmatprep.subr.mxu0 0.0
      %4497 = vmatpush1.msra.mxu0 0.0
      %4498 = vmatprep.subr.mxu0 0.0
      %4499 = vmatpush1.msra.mxu0 0.0
      %4500 = vmatprep.subr.mxu0 0.0
      %4501 = vmatpush1.msra.mxu0 0.0
      %4502 = vmatprep.subr.mxu0 0.0
      %4503 = vmatpush1.msra.mxu0 0.0
      %4504 = vmatprep.subr.mxu0 0.0
      %4505 = vmatpush1.msra.mxu0 0.0
      %4506 = vmatprep.subr.mxu0 0.0
      %4507 = vmatpush1.msra.mxu0 0.0
      %4508 = vmatprep.subr.mxu0 0.0
      %4509 = vmatpush1.msra.mxu0 0.0
      %4510 = vmatprep.subr.mxu0 0.0
      %4511 = vmatpush1.msra.mxu0 0.0
      %4512 = vmatprep.subr.mxu0 0.0
      %4513 = vmatpush1.msra.mxu0 0.0
      %4514 = vmatprep.subr.mxu0 0.0
      %4515 = vmatpush1.msra.mxu0 0.0
      %4516 = vmatprep.subr.mxu0 0.0
      %4517 = vmatpush1.msra.mxu0 %v4474
      %4518 = vmatprep.subr.mxu0 0.0
      %4519 = vmatpush2.msra.mxu0 0.0
      %4520 = vmatprep.subr.mxu0 0.0
      %4521 = vmatpush2.msra.mxu0 0.0
      %4522 = vmatprep.subr.mxu0 0.0
      %4523 = vmatpush2.msra.mxu0 0.0
      %4524 = vmatprep.subr.mxu0 0.0
      %4525 = vmatpush2.msra.mxu0 0.0
      %4526 = vmatprep.subr.mxu0 0.0
      %4527 = vmatpush2.msra.mxu0 0.0
      %4528 = vmatprep.subr.mxu0 0.0
      %4529 = vmatpush2.msra.mxu0 0.0
      %4530 = vmatprep.subr.mxu0 0.0
      %4531 = vmatpush2.msra.mxu0 0.0
      %4532 = vmatprep.subr.mxu0 0.0
      %4533 = vmatpush2.msra.mxu0 0.0
      %4534 = vmatprep.subr.mxu0 0.0
      %4535 = vmatpush2.msra.mxu0 0.0
      %4536 = vmatprep.subr.mxu0 0.0
      %4537 = vmatpush2.msra.mxu0 0.0
      %4538 = vmatprep.subr.mxu0 0.0
      %4539 = vmatpush2.msra.mxu0 0.0
      %4540 = vmatprep.subr.mxu0 0.0
      %4541 = vmatpush2.msra.mxu0 0.0
      %4542 = vmatprep.subr.mxu0 0.0
      %4543 = vmatpush2.msra.mxu0 0.0
      %4544 = vmatprep.subr.mxu0 0.0
      %4545 = vmatpush2.msra.mxu0 0.0
      %4546 = vmatprep.subr.mxu0 0.0
      %4547 = vmatpush2.msra.mxu0 0.0
      %4548 = vmatprep.subr.mxu0 0.0
      %4549 = vmatpush2.msra.mxu0 0.0
      %4550 = vmatprep.mubr.f32.mxu0 0.0
      %4551 = vmatmul.mubr.f32.gmra.mxu0 %v4481
      %v4552 = vpop.f32.mrf.mxu0
      %v4553 = vadd.f32 0.0, %v4552
      %v4554 = vpop.f32.mrf.mxu0
      %4555 = vmatprep.mubr.f32.mxu0 0.0
      %4556 = vmatmul.mubr.f32.gmra.mxu0 %v4484
      %v4557 = vpop.f32.mrf.mxu0
      %v4558 = vadd.f32 0.0, %v4557
      %v4559 = vpop.f32.mrf.mxu0
      %4560 = vdwg.mxu0
      %v4561 = vadd.f32 %v4394, %v4553
      %v4562 = vadd.f32 %v4395, %v4558
      %s4563 = scalar_lea.vmem %s5, 448
      %v4564 = vld [vmem:[%s4563] sm:$0xff]
      %v4565 = vld [vmem:[%s4563 + $0x8] sm:$0xff]
      %v4566 = vld [vmem:[%s4563 + $0x10] sm:$0xff]
      %v4567 = vld [vmem:[%s4563 + $0x18] sm:$0xff]
      %v4568 = vld [vmem:[%s4563 + $0x20] sm:$0xff]
      %v4569 = vld [vmem:[%s4563 + $0x28] sm:$0xff]
      %v4570 = vld [vmem:[%s4563 + $0x30] sm:$0xf]
      %v4572 = vsel %vm594, %v4570, 0
      %4574 = vmatprep.subr.mxu0 0.0
      %4575 = vmatpush1.msra.mxu0 0.0
      %4576 = vmatprep.subr.mxu0 0.0
      %4577 = vmatpush1.msra.mxu0 0.0
      %4578 = vmatprep.subr.mxu0 0.0
      %4579 = vmatpush1.msra.mxu0 0.0
      %4580 = vmatprep.subr.mxu0 0.0
      %4581 = vmatpush1.msra.mxu0 0.0
      %4582 = vmatprep.subr.mxu0 0.0
      %4583 = vmatpush1.msra.mxu0 0.0
      %4584 = vmatprep.subr.mxu0 0.0
      %4585 = vmatpush1.msra.mxu0 0.0
      %4586 = vmatprep.subr.mxu0 0.0
      %4587 = vmatpush1.msra.mxu0 0.0
      %4588 = vmatprep.subr.mxu0 0.0
      %4589 = vmatpush1.msra.mxu0 0.0
      %4590 = vmatprep.subr.mxu0 0.0
      %4591 = vmatpush1.msra.mxu0 0.0
      %4592 = vmatprep.subr.mxu0 0.0
      %4593 = vmatpush1.msra.mxu0 %v4572
      %4594 = vmatprep.subr.mxu0 0.0
      %4595 = vmatpush1.msra.mxu0 %v4569
      %4596 = vmatprep.subr.mxu0 0.0
      %4597 = vmatpush1.msra.mxu0 %v4568
      %4598 = vmatprep.subr.mxu0 0.0
      %4599 = vmatpush1.msra.mxu0 %v4567
      %4600 = vmatprep.subr.mxu0 0.0
      %4601 = vmatpush1.msra.mxu0 %v4566
      %4602 = vmatprep.subr.mxu0 0.0
      %4603 = vmatpush1.msra.mxu0 %v4565
      %4604 = vmatprep.subr.mxu0 0.0
      %4605 = vmatpush1.msra.mxu0 %v4564
      %4606 = vmatprep.subr.mxu0 0.0
      %4607 = vmatpush2.msra.mxu0 0.0
      %4608 = vmatprep.subr.mxu0 0.0
      %4609 = vmatpush2.msra.mxu0 0.0
      %4610 = vmatprep.subr.mxu0 0.0
      %4611 = vmatpush2.msra.mxu0 0.0
      %4612 = vmatprep.subr.mxu0 0.0
      %4613 = vmatpush2.msra.mxu0 0.0
      %4614 = vmatprep.subr.mxu0 0.0
      %4615 = vmatpush2.msra.mxu0 0.0
      %4616 = vmatprep.subr.mxu0 0.0
      %4617 = vmatpush2.msra.mxu0 0.0
      %4618 = vmatprep.subr.mxu0 0.0
      %4619 = vmatpush2.msra.mxu0 0.0
      %4620 = vmatprep.subr.mxu0 0.0
      %4621 = vmatpush2.msra.mxu0 0.0
      %4622 = vmatprep.subr.mxu0 0.0
      %4623 = vmatpush2.msra.mxu0 0.0
      %4624 = vmatprep.subr.mxu0 0.0
      %4625 = vmatpush2.msra.mxu0 0.0
      %4626 = vmatprep.subr.mxu0 0.0
      %4627 = vmatpush2.msra.mxu0 0.0
      %4628 = vmatprep.subr.mxu0 0.0
      %4629 = vmatpush2.msra.mxu0 0.0
      %4630 = vmatprep.subr.mxu0 0.0
      %4631 = vmatpush2.msra.mxu0 0.0
      %4632 = vmatprep.subr.mxu0 0.0
      %4633 = vmatpush2.msra.mxu0 0.0
      %4634 = vmatprep.subr.mxu0 0.0
      %4635 = vmatpush2.msra.mxu0 0.0
      %4636 = vmatprep.subr.mxu0 0.0
      %4637 = vmatpush2.msra.mxu0 0.0
      %4638 = vmatprep.mubr.f32.mxu0 0.0
      %4639 = vmatmul.mubr.f32.gmra.mxu0 %v3237
      %v4640 = vpop.f32.mrf.mxu0
      %v4641 = vadd.f32 0.0, %v4640
      %v4642 = vpop.f32.mrf.mxu0
      %4643 = vdwg.mxu0
      %s4644 = scalar_lea.vmem %s4, 128
      %v4645 = vld [vmem:[%s4644] sm:$0xff]
      %v4646 = vld [vmem:[%s4644 + $0x8] sm:$0xff]
      %v4648 = vsel %vm3398, %v4645, 0
      %v4651 = vsel %vm3398, %v4646, 0
      %4653 = vmatprep.subr.mxu0 0.0
      %4654 = vmatpush1.msra.mxu0 0.0
      %4655 = vmatprep.subr.mxu0 0.0
      %4656 = vmatpush1.msra.mxu0 0.0
      %4657 = vmatprep.subr.mxu0 0.0
      %4658 = vmatpush1.msra.mxu0 0.0
      %4659 = vmatprep.subr.mxu0 0.0
      %4660 = vmatpush1.msra.mxu0 0.0
      %4661 = vmatprep.subr.mxu0 0.0
      %4662 = vmatpush1.msra.mxu0 0.0
      %4663 = vmatprep.subr.mxu0 0.0
      %4664 = vmatpush1.msra.mxu0 0.0
      %4665 = vmatprep.subr.mxu0 0.0
      %4666 = vmatpush1.msra.mxu0 0.0
      %4667 = vmatprep.subr.mxu0 0.0
      %4668 = vmatpush1.msra.mxu0 0.0
      %4669 = vmatprep.subr.mxu0 0.0
      %4670 = vmatpush1.msra.mxu0 0.0
      %4671 = vmatprep.subr.mxu0 0.0
      %4672 = vmatpush1.msra.mxu0 0.0
      %4673 = vmatprep.subr.mxu0 0.0
      %4674 = vmatpush1.msra.mxu0 0.0
      %4675 = vmatprep.subr.mxu0 0.0
      %4676 = vmatpush1.msra.mxu0 0.0
      %4677 = vmatprep.subr.mxu0 0.0
      %4678 = vmatpush1.msra.mxu0 0.0
      %4679 = vmatprep.subr.mxu0 0.0
      %4680 = vmatpush1.msra.mxu0 0.0
      %4681 = vmatprep.subr.mxu0 0.0
      %4682 = vmatpush1.msra.mxu0 0.0
      %4683 = vmatprep.subr.mxu0 0.0
      %4684 = vmatpush1.msra.mxu0 %v4641
      %4685 = vmatprep.subr.mxu0 0.0
      %4686 = vmatpush2.msra.mxu0 0.0
      %4687 = vmatprep.subr.mxu0 0.0
      %4688 = vmatpush2.msra.mxu0 0.0
      %4689 = vmatprep.subr.mxu0 0.0
      %4690 = vmatpush2.msra.mxu0 0.0
      %4691 = vmatprep.subr.mxu0 0.0
      %4692 = vmatpush2.msra.mxu0 0.0
      %4693 = vmatprep.subr.mxu0 0.0
      %4694 = vmatpush2.msra.mxu0 0.0
      %4695 = vmatprep.subr.mxu0 0.0
      %4696 = vmatpush2.msra.mxu0 0.0
      %4697 = vmatprep.subr.mxu0 0.0
      %4698 = vmatpush2.msra.mxu0 0.0
      %4699 = vmatprep.subr.mxu0 0.0
      %4700 = vmatpush2.msra.mxu0 0.0
      %4701 = vmatprep.subr.mxu0 0.0
      %4702 = vmatpush2.msra.mxu0 0.0
      %4703 = vmatprep.subr.mxu0 0.0
      %4704 = vmatpush2.msra.mxu0 0.0
      %4705 = vmatprep.subr.mxu0 0.0
      %4706 = vmatpush2.msra.mxu0 0.0
      %4707 = vmatprep.subr.mxu0 0.0
      %4708 = vmatpush2.msra.mxu0 0.0
      %4709 = vmatprep.subr.mxu0 0.0
      %4710 = vmatpush2.msra.mxu0 0.0
      %4711 = vmatprep.subr.mxu0 0.0
      %4712 = vmatpush2.msra.mxu0 0.0
      %4713 = vmatprep.subr.mxu0 0.0
      %4714 = vmatpush2.msra.mxu0 0.0
      %4715 = vmatprep.subr.mxu0 0.0
      %4716 = vmatpush2.msra.mxu0 0.0
      %4717 = vmatprep.mubr.f32.mxu0 0.0
      %4718 = vmatmul.mubr.f32.gmra.mxu0 %v4648
      %v4719 = vpop.f32.mrf.mxu0
      %v4720 = vadd.f32 0.0, %v4719
      %v4721 = vpop.f32.mrf.mxu0
      %4722 = vmatprep.mubr.f32.mxu0 0.0
      %4723 = vmatmul.mubr.f32.gmra.mxu0 %v4651
      %v4724 = vpop.f32.mrf.mxu0
      %v4725 = vadd.f32 0.0, %v4724
      %v4726 = vpop.f32.mrf.mxu0
      %4727 = vdwg.mxu0
      %v4728 = vadd.f32 %v4561, %v4720
      %v4729 = vadd.f32 %v4562, %v4725
      %vm4730 = vcmask 105472
      %v4731 = vsel %vm4730, %v4728, 0.0
      %4732 = vadd.xlane.f32.xlu0 %v4731
      %v4733 = vpop.xlane.xlu0 %4732
      %v4734 = vsel %vm4730, %v4729, 0.0
      %4735 = vadd.xlane.f32.xlu0 %v4734
      %v4736 = vpop.xlane.xlu0 %4735
      %v4737 = vrcp.pop 13.0
      %v4738 = vmul.f32 %v4733, %v4737
      %v4739 = vmul.f32 %v4736, %v4737
      %v4740 = vmul.f32 %v4728, %v4728
      %v4741 = vmul.f32 %v4729, %v4729
      %v4742 = vsel %vm4730, %v4740, 0.0
      %4743 = vadd.xlane.f32.xlu0 %v4742
      %v4744 = vpop.xlane.xlu0 %4743
      %v4745 = vsel %vm4730, %v4741, 0.0
      %4746 = vadd.xlane.f32.xlu0 %v4745
      %v4747 = vpop.xlane.xlu0 %4746
      %v4748 = vmul.f32 %v4744, %v4737
      %v4749 = vmul.f32 %v4747, %v4737
      %v4750 = vmul.f32 %v4738, %v4738
      %v4751 = vmul.f32 %v4739, %v4739
      %v4752 = vsub.f32 %v4748, %v4750
      %v4753 = vsub.f32 %v4749, %v4751
      %v4754 = vmax.f32 %v4752, 0.0
      %v4755 = vmax.f32 %v4753, 0.0
      %v4756 = vsub.f32 %v4728, %v4738
      %v4757 = vsub.f32 %v4729, %v4739
      %v4758 = vadd.f32 %v4754, 1e-05
      %v4759 = vadd.f32 %v4755, 1e-05
      %v4760 = vrsqrt.pop %v4758
      %v4761 = vrsqrt.pop %v4759
      %v4762 = vmul.f32 %v4756, %v4760
      %v4763 = vmul.f32 %v4757, %v4761
      %vm4764 = vcmp.ge.f32.partialorder %v4762, 0.0
      %vm4765 = vcmp.ge.f32.partialorder %v4763, 0.0
      %v4766 = vmul.f32 %v4762, 0.2
      %v4767 = vmul.f32 %v4763, 0.2
      %v4768 = vsel %vm4764, %v4762, %v4766
      %v4769 = vsel %vm4765, %v4763, %v4767
      %v4770 = vld [vmem:[%s6] sm:$0xff]
      %v4771 = vld [vmem:[%s6 + $0x8] sm:$0xff]
      %v4772 = vmul.f32 %v4768, %v4770
      %v4773 = vmul.f32 %v4769, %v4771
      %v4774 = vsel %vm4730, %v4772, 0.0
      %4775 = vadd.xlane.f32.xlu0 %v4774
      %v4776 = vpop.xlane.xlu0 %4775
      %v4777 = vsel %vm4730, %v4773, 0.0
      %4778 = vadd.xlane.f32.xlu0 %v4777
      %v4779 = vpop.xlane.xlu0 %4778
      %v4780 = vadd.f32 %v4776, %v4779
      %v4781 = vrot.slane %v4780, 4
      %v4782 = vadd.f32 %v4780, %v4781
      %v4783 = vrot.slane %v4782, 2
      %v4784 = vadd.f32 %v4782, %v4783
      %v4785 = vrot.slane %v4784, 1
      %v4786 = vadd.f32 %v4784, %v4785
      %v4787 = vld [vmem:[#allocation2] sm:$0x1]
      %v4788 = vadd.f32 %v4786, %v4787
      %v4789 = vxor.u32 %v4788, 2147483648
      %v4790 = vmul.f32 %v4789, 1.442695
      %v4791 = vpow.pop %v4790
      %v4792 = vadd.f32 %v4791, 1.0
      %v4793 = vrcp.pop %v4792
      %v4794 = vmul.f32 1.0, %v4793
      %vm4795 = vcmask 0
      %4796 = vst.msk [vmem:[%s303] sm:$0x1] %vm4795, %v4794
      %p4797 = scmp.lt.s32.totalorder %s21, 1
      %s4798 = scalar_select %p4797, %s21, 1
      %s4799 = scalar_lea.vmem %s8, %s4798
      // Predicated region
      $region53: #{discriminator_wgan_forward.1} parent=51 // pred_check
        %p4800 = pneg %p212
      $region54: #{discriminator_wgan_forward.1} parent=51 // pred_check_branch
        %4802 = sbr.rel (%p4800) target = $region56
      $region55: #{discriminator_wgan_forward.1} parent=51 // pred_region
        _
      $region56: #{discriminator_wgan_forward.1} parent=51 // pred_fallthru
        _
    $region52: #{discriminator_wgan_forward.1} parent=5 // pred_fallthru
      _
    %p4803 = scmp.le.s32.totalorder 2, %s16
    // Predicated region
    $region57: #{discriminator_wgan_forward.1} parent=5 // pred_check
      %p4804 = pneg %p4803
    $region58: #{discriminator_wgan_forward.1} parent=5 // pred_check_branch
      %4806 = sbr.rel (%p4804) target = $region60
    $region59: #{discriminator_wgan_forward.1} parent=5 // pred_region
      %s4807 = ssub.s32 %s16, 2
      // Predicated region
      $region61: #{discriminator_wgan_forward.1} parent=59 // pred_check
        %p4808 = pneg %p218
      $region62: #{discriminator_wgan_forward.1} parent=59 // pred_check_branch
        %4810 = sbr.rel (%p4808) target = $region64
      $region63: #{discriminator_wgan_forward.1} parent=59 // pred_region
        %p4811 = scmp.lt.s32.totalorder %s22, 1
        %s4812 = scalar_select %p4811, %s22, 1
        %s4813 = scalar_lea.vmem %s8, %s4812
      $region64: #{discriminator_wgan_forward.1} parent=59 // pred_fallthru
        _
    $region60: #{discriminator_wgan_forward.1} parent=5 // pred_fallthru
      _
  $region6: #{discriminator_wgan_forward.1} parent=0 // loop_footer
    %s20 = sadd.s32 1, %s16
  $region7: #{discriminator_wgan_forward.1} parent=0 // loop_footer_branch
    %15 = sbr.rel target = $region3
  $region8: #{discriminator_wgan_forward.1} parent=0 // loop_exit
    _

</llo_original>
